<compile_context>
chip_gen: v7x
topology: tpu7x:2x2x1
jax: 0.10.0
libtpu: 0.0.40
codegen_flags: <defaults>
</compile_context>

<pallas_src>
import functools
import math

import jax
import jax.numpy as jnp
from jax.experimental import pallas as pl
from jax.experimental.pallas import tpu as pltpu


# ----------------------------------------------------------------------------
# Config
# ----------------------------------------------------------------------------
CFG = dict(
    hidden_size=128,
    num_hidden_layers=2,
    num_attention_heads=4,
    intermediate_size=256,
    vocab_size=512,
    max_position_embeddings=16,
    type_vocab_size=2,
    initializer_range=0.02,
    layer_norm_eps=1e-12,
)

_VMEM_LIMIT = 32 * 1024 * 1024  # explicit scoped-VMEM limit; safe on v5e/v6e/v7x


def _pick(dim, candidates):
    """Largest candidate tile that divides `dim` exactly; else the full dim."""
    for t in candidates:
        if dim >= t and dim % t == 0:
            return t
    return dim


def _cparams(dims):
    return pltpu.CompilerParams(dimension_semantics=dims,
                                vmem_limit_bytes=_VMEM_LIMIT)


# ----------------------------------------------------------------------------
# Pallas kernels
# ----------------------------------------------------------------------------
def _linear_kernel(x_ref, w_ref, b_ref, o_ref, acc_ref, *, activation):
    """Tiled matmul + bias (+ optional exact-erf GELU). bf16 in, f32 accumulate."""
    k = pl.program_id(2)

    @pl.when(k == 0)
    def _init():
        acc_ref[...] = jnp.zeros_like(acc_ref)

    acc_ref[...] += jnp.dot(x_ref[...], w_ref[...],
                            preferred_element_type=jnp.float32)

    @pl.when(k == pl.num_programs(2) - 1)
    def _finalize():
        y = acc_ref[...] + b_ref[...].astype(jnp.float32)
        if activation == "gelu":
            y = 0.5 * y * (1.0 + jax.lax.erf(y * 0.7071067811865476))
        o_ref[...] = y.astype(o_ref.dtype)


def _fused_matmul_ln_kernel(*refs, activation, add_residual, eps):
    """Tiled matmul + bias (+GELU) (+residual add) + LayerNorm, fused in one kernel.

    Requires the full output row (N) in a single block so the LN reduction sees it.
    """
    if add_residual:
        x_ref, w_ref, b_ref, r_ref, g_ref, bb_ref, o_ref, acc_ref = refs
    else:
        x_ref, w_ref, b_ref, g_ref, bb_ref, o_ref, acc_ref = refs
        r_ref = None
    k = pl.program_id(1)

    @pl.when(k == 0)
    def _init():
        acc_ref[...] = jnp.zeros_like(acc_ref)

    acc_ref[...] += jnp.dot(x_ref[...], w_ref[...],
                            preferred_element_type=jnp.float32)

    @pl.when(k == pl.num_programs(1) - 1)
    def _finalize():
        y = acc_ref[...] + b_ref[...].astype(jnp.float32)
        if activation == "gelu":
            y = 0.5 * y * (1.0 + jax.lax.erf(y * 0.7071067811865476))
        if r_ref is not None:
            y = y + r_ref[...].astype(jnp.float32)
        mean = jnp.mean(y, axis=-1, keepdims=True)
        var = jnp.mean((y - mean) ** 2, axis=-1, keepdims=True)
        y = (y - mean) * jax.lax.rsqrt(var + eps)
        o_ref[...] = (y * g_ref[...] + bb_ref[...]).astype(o_ref.dtype)


def _layernorm_kernel(x_ref, g_ref, b_ref, o_ref, *, eps):
    x = x_ref[...].astype(jnp.float32)
    mean = jnp.mean(x, axis=-1, keepdims=True)
    var = jnp.mean((x - mean) ** 2, axis=-1, keepdims=True)
    y = (x - mean) * jax.lax.rsqrt(var + eps)
    o_ref[...] = (y * g_ref[...] + b_ref[...]).astype(o_ref.dtype)


def _flash_attn_kernel(q_ref, k_ref, v_ref, bias_ref, o_ref,
                       m_ref, l_ref, acc_ref, *, nh, dh, scale):
    """Flash-style multi-head attention over KV tiles with online softmax.

    q_ref/k_ref/v_ref are lane-dense (1, tile, H) slabs (heads packed on the lane axis);
    heads are split via static lane slices inside the kernel (no XLA transposes).
    """
    ki = pl.program_id(2)

    @pl.when(ki == 0)
    def _init():
        m_ref[...] = jnp.full_like(m_ref, -jnp.inf)
        l_ref[...] = jnp.zeros_like(l_ref)
        acc_ref[...] = jnp.zeros_like(acc_ref)

    q = q_ref[0]        # (tq, H) bf16
    k = k_ref[0]        # (tk, H) bf16
    v = v_ref[0]        # (tk, H) bf16
    bias = bias_ref[0]  # (1, tk) f32 additive mask bias

    for h in range(nh):
        lo = h * dh
        qh = q[:, lo:lo + dh]
        kh = k[:, lo:lo + dh]
        vh = v[:, lo:lo + dh]
        s = jax.lax.dot_general(qh, kh, (((1,), (1,)), ((), ())),
                                preferred_element_type=jnp.float32)
        s = s * scale + bias                                     # (tq, tk)
        m_prev = m_ref[h]                                        # (tq, 1)
        m_new = jnp.maximum(m_prev, jnp.max(s, axis=-1, keepdims=True))
        alpha = jnp.exp(m_prev - m_new)
        p = jnp.exp(s - m_new)
        l_ref[h] = alpha * l_ref[h] + jnp.sum(p, axis=-1, keepdims=True)
        acc_ref[h] = alpha * acc_ref[h] + jnp.dot(
            p.astype(vh.dtype), vh, preferred_element_type=jnp.float32)
        m_ref[h] = m_new

    @pl.when(ki == pl.num_programs(2) - 1)
    def _finalize():
        for h in range(nh):
            inv = pl.reciprocal(l_ref[h], approx=True)           # (tq, 1), EUP slot
            o_ref[0, :, pl.ds(h * dh, dh)] = (acc_ref[h] * inv).astype(o_ref.dtype)


# ----------------------------------------------------------------------------
# Wrappers around pallas_call
# ----------------------------------------------------------------------------
def linear(x, w, b, activation=None, out_dtype=jnp.bfloat16):
    M, K = x.shape
    N = w.shape[1]
    tm = _pick(M, (256, 128, 64, 32, 16, 8))
    tn = _pick(N, (512, 256, 128))
    tk = _pick(K, (512, 256, 128))
    grid = (M // tm, N // tn, K // tk)
    return pl.pallas_call(
        functools.partial(_linear_kernel, activation=activation),
        out_shape=jax.ShapeDtypeStruct((M, N), out_dtype),
        grid=grid,
        in_specs=[
            pl.BlockSpec((tm, tk), lambda i, j, k: (i, k)),
            pl.BlockSpec((tk, tn), lambda i, j, k: (k, j)),
            pl.BlockSpec((1, tn), lambda i, j, k: (0, j)),
        ],
        out_specs=pl.BlockSpec((tm, tn), lambda i, j, k: (i, j)),
        scratch_shapes=[pltpu.VMEM((tm, tn), jnp.float32)],
        compiler_params=_cparams(("parallel", "parallel", "arbitrary")),
    )(x, w, b.reshape(1, N))


def fused_linear_layernorm(x, w, b, gamma, beta, residual=None, activation=None,
                           eps=1e-12, out_dtype=jnp.bfloat16):
    M, K = x.shape
    N = w.shape[1]
    tm = _pick(M, (256, 128, 64, 32, 16, 8))
    tk = _pick(K, (512, 256, 128))
    grid = (M // tm, K // tk)

    in_specs = [
        pl.BlockSpec((tm, tk), lambda i, k: (i, k)),
        pl.BlockSpec((tk, N), lambda i, k: (k, 0)),
        pl.BlockSpec((1, N), lambda i, k: (0, 0)),
    ]
    args = [x, w, b.reshape(1, N)]
    if residual is not None:
        in_specs.append(pl.BlockSpec((tm, N), lambda i, k: (i, 0)))
        args.append(residual)
    in_specs += [pl.BlockSpec((1, N), lambda i, k: (0, 0)),
                 pl.BlockSpec((1, N), lambda i, k: (0, 0))]
    args += [gamma.reshape(1, N), beta.reshape(1, N)]

    return pl.pallas_call(
        functools.partial(_fused_matmul_ln_kernel, activation=activation,
                          add_residual=residual is not None, eps=eps),
        out_shape=jax.ShapeDtypeStruct((M, N), out_dtype),
        grid=grid,
        in_specs=in_specs,
        out_specs=pl.BlockSpec((tm, N), lambda i, k: (i, 0)),
        scratch_shapes=[pltpu.VMEM((tm, N), jnp.float32)],
        compiler_params=_cparams(("parallel", "arbitrary")),
    )(*args)


def layernorm(x, g, b, eps=1e-12, out_dtype=jnp.bfloat16):
    M, H = x.shape
    tm = _pick(M, (512, 256, 128, 64, 32, 16, 8))
    return pl.pallas_call(
        functools.partial(_layernorm_kernel, eps=eps),
        out_shape=jax.ShapeDtypeStruct((M, H), out_dtype),
        grid=(M // tm,),
        in_specs=[
            pl.BlockSpec((tm, H), lambda i: (i, 0)),
            pl.BlockSpec((1, H), lambda i: (0, 0)),
            pl.BlockSpec((1, H), lambda i: (0, 0)),
        ],
        out_specs=pl.BlockSpec((tm, H), lambda i: (i, 0)),
        compiler_params=_cparams(("parallel",)),
    )(x, g.reshape(1, H), b.reshape(1, H))


def flash_attention(qkv, mask_bias, nh, dh):
    """qkv: (B, S, 3H) packed [Q|K|V]; mask_bias: (B, 1, S) additive. Returns (B, S, H)."""
    B, S, H3 = qkv.shape
    H = H3 // 3
    scale = 1.0 / math.sqrt(dh)
    tq = _pick(S, (128,))   # S itself when S < 128
    tk = _pick(S, (128,))
    grid = (B, S // tq, S // tk)
    return pl.pallas_call(
        functools.partial(_flash_attn_kernel, nh=nh, dh=dh, scale=scale),
        out_shape=jax.ShapeDtypeStruct((B, S, H), jnp.bfloat16),
        grid=grid,
        in_specs=[
            # Same packed QKV array passed three times; the last-axis block index
            # selects the lane-dense Q / K / V slab (0 -> [0:H], 1 -> [H:2H], 2 -> [2H:3H]).
            pl.BlockSpec((1, tq, H), lambda b, qi, ki: (b, qi, 0)),
            pl.BlockSpec((1, tk, H), lambda b, qi, ki: (b, ki, 1)),
            pl.BlockSpec((1, tk, H), lambda b, qi, ki: (b, ki, 2)),
            pl.BlockSpec((1, 1, tk), lambda b, qi, ki: (b, 0, ki)),
        ],
        out_specs=pl.BlockSpec((1, tq, H), lambda b, qi, ki: (b, qi, 0)),
        scratch_shapes=[
            pltpu.VMEM((nh, tq, 1), jnp.float32),    # running max m
            pltpu.VMEM((nh, tq, 1), jnp.float32),    # running sum l
            pltpu.VMEM((nh, tq, dh), jnp.float32),   # running weighted-sum acc
        ],
        compiler_params=_cparams(("parallel", "parallel", "arbitrary")),
    )(qkv, qkv, qkv, mask_bias)


# ----------------------------------------------------------------------------
# Deterministic parameter initialization
# ----------------------------------------------------------------------------
def init_params(key):
    H = CFG["hidden_size"]
    I = CFG["intermediate_size"]
    V = CFG["vocab_size"]
    std = CFG["initializer_range"]
    keys = iter(jax.random.split(key, 64))

    def normal(shape, dtype=jnp.bfloat16):
        return (std * jax.random.normal(next(keys), shape, dtype=jnp.float32)).astype(dtype)

    word_emb = normal((V, H))                    # bf16; tied with MLM decoder weight
    p = {
        "word_emb": word_emb,
        "word_emb_T": word_emb.T,                # pre-transposed ONCE (no per-call .T)
        "pos_emb": normal((CFG["max_position_embeddings"], H), jnp.float32),
        "type_emb": normal((CFG["type_vocab_size"], H), jnp.float32),
        "emb_ln_g": jnp.ones((H,), jnp.float32),
        "emb_ln_b": jnp.zeros((H,), jnp.float32),
        "layers": [],
        # MLM head: linear1 -> GELU -> LayerNorm -> Dropout(id) -> linear2(tied) + bias
        "lin1_w": normal((H, H)),
        "lin1_b": jnp.zeros((H,), jnp.float32),
        "mlm_ln_g": jnp.ones((H,), jnp.float32),
        "mlm_ln_b": jnp.zeros((H,), jnp.float32),
        "mlm_bias": jnp.zeros((V,), jnp.float32),
    }
    for _ in range(CFG["num_hidden_layers"]):
        q_w, k_w, v_w = normal((H, H)), normal((H, H)), normal((H, H))
        p["layers"].append({
            "qkv_w": jnp.concatenate([q_w, k_w, v_w], axis=1),   # (H, 3H), one fused matmul
            "qkv_b": jnp.zeros((3 * H,), jnp.float32),
            "o_w": normal((H, H)), "o_b": jnp.zeros((H,), jnp.float32),
            "ln1_g": jnp.ones((H,), jnp.float32), "ln1_b": jnp.zeros((H,), jnp.float32),
            "i_w": normal((H, I)), "i_b": jnp.zeros((I,), jnp.float32),
            "fo_w": normal((I, H)), "fo_b": jnp.zeros((H,), jnp.float32),
            "ln2_g": jnp.ones((H,), jnp.float32), "ln2_b": jnp.zeros((H,), jnp.float32),
        })
    return p


# ----------------------------------------------------------------------------
# Forward pass (BERT encoder + mlm_ffn head)
# ----------------------------------------------------------------------------
def bert_base_forward(params, src_ids, input_mask, position_ids, segment_ids):
    B, S = src_ids.shape
    H = CFG["hidden_size"]
    nh = CFG["num_attention_heads"]
    dh = H // nh
    eps = CFG["layer_norm_eps"]
    V = CFG["vocab_size"]

    # ---- embeddings (gathers are glue JAX; LayerNorm is a Pallas kernel) ----
    emb = (params["word_emb"][src_ids].astype(jnp.float32)
           + params["pos_emb"][position_ids]
           + params["type_emb"][segment_ids])                       # (B, S, H) f32
    x = layernorm(emb.reshape(B * S, H), params["emb_ln_g"], params["emb_ln_b"], eps)
    # TODO(synk): embedding / hidden / attention dropout omitted (inference semantics).

    # additive attention-mask bias, HF style: (1 - mask) * -10000, shape (B, 1, S)
    mask_bias = ((1.0 - input_mask.astype(jnp.float32)) * -10000.0)[:, None, :]

    # ---- transformer encoder layers ----
    for lp in params["layers"]:
        qkv = linear(x, lp["qkv_w"], lp["qkv_b"])                   # fused Q/K/V projection
        ctx = flash_attention(qkv.reshape(B, S, 3 * H), mask_bias, nh, dh)
        ctx = ctx.reshape(B * S, H)
        # output projection + residual + LayerNorm fused
        x = fused_linear_layernorm(ctx, lp["o_w"], lp["o_b"],
                                   lp["ln1_g"], lp["ln1_b"], residual=x, eps=eps)
        # FFN: intermediate (matmul+GELU), then second linear + residual + LN fused
        inter = linear(x, lp["i_w"], lp["i_b"], activation="gelu")
        x = fused_linear_layernorm(inter, lp["fo_w"], lp["fo_b"],
                                   lp["ln2_g"], lp["ln2_b"], residual=x, eps=eps)

    # ---- mlm_ffn head: linear1 -> GELU -> LayerNorm -> Dropout(id) -> linear2(tied)+bias ----
    h = fused_linear_layernorm(x, params["lin1_w"], params["lin1_b"],
                               params["mlm_ln_g"], params["mlm_ln_b"],
                               activation="gelu", eps=eps)
    logits = linear(h, params["word_emb_T"], params["mlm_bias"], out_dtype=jnp.float32)
    return {"logits": logits.reshape(B, S, V)}


# ----------------------------------------------------------------------------
# Main
# ----------------------------------------------------------------------------
if __name__ == "__main__":
    key = jax.random.PRNGKey(0)
    pkey, dkey = jax.random.split(key)
    params = init_params(pkey)

    B, S = 2, 16
    src_ids = jax.random.randint(dkey, (B, S), 0, CFG["vocab_size"], dtype=jnp.int32)
    position_ids = jnp.broadcast_to(jnp.arange(S, dtype=jnp.int32), (B, S))
    segment_ids = jnp.zeros((B, S), dtype=jnp.int32)
    input_mask = jnp.ones((B, S), dtype=jnp.int32).at[:, -2:].set(0)  # pad last 2 tokens

    fwd = jax.jit(bert_base_forward)
    out = fwd(params, src_ids, input_mask, position_ids, segment_ids)
    logits = jax.block_until_ready(out["logits"])
    assert logits.shape == (B, S, CFG["vocab_size"])
    assert bool(jnp.all(jnp.isfinite(logits)))
    print("KERNEL_OK")
</pallas_src>

<mosaic_0001>
module attributes {stable_mosaic.version = 11 : i64} {
  func.func @_layernorm_kernel(%arg0: i32, %arg1: memref<32x128xf32, #tpu.memory_space<vmem>>, %arg2: memref<1x128xf32, #tpu.memory_space<vmem>>, %arg3: memref<1x128xf32, #tpu.memory_space<vmem>>, %arg4: memref<32x128xbf16, #tpu.memory_space<vmem>>) attributes {dimension_semantics = [#tpu.dimension_semantics<parallel>], iteration_bounds = array<i64: 1>, scalar_prefetch = 0 : i64, scratch_operands = 0 : i64, tpu.core_type = #tpu.core_type<tc>, window_params = [{transform_indices = @transform_0, window_bounds = array<i64: 32, 128>}, {pipeline_mode = #tpu.pipeline_mode<synchronous>, transform_indices = @transform_1, window_bounds = array<i64: 1, 128>}, {pipeline_mode = #tpu.pipeline_mode<synchronous>, transform_indices = @transform_2, window_bounds = array<i64: 1, 128>}, {transform_indices = @transform_3, window_bounds = array<i64: 32, 128>}]} {
    %c0 = arith.constant 0 : index
    %c0_0 = arith.constant 0 : index
    %0 = vector.load %arg1[%c0, %c0_0] : memref<32x128xf32, #tpu.memory_space<vmem>>, vector<32x128xf32>
    %cst = arith.constant dense<0.000000e+00> : vector<32xf32>
    %1 = vector.multi_reduction <add>, %0, %cst [1] : vector<32x128xf32> to vector<32xf32>
    %2 = vector.shape_cast %1 : vector<32xf32> to vector<32x1xf32>
    %cst_1 = arith.constant 1.280000e+02 : f32
    %3 = vector.broadcast %cst_1 : f32 to vector<32x1xf32>
    %4 = arith.divf %2, %3 : vector<32x1xf32>
    %5 = vector.broadcast %4 : vector<32x1xf32> to vector<32x128xf32>
    %6 = arith.subf %0, %5 : vector<32x128xf32>
    %7 = arith.mulf %6, %6 : vector<32x128xf32>
    %cst_2 = arith.constant dense<0.000000e+00> : vector<32xf32>
    %8 = vector.multi_reduction <add>, %7, %cst_2 [1] : vector<32x128xf32> to vector<32xf32>
    %9 = vector.shape_cast %8 : vector<32xf32> to vector<32x1xf32>
    %cst_3 = arith.constant 1.280000e+02 : f32
    %10 = vector.broadcast %cst_3 : f32 to vector<32x1xf32>
    %11 = arith.divf %9, %10 : vector<32x1xf32>
    %12 = vector.broadcast %4 : vector<32x1xf32> to vector<32x128xf32>
    %13 = arith.subf %0, %12 : vector<32x128xf32>
    %cst_4 = arith.constant 9.99999996E-13 : f32
    %14 = vector.broadcast %cst_4 : f32 to vector<32x1xf32>
    %15 = arith.addf %11, %14 : vector<32x1xf32>
    %16 = math.rsqrt %15 : vector<32x1xf32>
    %17 = vector.broadcast %16 : vector<32x1xf32> to vector<32x128xf32>
    %18 = arith.mulf %13, %17 : vector<32x128xf32>
    %c0_5 = arith.constant 0 : index
    %c0_6 = arith.constant 0 : index
    %19 = vector.load %arg2[%c0_5, %c0_6] : memref<1x128xf32, #tpu.memory_space<vmem>>, vector<1x128xf32>
    %20 = vector.broadcast %19 : vector<1x128xf32> to vector<32x128xf32>
    %21 = arith.mulf %18, %20 : vector<32x128xf32>
    %c0_7 = arith.constant 0 : index
    %c0_8 = arith.constant 0 : index
    %22 = vector.load %arg3[%c0_7, %c0_8] : memref<1x128xf32, #tpu.memory_space<vmem>>, vector<1x128xf32>
    %23 = vector.broadcast %22 : vector<1x128xf32> to vector<32x128xf32>
    %24 = arith.addf %21, %23 : vector<32x128xf32>
    %25 = arith.truncf %24 : vector<32x128xf32> to vector<32x128xbf16>
    %c0_9 = arith.constant 0 : index
    %c0_10 = arith.constant 0 : index
    %26 = vector.load %arg4[%c0_9, %c0_10] : memref<32x128xbf16, #tpu.memory_space<vmem>>, vector<32x128xbf16>
    tpu.vector_store %arg4[%c0_9, %c0_10], %25 {strides = array<i32>} : memref<32x128xbf16, #tpu.memory_space<vmem>>, vector<32x128xbf16>,
    return
  }
  func.func @transform_0(%arg0: i32) -> (i32, i32) {
    %c0_i32 = arith.constant 0 : i32
    %c0_i32_0 = arith.constant 0 : i32
    return %arg0, %c0_i32 : i32, i32
  }
  func.func @transform_1(%arg0: i32) -> (i32, i32) {
    %c0_i32 = arith.constant 0 : i32
    %c0_i32_0 = arith.constant 0 : i32
    %c0_i32_1 = arith.constant 0 : i32
    return %c0_i32, %c0_i32_0 : i32, i32
  }
  func.func @transform_2(%arg0: i32) -> (i32, i32) {
    %c0_i32 = arith.constant 0 : i32
    %c0_i32_0 = arith.constant 0 : i32
    %c0_i32_1 = arith.constant 0 : i32
    return %c0_i32, %c0_i32_0 : i32, i32
  }
  func.func @transform_3(%arg0: i32) -> (i32, i32) {
    %c0_i32 = arith.constant 0 : i32
    %c0_i32_0 = arith.constant 0 : i32
    return %arg0, %c0_i32 : i32, i32
  }
}

module attributes {stable_mosaic.version = 11 : i64} {
  func.func @_linear_kernel(%arg0: i32, %arg1: i32, %arg2: i32, %arg3: memref<32x128xbf16, #tpu.memory_space<vmem>>, %arg4: memref<128x128xbf16, #tpu.memory_space<vmem>>, %arg5: memref<1x128xf32, #tpu.memory_space<vmem>>, %arg6: memref<32x128xbf16, #tpu.memory_space<vmem>>, %arg7: memref<32x128xf32, #tpu.memory_space<vmem>>) attributes {dimension_semantics = [#tpu.dimension_semantics<parallel>, #tpu.dimension_semantics<parallel>, #tpu.dimension_semantics<arbitrary>], iteration_bounds = array<i64: 1, 3, 1>, scalar_prefetch = 0 : i64, scratch_operands = 1 : i64, tpu.core_type = #tpu.core_type<tc>, window_params = [{transform_indices = @transform_0, window_bounds = array<i64: 32, 128>}, {transform_indices = @transform_1, window_bounds = array<i64: 128, 128>}, {transform_indices = @transform_2, window_bounds = array<i64: 1, 128>}, {transform_indices = @transform_3, window_bounds = array<i64: 32, 128>}]} {
    %c0_i32 = arith.constant 0 : i32
    %0 = arith.cmpi eq, %arg2, %c0_i32 : i32
    %1 = arith.extui %0 : i1 to i32
    %c0_i32_0 = arith.constant 0 : i32
    %2 = arith.cmpi ne, %1, %c0_i32_0 : i32
    scf.if %2 {
      %cst_10 = arith.constant 0.000000e+00 : f32
      %12 = vector.broadcast %cst_10 : f32 to vector<32x128xf32>
      %c0_11 = arith.constant 0 : index
      %c0_12 = arith.constant 0 : index
      %13 = vector.load %arg7[%c0_11, %c0_12] : memref<32x128xf32, #tpu.memory_space<vmem>>, vector<32x128xf32>
      tpu.vector_store %arg7[%c0_11, %c0_12], %12 {strides = array<i32>} : memref<32x128xf32, #tpu.memory_space<vmem>>, vector<32x128xf32>,
    } else {
    }
    %c0 = arith.constant 0 : index
    %c0_1 = arith.constant 0 : index
    %3 = vector.load %arg7[%c0, %c0_1] : memref<32x128xf32, #tpu.memory_space<vmem>>, vector<32x128xf32>
    %c0_2 = arith.constant 0 : index
    %c0_3 = arith.constant 0 : index
    %4 = vector.load %arg3[%c0_2, %c0_3] : memref<32x128xbf16, #tpu.memory_space<vmem>>, vector<32x128xbf16>
    %c0_4 = arith.constant 0 : index
    %c0_5 = arith.constant 0 : index
    %5 = vector.load %arg4[%c0_4, %c0_5] : memref<128x128xbf16, #tpu.memory_space<vmem>>, vector<128x128xbf16>
    %cst = arith.constant dense<0.000000e+00> : vector<32x128xf32>
    %6 = tpu.matmul %4, %5, %cst {dimension_numbers = #tpu.dot_dimension_numbers<[1], [0], [0], [1], [0, 0, 1, 1], [], []>} : vector<32x128xbf16>, vector<128x128xbf16>, vector<32x128xf32> -> vector<32x128xf32>
    %7 = arith.addf %3, %6 : vector<32x128xf32>
    %c0_6 = arith.constant 0 : index
    %c0_7 = arith.constant 0 : index
    %8 = vector.load %arg7[%c0_6, %c0_7] : memref<32x128xf32, #tpu.memory_space<vmem>>, vector<32x128xf32>
    tpu.vector_store %arg7[%c0_6, %c0_7], %7 {strides = array<i32>} : memref<32x128xf32, #tpu.memory_space<vmem>>, vector<32x128xf32>,
    %c0_i32_8 = arith.constant 0 : i32
    %9 = arith.cmpi eq, %arg2, %c0_i32_8 : i32
    %10 = arith.extui %9 : i1 to i32
    %c0_i32_9 = arith.constant 0 : i32
    %11 = arith.cmpi ne, %10, %c0_i32_9 : i32
    scf.if %11 {
      %c0_10 = arith.constant 0 : index
      %c0_11 = arith.constant 0 : index
      %12 = vector.load %arg7[%c0_10, %c0_11] : memref<32x128xf32, #tpu.memory_space<vmem>>, vector<32x128xf32>
      %c0_12 = arith.constant 0 : index
      %c0_13 = arith.constant 0 : index
      %13 = vector.load %arg5[%c0_12, %c0_13] : memref<1x128xf32, #tpu.memory_space<vmem>>, vector<1x128xf32>
      %14 = vector.broadcast %13 : vector<1x128xf32> to vector<32x128xf32>
      %15 = arith.addf %12, %14 : vector<32x128xf32>
      %16 = arith.truncf %15 : vector<32x128xf32> to vector<32x128xbf16>
      %c0_14 = arith.constant 0 : index
      %c0_15 = arith.constant 0 : index
      %17 = vector.load %arg6[%c0_14, %c0_15] : memref<32x128xbf16, #tpu.memory_space<vmem>>, vector<32x128xbf16>
      tpu.vector_store %arg6[%c0_14, %c0_15], %16 {strides = array<i32>} : memref<32x128xbf16, #tpu.memory_space<vmem>>, vector<32x128xbf16>,
    } else {
    }
    return
  }
  func.func @transform_0(%arg0: i32, %arg1: i32, %arg2: i32) -> (i32, i32) {
    %c0_i32 = arith.constant 0 : i32
    return %arg0, %arg2 : i32, i32
  }
  func.func @transform_1(%arg0: i32, %arg1: i32, %arg2: i32) -> (i32, i32) {
    %c0_i32 = arith.constant 0 : i32
    return %arg2, %arg1 : i32, i32
  }
  func.func @transform_2(%arg0: i32, %arg1: i32, %arg2: i32) -> (i32, i32) {
    %c0_i32 = arith.constant 0 : i32
    %c0_i32_0 = arith.constant 0 : i32
    return %c0_i32, %arg1 : i32, i32
  }
  func.func @transform_3(%arg0: i32, %arg1: i32, %arg2: i32) -> (i32, i32) {
    %c0_i32 = arith.constant 0 : i32
    return %arg0, %arg1 : i32, i32
  }
}

module attributes {stable_mosaic.version = 11 : i64} {
  func.func @_flash_attn_kernel(%arg0: i32, %arg1: i32, %arg2: i32, %arg3: memref<1x16x128xbf16, #tpu.memory_space<vmem>>, %arg4: memref<1x16x128xbf16, #tpu.memory_space<vmem>>, %arg5: memref<1x16x128xbf16, #tpu.memory_space<vmem>>, %arg6: memref<1x1x16xf32, #tpu.memory_space<vmem>>, %arg7: memref<1x16x128xbf16, #tpu.memory_space<vmem>>, %arg8: memref<4x16x1xf32, #tpu.memory_space<vmem>>, %arg9: memref<4x16x1xf32, #tpu.memory_space<vmem>>, %arg10: memref<4x16x32xf32, #tpu.memory_space<vmem>>) attributes {dimension_semantics = [#tpu.dimension_semantics<parallel>, #tpu.dimension_semantics<parallel>, #tpu.dimension_semantics<arbitrary>], iteration_bounds = array<i64: 2, 1, 1>, scalar_prefetch = 0 : i64, scratch_operands = 3 : i64, tpu.core_type = #tpu.core_type<tc>, window_params = [{transform_indices = @transform_0, window_bounds = array<i64: 1, 16, 128>}, {transform_indices = @transform_1, window_bounds = array<i64: 1, 16, 128>}, {transform_indices = @transform_2, window_bounds = array<i64: 1, 16, 128>}, {transform_indices = @transform_3, window_bounds = array<i64: 1, 1, 16>}, {transform_indices = @transform_4, window_bounds = array<i64: 1, 16, 128>}]} {
    %c0_i32 = arith.constant 0 : i32
    %0 = arith.cmpi eq, %arg2, %c0_i32 : i32
    %1 = arith.extui %0 : i1 to i32
    %c0_i32_0 = arith.constant 0 : i32
    %2 = arith.cmpi ne, %1, %c0_i32_0 : i32
    scf.if %2 {
      %cst_102 = arith.constant 0xFF800000 : f32
      %174 = vector.broadcast %cst_102 : f32 to vector<4x16x1xf32>
      %c0_103 = arith.constant 0 : index
      %c0_104 = arith.constant 0 : index
      %c0_105 = arith.constant 0 : index
      %175 = vector.load %arg8[%c0_103, %c0_104, %c0_105] : memref<4x16x1xf32, #tpu.memory_space<vmem>>, vector<4x16x1xf32>
      tpu.vector_store %arg8[%c0_103, %c0_104, %c0_105], %174 {strides = array<i32>} : memref<4x16x1xf32, #tpu.memory_space<vmem>>, vector<4x16x1xf32>,
      %cst_106 = arith.constant 0.000000e+00 : f32
      %176 = vector.broadcast %cst_106 : f32 to vector<4x16x1xf32>
      %c0_107 = arith.constant 0 : index
      %c0_108 = arith.constant 0 : index
      %c0_109 = arith.constant 0 : index
      %177 = vector.load %arg9[%c0_107, %c0_108, %c0_109] : memref<4x16x1xf32, #tpu.memory_space<vmem>>, vector<4x16x1xf32>
      tpu.vector_store %arg9[%c0_107, %c0_108, %c0_109], %176 {strides = array<i32>} : memref<4x16x1xf32, #tpu.memory_space<vmem>>, vector<4x16x1xf32>,
      %cst_110 = arith.constant 0.000000e+00 : f32
      %178 = vector.broadcast %cst_110 : f32 to vector<4x16x32xf32>
      %c0_111 = arith.constant 0 : index
      %c0_112 = arith.constant 0 : index
      %c0_113 = arith.constant 0 : index
      %179 = vector.load %arg10[%c0_111, %c0_112, %c0_113] : memref<4x16x32xf32, #tpu.memory_space<vmem>>, vector<4x16x32xf32>
      tpu.vector_store %arg10[%c0_111, %c0_112, %c0_113], %178 {strides = array<i32>} : memref<4x16x32xf32, #tpu.memory_space<vmem>>, vector<4x16x32xf32>,
    } else {
    }
    %c0 = arith.constant 0 : index
    %c0_1 = arith.constant 0 : index
    %c0_2 = arith.constant 0 : index
    %3 = vector.load %arg3[%c0, %c0_1, %c0_2] : memref<1x16x128xbf16, #tpu.memory_space<vmem>>, vector<1x16x128xbf16>
    %4 = vector.shape_cast %3 : vector<1x16x128xbf16> to vector<16x128xbf16>
    %c0_3 = arith.constant 0 : index
    %c0_4 = arith.constant 0 : index
    %c0_5 = arith.constant 0 : index
    %5 = vector.load %arg4[%c0_3, %c0_4, %c0_5] : memref<1x16x128xbf16, #tpu.memory_space<vmem>>, vector<1x16x128xbf16>
    %6 = vector.shape_cast %5 : vector<1x16x128xbf16> to vector<16x128xbf16>
    %c0_6 = arith.constant 0 : index
    %c0_7 = arith.constant 0 : index
    %c0_8 = arith.constant 0 : index
    %7 = vector.load %arg5[%c0_6, %c0_7, %c0_8] : memref<1x16x128xbf16, #tpu.memory_space<vmem>>, vector<1x16x128xbf16>
    %8 = vector.shape_cast %7 : vector<1x16x128xbf16> to vector<16x128xbf16>
    %c0_9 = arith.constant 0 : index
    %c0_10 = arith.constant 0 : index
    %c0_11 = arith.constant 0 : index
    %9 = vector.load %arg6[%c0_9, %c0_10, %c0_11] : memref<1x1x16xf32, #tpu.memory_space<vmem>>, vector<1x1x16xf32>
    %10 = vector.shape_cast %9 : vector<1x1x16xf32> to vector<1x16xf32>
    %11 = vector.extract_strided_slice %4 {offsets = [0, 0], sizes = [16, 32], strides = [1, 1]} : vector<16x128xbf16> to vector<16x32xbf16>
    %12 = vector.extract_strided_slice %6 {offsets = [0, 0], sizes = [16, 32], strides = [1, 1]} : vector<16x128xbf16> to vector<16x32xbf16>
    %13 = vector.extract_strided_slice %8 {offsets = [0, 0], sizes = [16, 32], strides = [1, 1]} : vector<16x128xbf16> to vector<16x32xbf16>
    %cst = arith.constant dense<0.000000e+00> : vector<16x16xf32>
    %14 = tpu.matmul %11, %12, %cst {dimension_numbers = #tpu.dot_dimension_numbers<[1], [1], [0], [0], [0, 0, 1, 0], [], []>} : vector<16x32xbf16>, vector<16x32xbf16>, vector<16x16xf32> -> vector<16x16xf32>
    %cst_12 = arith.constant 0.176776692 : f32
    %15 = vector.broadcast %cst_12 : f32 to vector<16x16xf32>
    %16 = arith.mulf %14, %15 : vector<16x16xf32>
    %17 = vector.broadcast %10 : vector<1x16xf32> to vector<16x16xf32>
    %18 = arith.addf %16, %17 : vector<16x16xf32>
    %c0_13 = arith.constant 0 : index
    %c0_14 = arith.constant 0 : index
    %c0_15 = arith.constant 0 : index
    %19 = vector.load %arg8[%c0_13, %c0_14, %c0_15] : memref<4x16x1xf32, #tpu.memory_space<vmem>>, vector<1x16x1xf32>
    %20 = vector.shape_cast %19 : vector<1x16x1xf32> to vector<16x1xf32>
    %cst_16 = arith.constant dense<0xFF800000> : vector<16xf32>
    %21 = vector.multi_reduction <maximumf>, %18, %cst_16 [1] : vector<16x16xf32> to vector<16xf32>
    %22 = vector.shape_cast %21 : vector<16xf32> to vector<16x1xf32>
    %23 = arith.maximumf %20, %22 : vector<16x1xf32>
    %24 = arith.subf %20, %23 : vector<16x1xf32>
    %25 = math.exp %24 : vector<16x1xf32>
    %26 = vector.broadcast %23 : vector<16x1xf32> to vector<16x16xf32>
    %27 = arith.subf %18, %26 : vector<16x16xf32>
    %28 = math.exp %27 : vector<16x16xf32>
    %c0_17 = arith.constant 0 : index
    %c0_18 = arith.constant 0 : index
    %c0_19 = arith.constant 0 : index
    %29 = vector.load %arg9[%c0_17, %c0_18, %c0_19] : memref<4x16x1xf32, #tpu.memory_space<vmem>>, vector<1x16x1xf32>
    %30 = vector.shape_cast %29 : vector<1x16x1xf32> to vector<16x1xf32>
    %31 = arith.mulf %25, %30 : vector<16x1xf32>
    %cst_20 = arith.constant dense<0.000000e+00> : vector<16xf32>
    %32 = vector.multi_reduction <add>, %28, %cst_20 [1] : vector<16x16xf32> to vector<16xf32>
    %33 = vector.shape_cast %32 : vector<16xf32> to vector<16x1xf32>
    %34 = arith.addf %31, %33 : vector<16x1xf32>
    %c0_21 = arith.constant 0 : index
    %c0_22 = arith.constant 0 : index
    %c0_23 = arith.constant 0 : index
    %35 = vector.load %arg9[%c0_21, %c0_22, %c0_23] : memref<4x16x1xf32, #tpu.memory_space<vmem>>, vector<1x16x1xf32>
    %36 = vector.shape_cast %35 : vector<1x16x1xf32> to vector<16x1xf32>
    %37 = vector.shape_cast %34 : vector<16x1xf32> to vector<1x16x1xf32>
    tpu.vector_store %arg9[%c0_21, %c0_22, %c0_23], %37 {strides = array<i32>} : memref<4x16x1xf32, #tpu.memory_space<vmem>>, vector<1x16x1xf32>,
    %c0_24 = arith.constant 0 : index
    %c0_25 = arith.constant 0 : index
    %c0_26 = arith.constant 0 : index
    %38 = vector.load %arg10[%c0_24, %c0_25, %c0_26] : memref<4x16x32xf32, #tpu.memory_space<vmem>>, vector<1x16x32xf32>
    %39 = vector.shape_cast %38 : vector<1x16x32xf32> to vector<16x32xf32>
    %40 = vector.broadcast %25 : vector<16x1xf32> to vector<16x32xf32>
    %41 = arith.mulf %40, %39 : vector<16x32xf32>
    %42 = arith.truncf %28 : vector<16x16xf32> to vector<16x16xbf16>
    %cst_27 = arith.constant dense<0.000000e+00> : vector<16x32xf32>
    %43 = tpu.matmul %42, %13, %cst_27 {dimension_numbers = #tpu.dot_dimension_numbers<[1], [0], [0], [1], [0, 0, 1, 1], [], []>} : vector<16x16xbf16>, vector<16x32xbf16>, vector<16x32xf32> -> vector<16x32xf32>
    %44 = arith.addf %41, %43 : vector<16x32xf32>
    %c0_28 = arith.constant 0 : index
    %c0_29 = arith.constant 0 : index
    %c0_30 = arith.constant 0 : index
    %45 = vector.load %arg10[%c0_28, %c0_29, %c0_30] : memref<4x16x32xf32, #tpu.memory_space<vmem>>, vector<1x16x32xf32>
    %46 = vector.shape_cast %45 : vector<1x16x32xf32> to vector<16x32xf32>
    %47 = vector.shape_cast %44 : vector<16x32xf32> to vector<1x16x32xf32>
    tpu.vector_store %arg10[%c0_28, %c0_29, %c0_30], %47 {strides = array<i32>} : memref<4x16x32xf32, #tpu.memory_space<vmem>>, vector<1x16x32xf32>,
    %c0_31 = arith.constant 0 : index
    %c0_32 = arith.constant 0 : index
    %c0_33 = arith.constant 0 : index
    %48 = vector.load %arg8[%c0_31, %c0_32, %c0_33] : memref<4x16x1xf32, #tpu.memory_space<vmem>>, vector<1x16x1xf32>
    %49 = vector.shape_cast %48 : vector<1x16x1xf32> to vector<16x1xf32>
    %50 = vector.shape_cast %23 : vector<16x1xf32> to vector<1x16x1xf32>
    tpu.vector_store %arg8[%c0_31, %c0_32, %c0_33], %50 {strides = array<i32>} : memref<4x16x1xf32, #tpu.memory_space<vmem>>, vector<1x16x1xf32>,
    %51 = vector.extract_strided_slice %4 {offsets = [0, 32], sizes = [16, 32], strides = [1, 1]} : vector<16x128xbf16> to vector<16x32xbf16>
    %52 = vector.extract_strided_slice %6 {offsets = [0, 32], sizes = [16, 32], strides = [1, 1]} : vector<16x128xbf16> to vector<16x32xbf16>
    %53 = vector.extract_strided_slice %8 {offsets = [0, 32], sizes = [16, 32], strides = [1, 1]} : vector<16x128xbf16> to vector<16x32xbf16>
    %cst_34 = arith.constant dense<0.000000e+00> : vector<16x16xf32>
    %54 = tpu.matmul %51, %52, %cst_34 {dimension_numbers = #tpu.dot_dimension_numbers<[1], [1], [0], [0], [0, 0, 1, 0], [], []>} : vector<16x32xbf16>, vector<16x32xbf16>, vector<16x16xf32> -> vector<16x16xf32>
    %cst_35 = arith.constant 0.176776692 : f32
    %55 = vector.broadcast %cst_35 : f32 to vector<16x16xf32>
    %56 = arith.mulf %54, %55 : vector<16x16xf32>
    %57 = vector.broadcast %10 : vector<1x16xf32> to vector<16x16xf32>
    %58 = arith.addf %56, %57 : vector<16x16xf32>
    %c1 = arith.constant 1 : index
    %c0_36 = arith.constant 0 : index
    %c0_37 = arith.constant 0 : index
    %59 = vector.load %arg8[%c1, %c0_36, %c0_37] : memref<4x16x1xf32, #tpu.memory_space<vmem>>, vector<1x16x1xf32>
    %60 = vector.shape_cast %59 : vector<1x16x1xf32> to vector<16x1xf32>
    %cst_38 = arith.constant dense<0xFF800000> : vector<16xf32>
    %61 = vector.multi_reduction <maximumf>, %58, %cst_38 [1] : vector<16x16xf32> to vector<16xf32>
    %62 = vector.shape_cast %61 : vector<16xf32> to vector<16x1xf32>
    %63 = arith.maximumf %60, %62 : vector<16x1xf32>
    %64 = arith.subf %60, %63 : vector<16x1xf32>
    %65 = math.exp %64 : vector<16x1xf32>
    %66 = vector.broadcast %63 : vector<16x1xf32> to vector<16x16xf32>
    %67 = arith.subf %58, %66 : vector<16x16xf32>
    %68 = math.exp %67 : vector<16x16xf32>
    %c1_39 = arith.constant 1 : index
    %c0_40 = arith.constant 0 : index
    %c0_41 = arith.constant 0 : index
    %69 = vector.load %arg9[%c1_39, %c0_40, %c0_41] : memref<4x16x1xf32, #tpu.memory_space<vmem>>, vector<1x16x1xf32>
    %70 = vector.shape_cast %69 : vector<1x16x1xf32> to vector<16x1xf32>
    %71 = arith.mulf %65, %70 : vector<16x1xf32>
    %cst_42 = arith.constant dense<0.000000e+00> : vector<16xf32>
    %72 = vector.multi_reduction <add>, %68, %cst_42 [1] : vector<16x16xf32> to vector<16xf32>
    %73 = vector.shape_cast %72 : vector<16xf32> to vector<16x1xf32>
    %74 = arith.addf %71, %73 : vector<16x1xf32>
    %c1_43 = arith.constant 1 : index
    %c0_44 = arith.constant 0 : index
    %c0_45 = arith.constant 0 : index
    %75 = vector.load %arg9[%c1_43, %c0_44, %c0_45] : memref<4x16x1xf32, #tpu.memory_space<vmem>>, vector<1x16x1xf32>
    %76 = vector.shape_cast %75 : vector<1x16x1xf32> to vector<16x1xf32>
    %77 = vector.shape_cast %74 : vector<16x1xf32> to vector<1x16x1xf32>
    tpu.vector_store %arg9[%c1_43, %c0_44, %c0_45], %77 {strides = array<i32>} : memref<4x16x1xf32, #tpu.memory_space<vmem>>, vector<1x16x1xf32>,
    %c1_46 = arith.constant 1 : index
    %c0_47 = arith.constant 0 : index
    %c0_48 = arith.constant 0 : index
    %78 = vector.load %arg10[%c1_46, %c0_47, %c0_48] : memref<4x16x32xf32, #tpu.memory_space<vmem>>, vector<1x16x32xf32>
    %79 = vector.shape_cast %78 : vector<1x16x32xf32> to vector<16x32xf32>
    %80 = vector.broadcast %65 : vector<16x1xf32> to vector<16x32xf32>
    %81 = arith.mulf %80, %79 : vector<16x32xf32>
    %82 = arith.truncf %68 : vector<16x16xf32> to vector<16x16xbf16>
    %cst_49 = arith.constant dense<0.000000e+00> : vector<16x32xf32>
    %83 = tpu.matmul %82, %53, %cst_49 {dimension_numbers = #tpu.dot_dimension_numbers<[1], [0], [0], [1], [0, 0, 1, 1], [], []>} : vector<16x16xbf16>, vector<16x32xbf16>, vector<16x32xf32> -> vector<16x32xf32>
    %84 = arith.addf %81, %83 : vector<16x32xf32>
    %c1_50 = arith.constant 1 : index
    %c0_51 = arith.constant 0 : index
    %c0_52 = arith.constant 0 : index
    %85 = vector.load %arg10[%c1_50, %c0_51, %c0_52] : memref<4x16x32xf32, #tpu.memory_space<vmem>>, vector<1x16x32xf32>
    %86 = vector.shape_cast %85 : vector<1x16x32xf32> to vector<16x32xf32>
    %87 = vector.shape_cast %84 : vector<16x32xf32> to vector<1x16x32xf32>
    tpu.vector_store %arg10[%c1_50, %c0_51, %c0_52], %87 {strides = array<i32>} : memref<4x16x32xf32, #tpu.memory_space<vmem>>, vector<1x16x32xf32>,
    %c1_53 = arith.constant 1 : index
    %c0_54 = arith.constant 0 : index
    %c0_55 = arith.constant 0 : index
    %88 = vector.load %arg8[%c1_53, %c0_54, %c0_55] : memref<4x16x1xf32, #tpu.memory_space<vmem>>, vector<1x16x1xf32>
    %89 = vector.shape_cast %88 : vector<1x16x1xf32> to vector<16x1xf32>
    %90 = vector.shape_cast %63 : vector<16x1xf32> to vector<1x16x1xf32>
    tpu.vector_store %arg8[%c1_53, %c0_54, %c0_55], %90 {strides = array<i32>} : memref<4x16x1xf32, #tpu.memory_space<vmem>>, vector<1x16x1xf32>,
    %91 = vector.extract_strided_slice %4 {offsets = [0, 64], sizes = [16, 32], strides = [1, 1]} : vector<16x128xbf16> to vector<16x32xbf16>
    %92 = vector.extract_strided_slice %6 {offsets = [0, 64], sizes = [16, 32], strides = [1, 1]} : vector<16x128xbf16> to vector<16x32xbf16>
    %93 = vector.extract_strided_slice %8 {offsets = [0, 64], sizes = [16, 32], strides = [1, 1]} : vector<16x128xbf16> to vector<16x32xbf16>
    %cst_56 = arith.constant dense<0.000000e+00> : vector<16x16xf32>
    %94 = tpu.matmul %91, %92, %cst_56 {dimension_numbers = #tpu.dot_dimension_numbers<[1], [1], [0], [0], [0, 0, 1, 0], [], []>} : vector<16x32xbf16>, vector<16x32xbf16>, vector<16x16xf32> -> vector<16x16xf32>
    %cst_57 = arith.constant 0.176776692 : f32
    %95 = vector.broadcast %cst_57 : f32 to vector<16x16xf32>
    %96 = arith.mulf %94, %95 : vector<16x16xf32>
    %97 = vector.broadcast %10 : vector<1x16xf32> to vector<16x16xf32>
    %98 = arith.addf %96, %97 : vector<16x16xf32>
    %c2 = arith.constant 2 : index
    %c0_58 = arith.constant 0 : index
    %c0_59 = arith.constant 0 : index
    %99 = vector.load %arg8[%c2, %c0_58, %c0_59] : memref<4x16x1xf32, #tpu.memory_space<vmem>>, vector<1x16x1xf32>
    %100 = vector.shape_cast %99 : vector<1x16x1xf32> to vector<16x1xf32>
    %cst_60 = arith.constant dense<0xFF800000> : vector<16xf32>
    %101 = vector.multi_reduction <maximumf>, %98, %cst_60 [1] : vector<16x16xf32> to vector<16xf32>
    %102 = vector.shape_cast %101 : vector<16xf32> to vector<16x1xf32>
    %103 = arith.maximumf %100, %102 : vector<16x1xf32>
    %104 = arith.subf %100, %103 : vector<16x1xf32>
    %105 = math.exp %104 : vector<16x1xf32>
    %106 = vector.broadcast %103 : vector<16x1xf32> to vector<16x16xf32>
    %107 = arith.subf %98, %106 : vector<16x16xf32>
    %108 = math.exp %107 : vector<16x16xf32>
    %c2_61 = arith.constant 2 : index
    %c0_62 = arith.constant 0 : index
    %c0_63 = arith.constant 0 : index
    %109 = vector.load %arg9[%c2_61, %c0_62, %c0_63] : memref<4x16x1xf32, #tpu.memory_space<vmem>>, vector<1x16x1xf32>
    %110 = vector.shape_cast %109 : vector<1x16x1xf32> to vector<16x1xf32>
    %111 = arith.mulf %105, %110 : vector<16x1xf32>
    %cst_64 = arith.constant dense<0.000000e+00> : vector<16xf32>
    %112 = vector.multi_reduction <add>, %108, %cst_64 [1] : vector<16x16xf32> to vector<16xf32>
    %113 = vector.shape_cast %112 : vector<16xf32> to vector<16x1xf32>
    %114 = arith.addf %111, %113 : vector<16x1xf32>
    %c2_65 = arith.constant 2 : index
    %c0_66 = arith.constant 0 : index
    %c0_67 = arith.constant 0 : index
    %115 = vector.load %arg9[%c2_65, %c0_66, %c0_67] : memref<4x16x1xf32, #tpu.memory_space<vmem>>, vector<1x16x1xf32>
    %116 = vector.shape_cast %115 : vector<1x16x1xf32> to vector<16x1xf32>
    %117 = vector.shape_cast %114 : vector<16x1xf32> to vector<1x16x1xf32>
    tpu.vector_store %arg9[%c2_65, %c0_66, %c0_67], %117 {strides = array<i32>} : memref<4x16x1xf32, #tpu.memory_space<vmem>>, vector<1x16x1xf32>,
    %c2_68 = arith.constant 2 : index
    %c0_69 = arith.constant 0 : index
    %c0_70 = arith.constant 0 : index
    %118 = vector.load %arg10[%c2_68, %c0_69, %c0_70] : memref<4x16x32xf32, #tpu.memory_space<vmem>>, vector<1x16x32xf32>
    %119 = vector.shape_cast %118 : vector<1x16x32xf32> to vector<16x32xf32>
    %120 = vector.broadcast %105 : vector<16x1xf32> to vector<16x32xf32>
    %121 = arith.mulf %120, %119 : vector<16x32xf32>
    %122 = arith.truncf %108 : vector<16x16xf32> to vector<16x16xbf16>
    %cst_71 = arith.constant dense<0.000000e+00> : vector<16x32xf32>
    %123 = tpu.matmul %122, %93, %cst_71 {dimension_numbers = #tpu.dot_dimension_numbers<[1], [0], [0], [1], [0, 0, 1, 1], [], []>} : vector<16x16xbf16>, vector<16x32xbf16>, vector<16x32xf32> -> vector<16x32xf32>
    %124 = arith.addf %121, %123 : vector<16x32xf32>
    %c2_72 = arith.constant 2 : index
    %c0_73 = arith.constant 0 : index
    %c0_74 = arith.constant 0 : index
    %125 = vector.load %arg10[%c2_72, %c0_73, %c0_74] : memref<4x16x32xf32, #tpu.memory_space<vmem>>, vector<1x16x32xf32>
    %126 = vector.shape_cast %125 : vector<1x16x32xf32> to vector<16x32xf32>
    %127 = vector.shape_cast %124 : vector<16x32xf32> to vector<1x16x32xf32>
    tpu.vector_store %arg10[%c2_72, %c0_73, %c0_74], %127 {strides = array<i32>} : memref<4x16x32xf32, #tpu.memory_space<vmem>>, vector<1x16x32xf32>,
    %c2_75 = arith.constant 2 : index
    %c0_76 = arith.constant 0 : index
    %c0_77 = arith.constant 0 : index
    %128 = vector.load %arg8[%c2_75, %c0_76, %c0_77] : memref<4x16x1xf32, #tpu.memory_space<vmem>>, vector<1x16x1xf32>
    %129 = vector.shape_cast %128 : vector<1x16x1xf32> to vector<16x1xf32>
    %130 = vector.shape_cast %103 : vector<16x1xf32> to vector<1x16x1xf32>
    tpu.vector_store %arg8[%c2_75, %c0_76, %c0_77], %130 {strides = array<i32>} : memref<4x16x1xf32, #tpu.memory_space<vmem>>, vector<1x16x1xf32>,
    %131 = vector.extract_strided_slice %4 {offsets = [0, 96], sizes = [16, 32], strides = [1, 1]} : vector<16x128xbf16> to vector<16x32xbf16>
    %132 = vector.extract_strided_slice %6 {offsets = [0, 96], sizes = [16, 32], strides = [1, 1]} : vector<16x128xbf16> to vector<16x32xbf16>
    %133 = vector.extract_strided_slice %8 {offsets = [0, 96], sizes = [16, 32], strides = [1, 1]} : vector<16x128xbf16> to vector<16x32xbf16>
    %cst_78 = arith.constant dense<0.000000e+00> : vector<16x16xf32>
    %134 = tpu.matmul %131, %132, %cst_78 {dimension_numbers = #tpu.dot_dimension_numbers<[1], [1], [0], [0], [0, 0, 1, 0], [], []>} : vector<16x32xbf16>, vector<16x32xbf16>, vector<16x16xf32> -> vector<16x16xf32>
    %cst_79 = arith.constant 0.176776692 : f32
    %135 = vector.broadcast %cst_79 : f32 to vector<16x16xf32>
    %136 = arith.mulf %134, %135 : vector<16x16xf32>
    %137 = vector.broadcast %10 : vector<1x16xf32> to vector<16x16xf32>
    %138 = arith.addf %136, %137 : vector<16x16xf32>
    %c3 = arith.constant 3 : index
    %c0_80 = arith.constant 0 : index
    %c0_81 = arith.constant 0 : index
    %139 = vector.load %arg8[%c3, %c0_80, %c0_81] : memref<4x16x1xf32, #tpu.memory_space<vmem>>, vector<1x16x1xf32>
    %140 = vector.shape_cast %139 : vector<1x16x1xf32> to vector<16x1xf32>
    %cst_82 = arith.constant dense<0xFF800000> : vector<16xf32>
    %141 = vector.multi_reduction <maximumf>, %138, %cst_82 [1] : vector<16x16xf32> to vector<16xf32>
    %142 = vector.shape_cast %141 : vector<16xf32> to vector<16x1xf32>
    %143 = arith.maximumf %140, %142 : vector<16x1xf32>
    %144 = arith.subf %140, %143 : vector<16x1xf32>
    %145 = math.exp %144 : vector<16x1xf32>
    %146 = vector.broadcast %143 : vector<16x1xf32> to vector<16x16xf32>
    %147 = arith.subf %138, %146 : vector<16x16xf32>
    %148 = math.exp %147 : vector<16x16xf32>
    %c3_83 = arith.constant 3 : index
    %c0_84 = arith.constant 0 : index
    %c0_85 = arith.constant 0 : index
    %149 = vector.load %arg9[%c3_83, %c0_84, %c0_85] : memref<4x16x1xf32, #tpu.memory_space<vmem>>, vector<1x16x1xf32>
    %150 = vector.shape_cast %149 : vector<1x16x1xf32> to vector<16x1xf32>
    %151 = arith.mulf %145, %150 : vector<16x1xf32>
    %cst_86 = arith.constant dense<0.000000e+00> : vector<16xf32>
    %152 = vector.multi_reduction <add>, %148, %cst_86 [1] : vector<16x16xf32> to vector<16xf32>
    %153 = vector.shape_cast %152 : vector<16xf32> to vector<16x1xf32>
    %154 = arith.addf %151, %153 : vector<16x1xf32>
    %c3_87 = arith.constant 3 : index
    %c0_88 = arith.constant 0 : index
    %c0_89 = arith.constant 0 : index
    %155 = vector.load %arg9[%c3_87, %c0_88, %c0_89] : memref<4x16x1xf32, #tpu.memory_space<vmem>>, vector<1x16x1xf32>
    %156 = vector.shape_cast %155 : vector<1x16x1xf32> to vector<16x1xf32>
    %157 = vector.shape_cast %154 : vector<16x1xf32> to vector<1x16x1xf32>
    tpu.vector_store %arg9[%c3_87, %c0_88, %c0_89], %157 {strides = array<i32>} : memref<4x16x1xf32, #tpu.memory_space<vmem>>, vector<1x16x1xf32>,
    %c3_90 = arith.constant 3 : index
    %c0_91 = arith.constant 0 : index
    %c0_92 = arith.constant 0 : index
    %158 = vector.load %arg10[%c3_90, %c0_91, %c0_92] : memref<4x16x32xf32, #tpu.memory_space<vmem>>, vector<1x16x32xf32>
    %159 = vector.shape_cast %158 : vector<1x16x32xf32> to vector<16x32xf32>
    %160 = vector.broadcast %145 : vector<16x1xf32> to vector<16x32xf32>
    %161 = arith.mulf %160, %159 : vector<16x32xf32>
    %162 = arith.truncf %148 : vector<16x16xf32> to vector<16x16xbf16>
    %cst_93 = arith.constant dense<0.000000e+00> : vector<16x32xf32>
    %163 = tpu.matmul %162, %133, %cst_93 {dimension_numbers = #tpu.dot_dimension_numbers<[1], [0], [0], [1], [0, 0, 1, 1], [], []>} : vector<16x16xbf16>, vector<16x32xbf16>, vector<16x32xf32> -> vector<16x32xf32>
    %164 = arith.addf %161, %163 : vector<16x32xf32>
    %c3_94 = arith.constant 3 : index
    %c0_95 = arith.constant 0 : index
    %c0_96 = arith.constant 0 : index
    %165 = vector.load %arg10[%c3_94, %c0_95, %c0_96] : memref<4x16x32xf32, #tpu.memory_space<vmem>>, vector<1x16x32xf32>
    %166 = vector.shape_cast %165 : vector<1x16x32xf32> to vector<16x32xf32>
    %167 = vector.shape_cast %164 : vector<16x32xf32> to vector<1x16x32xf32>
    tpu.vector_store %arg10[%c3_94, %c0_95, %c0_96], %167 {strides = array<i32>} : memref<4x16x32xf32, #tpu.memory_space<vmem>>, vector<1x16x32xf32>,
    %c3_97 = arith.constant 3 : index
    %c0_98 = arith.constant 0 : index
    %c0_99 = arith.constant 0 : index
    %168 = vector.load %arg8[%c3_97, %c0_98, %c0_99] : memref<4x16x1xf32, #tpu.memory_space<vmem>>, vector<1x16x1xf32>
    %169 = vector.shape_cast %168 : vector<1x16x1xf32> to vector<16x1xf32>
    %170 = vector.shape_cast %143 : vector<16x1xf32> to vector<1x16x1xf32>
    tpu.vector_store %arg8[%c3_97, %c0_98, %c0_99], %170 {strides = array<i32>} : memref<4x16x1xf32, #tpu.memory_space<vmem>>, vector<1x16x1xf32>,
    %c0_i32_100 = arith.constant 0 : i32
    %171 = arith.cmpi eq, %arg2, %c0_i32_100 : i32
    %172 = arith.extui %171 : i1 to i32
    %c0_i32_101 = arith.constant 0 : i32
    %173 = arith.cmpi ne, %172, %c0_i32_101 : i32
    scf.if %173 {
      %c0_102 = arith.constant 0 : index
      %c0_103 = arith.constant 0 : index
      %c0_104 = arith.constant 0 : index
      %174 = vector.load %arg9[%c0_102, %c0_103, %c0_104] : memref<4x16x1xf32, #tpu.memory_space<vmem>>, vector<1x16x1xf32>
      %175 = vector.shape_cast %174 : vector<1x16x1xf32> to vector<16x1xf32>
      %176 = tpu.reciprocal %175 {approx = true} : vector<16x1xf32> -> vector<16x1xf32>
      %c0_105 = arith.constant 0 : index
      %c0_106 = arith.constant 0 : index
      %c0_107 = arith.constant 0 : index
      %177 = vector.load %arg10[%c0_105, %c0_106, %c0_107] : memref<4x16x32xf32, #tpu.memory_space<vmem>>, vector<1x16x32xf32>
      %178 = vector.shape_cast %177 : vector<1x16x32xf32> to vector<16x32xf32>
      %179 = vector.broadcast %176 : vector<16x1xf32> to vector<16x32xf32>
      %180 = arith.mulf %178, %179 : vector<16x32xf32>
      %181 = arith.truncf %180 : vector<16x32xf32> to vector<16x32xbf16>
      %c0_108 = arith.constant 0 : index
      %c0_109 = arith.constant 0 : index
      %c0_110 = arith.constant 0 : index
      %182 = vector.load %arg7[%c0_108, %c0_109, %c0_110] : memref<1x16x128xbf16, #tpu.memory_space<vmem>>, vector<1x16x32xbf16>
      %183 = vector.shape_cast %182 : vector<1x16x32xbf16> to vector<16x32xbf16>
      %184 = vector.shape_cast %181 : vector<16x32xbf16> to vector<1x16x32xbf16>
      tpu.vector_store %arg7[%c0_108, %c0_109, %c0_110], %184 {strides = array<i32>} : memref<1x16x128xbf16, #tpu.memory_space<vmem>>, vector<1x16x32xbf16>,
      %c1_111 = arith.constant 1 : index
      %c0_112 = arith.constant 0 : index
      %c0_113 = arith.constant 0 : index
      %185 = vector.load %arg9[%c1_111, %c0_112, %c0_113] : memref<4x16x1xf32, #tpu.memory_space<vmem>>, vector<1x16x1xf32>
      %186 = vector.shape_cast %185 : vector<1x16x1xf32> to vector<16x1xf32>
      %187 = tpu.reciprocal %186 {approx = true} : vector<16x1xf32> -> vector<16x1xf32>
      %c1_114 = arith.constant 1 : index
      %c0_115 = arith.constant 0 : index
      %c0_116 = arith.constant 0 : index
      %188 = vector.load %arg10[%c1_114, %c0_115, %c0_116] : memref<4x16x32xf32, #tpu.memory_space<vmem>>, vector<1x16x32xf32>
      %189 = vector.shape_cast %188 : vector<1x16x32xf32> to vector<16x32xf32>
      %190 = vector.broadcast %187 : vector<16x1xf32> to vector<16x32xf32>
      %191 = arith.mulf %189, %190 : vector<16x32xf32>
      %192 = arith.truncf %191 : vector<16x32xf32> to vector<16x32xbf16>
      %c0_117 = arith.constant 0 : index
      %c0_118 = arith.constant 0 : index
      %c32 = arith.constant 32 : index
      %193 = vector.load %arg7[%c0_117, %c0_118, %c32] : memref<1x16x128xbf16, #tpu.memory_space<vmem>>, vector<1x16x32xbf16>
      %194 = vector.shape_cast %193 : vector<1x16x32xbf16> to vector<16x32xbf16>
      %195 = vector.shape_cast %192 : vector<16x32xbf16> to vector<1x16x32xbf16>
      tpu.vector_store %arg7[%c0_117, %c0_118, %c32], %195 {strides = array<i32>} : memref<1x16x128xbf16, #tpu.memory_space<vmem>>, vector<1x16x32xbf16>,
      %c2_119 = arith.constant 2 : index
      %c0_120 = arith.constant 0 : index
      %c0_121 = arith.constant 0 : index
      %196 = vector.load %arg9[%c2_119, %c0_120, %c0_121] : memref<4x16x1xf32, #tpu.memory_space<vmem>>, vector<1x16x1xf32>
      %197 = vector.shape_cast %196 : vector<1x16x1xf32> to vector<16x1xf32>
      %198 = tpu.reciprocal %197 {approx = true} : vector<16x1xf32> -> vector<16x1xf32>
      %c2_122 = arith.constant 2 : index
      %c0_123 = arith.constant 0 : index
      %c0_124 = arith.constant 0 : index
      %199 = vector.load %arg10[%c2_122, %c0_123, %c0_124] : memref<4x16x32xf32, #tpu.memory_space<vmem>>, vector<1x16x32xf32>
      %200 = vector.shape_cast %199 : vector<1x16x32xf32> to vector<16x32xf32>
      %201 = vector.broadcast %198 : vector<16x1xf32> to vector<16x32xf32>
      %202 = arith.mulf %200, %201 : vector<16x32xf32>
      %203 = arith.truncf %202 : vector<16x32xf32> to vector<16x32xbf16>
      %c0_125 = arith.constant 0 : index
      %c0_126 = arith.constant 0 : index
      %c64 = arith.constant 64 : index
      %204 = vector.load %arg7[%c0_125, %c0_126, %c64] : memref<1x16x128xbf16, #tpu.memory_space<vmem>>, vector<1x16x32xbf16>
      %205 = vector.shape_cast %204 : vector<1x16x32xbf16> to vector<16x32xbf16>
      %206 = vector.shape_cast %203 : vector<16x32xbf16> to vector<1x16x32xbf16>
      tpu.vector_store %arg7[%c0_125, %c0_126, %c64], %206 {strides = array<i32>} : memref<1x16x128xbf16, #tpu.memory_space<vmem>>, vector<1x16x32xbf16>,
      %c3_127 = arith.constant 3 : index
      %c0_128 = arith.constant 0 : index
      %c0_129 = arith.constant 0 : index
      %207 = vector.load %arg9[%c3_127, %c0_128, %c0_129] : memref<4x16x1xf32, #tpu.memory_space<vmem>>, vector<1x16x1xf32>
      %208 = vector.shape_cast %207 : vector<1x16x1xf32> to vector<16x1xf32>
      %209 = tpu.reciprocal %208 {approx = true} : vector<16x1xf32> -> vector<16x1xf32>
      %c3_130 = arith.constant 3 : index
      %c0_131 = arith.constant 0 : index
      %c0_132 = arith.constant 0 : index
      %210 = vector.load %arg10[%c3_130, %c0_131, %c0_132] : memref<4x16x32xf32, #tpu.memory_space<vmem>>, vector<1x16x32xf32>
      %211 = vector.shape_cast %210 : vector<1x16x32xf32> to vector<16x32xf32>
      %212 = vector.broadcast %209 : vector<16x1xf32> to vector<16x32xf32>
      %213 = arith.mulf %211, %212 : vector<16x32xf32>
      %214 = arith.truncf %213 : vector<16x32xf32> to vector<16x32xbf16>
      %c0_133 = arith.constant 0 : index
      %c0_134 = arith.constant 0 : index
      %c96 = arith.constant 96 : index
      %215 = vector.load %arg7[%c0_133, %c0_134, %c96] : memref<1x16x128xbf16, #tpu.memory_space<vmem>>, vector<1x16x32xbf16>
      %216 = vector.shape_cast %215 : vector<1x16x32xbf16> to vector<16x32xbf16>
      %217 = vector.shape_cast %214 : vector<16x32xbf16> to vector<1x16x32xbf16>
      tpu.vector_store %arg7[%c0_133, %c0_134, %c96], %217 {strides = array<i32>} : memref<1x16x128xbf16, #tpu.memory_space<vmem>>, vector<1x16x32xbf16>,
    } else {
    }
    return
  }
  func.func @transform_0(%arg0: i32, %arg1: i32, %arg2: i32) -> (i32, i32, i32) {
    %c0_i32 = arith.constant 0 : i32
    %c0_i32_0 = arith.constant 0 : i32
    return %arg0, %arg1, %c0_i32 : i32, i32, i32
  }
  func.func @transform_1(%arg0: i32, %arg1: i32, %arg2: i32) -> (i32, i32, i32) {
    %c1_i32 = arith.constant 1 : i32
    %c0_i32 = arith.constant 0 : i32
    return %arg0, %arg2, %c1_i32 : i32, i32, i32
  }
  func.func @transform_2(%arg0: i32, %arg1: i32, %arg2: i32) -> (i32, i32, i32) {
    %c2_i32 = arith.constant 2 : i32
    %c0_i32 = arith.constant 0 : i32
    return %arg0, %arg2, %c2_i32 : i32, i32, i32
  }
  func.func @transform_3(%arg0: i32, %arg1: i32, %arg2: i32) -> (i32, i32, i32) {
    %c0_i32 = arith.constant 0 : i32
    %c0_i32_0 = arith.constant 0 : i32
    return %arg0, %c0_i32, %arg2 : i32, i32, i32
  }
  func.func @transform_4(%arg0: i32, %arg1: i32, %arg2: i32) -> (i32, i32, i32) {
    %c0_i32 = arith.constant 0 : i32
    %c0_i32_0 = arith.constant 0 : i32
    return %arg0, %arg1, %c0_i32 : i32, i32, i32
  }
}

module attributes {stable_mosaic.version = 11 : i64} {
  func.func @_fused_matmul_ln_kernel(%arg0: i32, %arg1: i32, %arg2: memref<32x128xbf16, #tpu.memory_space<vmem>>, %arg3: memref<128x128xbf16, #tpu.memory_space<vmem>>, %arg4: memref<1x128xf32, #tpu.memory_space<vmem>>, %arg5: memref<32x128xbf16, #tpu.memory_space<vmem>>, %arg6: memref<1x128xf32, #tpu.memory_space<vmem>>, %arg7: memref<1x128xf32, #tpu.memory_space<vmem>>, %arg8: memref<32x128xbf16, #tpu.memory_space<vmem>>, %arg9: memref<32x128xf32, #tpu.memory_space<vmem>>) attributes {dimension_semantics = [#tpu.dimension_semantics<parallel>, #tpu.dimension_semantics<arbitrary>], iteration_bounds = array<i64: 1, 1>, scalar_prefetch = 0 : i64, scratch_operands = 1 : i64, tpu.core_type = #tpu.core_type<tc>, window_params = [{transform_indices = @transform_0, window_bounds = array<i64: 32, 128>}, {transform_indices = @transform_1, window_bounds = array<i64: 128, 128>}, {pipeline_mode = #tpu.pipeline_mode<synchronous>, transform_indices = @transform_2, window_bounds = array<i64: 1, 128>}, {transform_indices = @transform_3, window_bounds = array<i64: 32, 128>}, {pipeline_mode = #tpu.pipeline_mode<synchronous>, transform_indices = @transform_4, window_bounds = array<i64: 1, 128>}, {pipeline_mode = #tpu.pipeline_mode<synchronous>, transform_indices = @transform_5, window_bounds = array<i64: 1, 128>}, {transform_indices = @transform_6, window_bounds = array<i64: 32, 128>}]} {
    %c0_i32 = arith.constant 0 : i32
    %0 = arith.cmpi eq, %arg1, %c0_i32 : i32
    %1 = arith.extui %0 : i1 to i32
    %c0_i32_0 = arith.constant 0 : i32
    %2 = arith.cmpi ne, %1, %c0_i32_0 : i32
    scf.if %2 {
      %cst_10 = arith.constant 0.000000e+00 : f32
      %12 = vector.broadcast %cst_10 : f32 to vector<32x128xf32>
      %c0_11 = arith.constant 0 : index
      %c0_12 = arith.constant 0 : index
      %13 = vector.load %arg9[%c0_11, %c0_12] : memref<32x128xf32, #tpu.memory_space<vmem>>, vector<32x128xf32>
      tpu.vector_store %arg9[%c0_11, %c0_12], %12 {strides = array<i32>} : memref<32x128xf32, #tpu.memory_space<vmem>>, vector<32x128xf32>,
    } else {
    }
    %c0 = arith.constant 0 : index
    %c0_1 = arith.constant 0 : index
    %3 = vector.load %arg9[%c0, %c0_1] : memref<32x128xf32, #tpu.memory_space<vmem>>, vector<32x128xf32>
    %c0_2 = arith.constant 0 : index
    %c0_3 = arith.constant 0 : index
    %4 = vector.load %arg2[%c0_2, %c0_3] : memref<32x128xbf16, #tpu.memory_space<vmem>>, vector<32x128xbf16>
    %c0_4 = arith.constant 0 : index
    %c0_5 = arith.constant 0 : index
    %5 = vector.load %arg3[%c0_4, %c0_5] : memref<128x128xbf16, #tpu.memory_space<vmem>>, vector<128x128xbf16>
    %cst = arith.constant dense<0.000000e+00> : vector<32x128xf32>
    %6 = tpu.matmul %4, %5, %cst {dimension_numbers = #tpu.dot_dimension_numbers<[1], [0], [0], [1], [0, 0, 1, 1], [], []>} : vector<32x128xbf16>, vector<128x128xbf16>, vector<32x128xf32> -> vector<32x128xf32>
    %7 = arith.addf %3, %6 : vector<32x128xf32>
    %c0_6 = arith.constant 0 : index
    %c0_7 = arith.constant 0 : index
    %8 = vector.load %arg9[%c0_6, %c0_7] : memref<32x128xf32, #tpu.memory_space<vmem>>, vector<32x128xf32>
    tpu.vector_store %arg9[%c0_6, %c0_7], %7 {strides = array<i32>} : memref<32x128xf32, #tpu.memory_space<vmem>>, vector<32x128xf32>,
    %c0_i32_8 = arith.constant 0 : i32
    %9 = arith.cmpi eq, %arg1, %c0_i32_8 : i32
    %10 = arith.extui %9 : i1 to i32
    %c0_i32_9 = arith.constant 0 : i32
    %11 = arith.cmpi ne, %10, %c0_i32_9 : i32
    scf.if %11 {
      %c0_10 = arith.constant 0 : index
      %c0_11 = arith.constant 0 : index
      %12 = vector.load %arg9[%c0_10, %c0_11] : memref<32x128xf32, #tpu.memory_space<vmem>>, vector<32x128xf32>
      %c0_12 = arith.constant 0 : index
      %c0_13 = arith.constant 0 : index
      %13 = vector.load %arg4[%c0_12, %c0_13] : memref<1x128xf32, #tpu.memory_space<vmem>>, vector<1x128xf32>
      %14 = vector.broadcast %13 : vector<1x128xf32> to vector<32x128xf32>
      %15 = arith.addf %12, %14 : vector<32x128xf32>
      %c0_14 = arith.constant 0 : index
      %c0_15 = arith.constant 0 : index
      %16 = vector.load %arg5[%c0_14, %c0_15] : memref<32x128xbf16, #tpu.memory_space<vmem>>, vector<32x128xbf16>
      %17 = arith.extf %16 : vector<32x128xbf16> to vector<32x128xf32>
      %18 = arith.addf %15, %17 : vector<32x128xf32>
      %cst_16 = arith.constant dense<0.000000e+00> : vector<32xf32>
      %19 = vector.multi_reduction <add>, %18, %cst_16 [1] : vector<32x128xf32> to vector<32xf32>
      %20 = vector.shape_cast %19 : vector<32xf32> to vector<32x1xf32>
      %cst_17 = arith.constant 1.280000e+02 : f32
      %21 = vector.broadcast %cst_17 : f32 to vector<32x1xf32>
      %22 = arith.divf %20, %21 : vector<32x1xf32>
      %23 = vector.broadcast %22 : vector<32x1xf32> to vector<32x128xf32>
      %24 = arith.subf %18, %23 : vector<32x128xf32>
      %25 = arith.mulf %24, %24 : vector<32x128xf32>
      %cst_18 = arith.constant dense<0.000000e+00> : vector<32xf32>
      %26 = vector.multi_reduction <add>, %25, %cst_18 [1] : vector<32x128xf32> to vector<32xf32>
      %27 = vector.shape_cast %26 : vector<32xf32> to vector<32x1xf32>
      %cst_19 = arith.constant 1.280000e+02 : f32
      %28 = vector.broadcast %cst_19 : f32 to vector<32x1xf32>
      %29 = arith.divf %27, %28 : vector<32x1xf32>
      %30 = vector.broadcast %22 : vector<32x1xf32> to vector<32x128xf32>
      %31 = arith.subf %18, %30 : vector<32x128xf32>
      %cst_20 = arith.constant 9.99999996E-13 : f32
      %32 = vector.broadcast %cst_20 : f32 to vector<32x1xf32>
      %33 = arith.addf %29, %32 : vector<32x1xf32>
      %34 = math.rsqrt %33 : vector<32x1xf32>
      %35 = vector.broadcast %34 : vector<32x1xf32> to vector<32x128xf32>
      %36 = arith.mulf %31, %35 : vector<32x128xf32>
      %c0_21 = arith.constant 0 : index
      %c0_22 = arith.constant 0 : index
      %37 = vector.load %arg6[%c0_21, %c0_22] : memref<1x128xf32, #tpu.memory_space<vmem>>, vector<1x128xf32>
      %38 = vector.broadcast %37 : vector<1x128xf32> to vector<32x128xf32>
      %39 = arith.mulf %36, %38 : vector<32x128xf32>
      %c0_23 = arith.constant 0 : index
      %c0_24 = arith.constant 0 : index
      %40 = vector.load %arg7[%c0_23, %c0_24] : memref<1x128xf32, #tpu.memory_space<vmem>>, vector<1x128xf32>
      %41 = vector.broadcast %40 : vector<1x128xf32> to vector<32x128xf32>
      %42 = arith.addf %39, %41 : vector<32x128xf32>
      %43 = arith.truncf %42 : vector<32x128xf32> to vector<32x128xbf16>
      %c0_25 = arith.constant 0 : index
      %c0_26 = arith.constant 0 : index
      %44 = vector.load %arg8[%c0_25, %c0_26] : memref<32x128xbf16, #tpu.memory_space<vmem>>, vector<32x128xbf16>
      tpu.vector_store %arg8[%c0_25, %c0_26], %43 {strides = array<i32>} : memref<32x128xbf16, #tpu.memory_space<vmem>>, vector<32x128xbf16>,
    } else {
    }
    return
  }
  func.func @transform_0(%arg0: i32, %arg1: i32) -> (i32, i32) {
    %c0_i32 = arith.constant 0 : i32
    return %arg0, %arg1 : i32, i32
  }
  func.func @transform_1(%arg0: i32, %arg1: i32) -> (i32, i32) {
    %c0_i32 = arith.constant 0 : i32
    %c0_i32_0 = arith.constant 0 : i32
    return %arg1, %c0_i32 : i32, i32
  }
  func.func @transform_2(%arg0: i32, %arg1: i32) -> (i32, i32) {
    %c0_i32 = arith.constant 0 : i32
    %c0_i32_0 = arith.constant 0 : i32
    %c0_i32_1 = arith.constant 0 : i32
    return %c0_i32, %c0_i32_0 : i32, i32
  }
  func.func @transform_3(%arg0: i32, %arg1: i32) -> (i32, i32) {
    %c0_i32 = arith.constant 0 : i32
    %c0_i32_0 = arith.constant 0 : i32
    return %arg0, %c0_i32 : i32, i32
  }
  func.func @transform_4(%arg0: i32, %arg1: i32) -> (i32, i32) {
    %c0_i32 = arith.constant 0 : i32
    %c0_i32_0 = arith.constant 0 : i32
    %c0_i32_1 = arith.constant 0 : i32
    return %c0_i32, %c0_i32_0 : i32, i32
  }
  func.func @transform_5(%arg0: i32, %arg1: i32) -> (i32, i32) {
    %c0_i32 = arith.constant 0 : i32
    %c0_i32_0 = arith.constant 0 : i32
    %c0_i32_1 = arith.constant 0 : i32
    return %c0_i32, %c0_i32_0 : i32, i32
  }
  func.func @transform_6(%arg0: i32, %arg1: i32) -> (i32, i32) {
    %c0_i32 = arith.constant 0 : i32
    %c0_i32_0 = arith.constant 0 : i32
    return %arg0, %c0_i32 : i32, i32
  }
}

module attributes {stable_mosaic.version = 11 : i64} {
  func.func @_linear_kernel(%arg0: i32, %arg1: i32, %arg2: i32, %arg3: memref<32x128xbf16, #tpu.memory_space<vmem>>, %arg4: memref<128x256xbf16, #tpu.memory_space<vmem>>, %arg5: memref<1x256xf32, #tpu.memory_space<vmem>>, %arg6: memref<32x256xbf16, #tpu.memory_space<vmem>>, %arg7: memref<32x256xf32, #tpu.memory_space<vmem>>) attributes {dimension_semantics = [#tpu.dimension_semantics<parallel>, #tpu.dimension_semantics<parallel>, #tpu.dimension_semantics<arbitrary>], iteration_bounds = array<i64: 1, 1, 1>, scalar_prefetch = 0 : i64, scratch_operands = 1 : i64, tpu.core_type = #tpu.core_type<tc>, window_params = [{transform_indices = @transform_0, window_bounds = array<i64: 32, 128>}, {transform_indices = @transform_1, window_bounds = array<i64: 128, 256>}, {transform_indices = @transform_2, window_bounds = array<i64: 1, 256>}, {transform_indices = @transform_3, window_bounds = array<i64: 32, 256>}]} {
    %c0_i32 = arith.constant 0 : i32
    %0 = arith.cmpi eq, %arg2, %c0_i32 : i32
    %1 = arith.extui %0 : i1 to i32
    %c0_i32_0 = arith.constant 0 : i32
    %2 = arith.cmpi ne, %1, %c0_i32_0 : i32
    scf.if %2 {
      %cst_10 = arith.constant 0.000000e+00 : f32
      %12 = vector.broadcast %cst_10 : f32 to vector<32x256xf32>
      %c0_11 = arith.constant 0 : index
      %c0_12 = arith.constant 0 : index
      %13 = vector.load %arg7[%c0_11, %c0_12] : memref<32x256xf32, #tpu.memory_space<vmem>>, vector<32x256xf32>
      tpu.vector_store %arg7[%c0_11, %c0_12], %12 {strides = array<i32>} : memref<32x256xf32, #tpu.memory_space<vmem>>, vector<32x256xf32>,
    } else {
    }
    %c0 = arith.constant 0 : index
    %c0_1 = arith.constant 0 : index
    %3 = vector.load %arg7[%c0, %c0_1] : memref<32x256xf32, #tpu.memory_space<vmem>>, vector<32x256xf32>
    %c0_2 = arith.constant 0 : index
    %c0_3 = arith.constant 0 : index
    %4 = vector.load %arg3[%c0_2, %c0_3] : memref<32x128xbf16, #tpu.memory_space<vmem>>, vector<32x128xbf16>
    %c0_4 = arith.constant 0 : index
    %c0_5 = arith.constant 0 : index
    %5 = vector.load %arg4[%c0_4, %c0_5] : memref<128x256xbf16, #tpu.memory_space<vmem>>, vector<128x256xbf16>
    %cst = arith.constant dense<0.000000e+00> : vector<32x256xf32>
    %6 = tpu.matmul %4, %5, %cst {dimension_numbers = #tpu.dot_dimension_numbers<[1], [0], [0], [1], [0, 0, 1, 1], [], []>} : vector<32x128xbf16>, vector<128x256xbf16>, vector<32x256xf32> -> vector<32x256xf32>
    %7 = arith.addf %3, %6 : vector<32x256xf32>
    %c0_6 = arith.constant 0 : index
    %c0_7 = arith.constant 0 : index
    %8 = vector.load %arg7[%c0_6, %c0_7] : memref<32x256xf32, #tpu.memory_space<vmem>>, vector<32x256xf32>
    tpu.vector_store %arg7[%c0_6, %c0_7], %7 {strides = array<i32>} : memref<32x256xf32, #tpu.memory_space<vmem>>, vector<32x256xf32>,
    %c0_i32_8 = arith.constant 0 : i32
    %9 = arith.cmpi eq, %arg2, %c0_i32_8 : i32
    %10 = arith.extui %9 : i1 to i32
    %c0_i32_9 = arith.constant 0 : i32
    %11 = arith.cmpi ne, %10, %c0_i32_9 : i32
    scf.if %11 {
      %c0_10 = arith.constant 0 : index
      %c0_11 = arith.constant 0 : index
      %12 = vector.load %arg7[%c0_10, %c0_11] : memref<32x256xf32, #tpu.memory_space<vmem>>, vector<32x256xf32>
      %c0_12 = arith.constant 0 : index
      %c0_13 = arith.constant 0 : index
      %13 = vector.load %arg5[%c0_12, %c0_13] : memref<1x256xf32, #tpu.memory_space<vmem>>, vector<1x256xf32>
      %14 = vector.broadcast %13 : vector<1x256xf32> to vector<32x256xf32>
      %15 = arith.addf %12, %14 : vector<32x256xf32>
      %cst_14 = arith.constant 5.000000e-01 : f32
      %16 = vector.broadcast %cst_14 : f32 to vector<32x256xf32>
      %17 = arith.mulf %16, %15 : vector<32x256xf32>
      %cst_15 = arith.constant 0.707106769 : f32
      %18 = vector.broadcast %cst_15 : f32 to vector<32x256xf32>
      %19 = arith.mulf %15, %18 : vector<32x256xf32>
      %20 = math.erf %19 : vector<32x256xf32>
      %cst_16 = arith.constant 1.000000e+00 : f32
      %21 = vector.broadcast %cst_16 : f32 to vector<32x256xf32>
      %22 = arith.addf %21, %20 : vector<32x256xf32>
      %23 = arith.mulf %17, %22 : vector<32x256xf32>
      %24 = arith.truncf %23 : vector<32x256xf32> to vector<32x256xbf16>
      %c0_17 = arith.constant 0 : index
      %c0_18 = arith.constant 0 : index
      %25 = vector.load %arg6[%c0_17, %c0_18] : memref<32x256xbf16, #tpu.memory_space<vmem>>, vector<32x256xbf16>
      tpu.vector_store %arg6[%c0_17, %c0_18], %24 {strides = array<i32>} : memref<32x256xbf16, #tpu.memory_space<vmem>>, vector<32x256xbf16>,
    } else {
    }
    return
  }
  func.func @transform_0(%arg0: i32, %arg1: i32, %arg2: i32) -> (i32, i32) {
    %c0_i32 = arith.constant 0 : i32
    return %arg0, %arg2 : i32, i32
  }
  func.func @transform_1(%arg0: i32, %arg1: i32, %arg2: i32) -> (i32, i32) {
    %c0_i32 = arith.constant 0 : i32
    return %arg2, %arg1 : i32, i32
  }
  func.func @transform_2(%arg0: i32, %arg1: i32, %arg2: i32) -> (i32, i32) {
    %c0_i32 = arith.constant 0 : i32
    %c0_i32_0 = arith.constant 0 : i32
    return %c0_i32, %arg1 : i32, i32
  }
  func.func @transform_3(%arg0: i32, %arg1: i32, %arg2: i32) -> (i32, i32) {
    %c0_i32 = arith.constant 0 : i32
    return %arg0, %arg1 : i32, i32
  }
}

module attributes {stable_mosaic.version = 11 : i64} {
  func.func @_fused_matmul_ln_kernel(%arg0: i32, %arg1: i32, %arg2: memref<32x256xbf16, #tpu.memory_space<vmem>>, %arg3: memref<256x128xbf16, #tpu.memory_space<vmem>>, %arg4: memref<1x128xf32, #tpu.memory_space<vmem>>, %arg5: memref<32x128xbf16, #tpu.memory_space<vmem>>, %arg6: memref<1x128xf32, #tpu.memory_space<vmem>>, %arg7: memref<1x128xf32, #tpu.memory_space<vmem>>, %arg8: memref<32x128xbf16, #tpu.memory_space<vmem>>, %arg9: memref<32x128xf32, #tpu.memory_space<vmem>>) attributes {dimension_semantics = [#tpu.dimension_semantics<parallel>, #tpu.dimension_semantics<arbitrary>], iteration_bounds = array<i64: 1, 1>, scalar_prefetch = 0 : i64, scratch_operands = 1 : i64, tpu.core_type = #tpu.core_type<tc>, window_params = [{transform_indices = @transform_0, window_bounds = array<i64: 32, 256>}, {transform_indices = @transform_1, window_bounds = array<i64: 256, 128>}, {pipeline_mode = #tpu.pipeline_mode<synchronous>, transform_indices = @transform_2, window_bounds = array<i64: 1, 128>}, {transform_indices = @transform_3, window_bounds = array<i64: 32, 128>}, {pipeline_mode = #tpu.pipeline_mode<synchronous>, transform_indices = @transform_4, window_bounds = array<i64: 1, 128>}, {pipeline_mode = #tpu.pipeline_mode<synchronous>, transform_indices = @transform_5, window_bounds = array<i64: 1, 128>}, {transform_indices = @transform_6, window_bounds = array<i64: 32, 128>}]} {
    %c0_i32 = arith.constant 0 : i32
    %0 = arith.cmpi eq, %arg1, %c0_i32 : i32
    %1 = arith.extui %0 : i1 to i32
    %c0_i32_0 = arith.constant 0 : i32
    %2 = arith.cmpi ne, %1, %c0_i32_0 : i32
    scf.if %2 {
      %cst_10 = arith.constant 0.000000e+00 : f32
      %12 = vector.broadcast %cst_10 : f32 to vector<32x128xf32>
      %c0_11 = arith.constant 0 : index
      %c0_12 = arith.constant 0 : index
      %13 = vector.load %arg9[%c0_11, %c0_12] : memref<32x128xf32, #tpu.memory_space<vmem>>, vector<32x128xf32>
      tpu.vector_store %arg9[%c0_11, %c0_12], %12 {strides = array<i32>} : memref<32x128xf32, #tpu.memory_space<vmem>>, vector<32x128xf32>,
    } else {
    }
    %c0 = arith.constant 0 : index
    %c0_1 = arith.constant 0 : index
    %3 = vector.load %arg9[%c0, %c0_1] : memref<32x128xf32, #tpu.memory_space<vmem>>, vector<32x128xf32>
    %c0_2 = arith.constant 0 : index
    %c0_3 = arith.constant 0 : index
    %4 = vector.load %arg2[%c0_2, %c0_3] : memref<32x256xbf16, #tpu.memory_space<vmem>>, vector<32x256xbf16>
    %c0_4 = arith.constant 0 : index
    %c0_5 = arith.constant 0 : index
    %5 = vector.load %arg3[%c0_4, %c0_5] : memref<256x128xbf16, #tpu.memory_space<vmem>>, vector<256x128xbf16>
    %cst = arith.constant dense<0.000000e+00> : vector<32x128xf32>
    %6 = tpu.matmul %4, %5, %cst {dimension_numbers = #tpu.dot_dimension_numbers<[1], [0], [0], [1], [0, 0, 1, 1], [], []>} : vector<32x256xbf16>, vector<256x128xbf16>, vector<32x128xf32> -> vector<32x128xf32>
    %7 = arith.addf %3, %6 : vector<32x128xf32>
    %c0_6 = arith.constant 0 : index
    %c0_7 = arith.constant 0 : index
    %8 = vector.load %arg9[%c0_6, %c0_7] : memref<32x128xf32, #tpu.memory_space<vmem>>, vector<32x128xf32>
    tpu.vector_store %arg9[%c0_6, %c0_7], %7 {strides = array<i32>} : memref<32x128xf32, #tpu.memory_space<vmem>>, vector<32x128xf32>,
    %c0_i32_8 = arith.constant 0 : i32
    %9 = arith.cmpi eq, %arg1, %c0_i32_8 : i32
    %10 = arith.extui %9 : i1 to i32
    %c0_i32_9 = arith.constant 0 : i32
    %11 = arith.cmpi ne, %10, %c0_i32_9 : i32
    scf.if %11 {
      %c0_10 = arith.constant 0 : index
      %c0_11 = arith.constant 0 : index
      %12 = vector.load %arg9[%c0_10, %c0_11] : memref<32x128xf32, #tpu.memory_space<vmem>>, vector<32x128xf32>
      %c0_12 = arith.constant 0 : index
      %c0_13 = arith.constant 0 : index
      %13 = vector.load %arg4[%c0_12, %c0_13] : memref<1x128xf32, #tpu.memory_space<vmem>>, vector<1x128xf32>
      %14 = vector.broadcast %13 : vector<1x128xf32> to vector<32x128xf32>
      %15 = arith.addf %12, %14 : vector<32x128xf32>
      %c0_14 = arith.constant 0 : index
      %c0_15 = arith.constant 0 : index
      %16 = vector.load %arg5[%c0_14, %c0_15] : memref<32x128xbf16, #tpu.memory_space<vmem>>, vector<32x128xbf16>
      %17 = arith.extf %16 : vector<32x128xbf16> to vector<32x128xf32>
      %18 = arith.addf %15, %17 : vector<32x128xf32>
      %cst_16 = arith.constant dense<0.000000e+00> : vector<32xf32>
      %19 = vector.multi_reduction <add>, %18, %cst_16 [1] : vector<32x128xf32> to vector<32xf32>
      %20 = vector.shape_cast %19 : vector<32xf32> to vector<32x1xf32>
      %cst_17 = arith.constant 1.280000e+02 : f32
      %21 = vector.broadcast %cst_17 : f32 to vector<32x1xf32>
      %22 = arith.divf %20, %21 : vector<32x1xf32>
      %23 = vector.broadcast %22 : vector<32x1xf32> to vector<32x128xf32>
      %24 = arith.subf %18, %23 : vector<32x128xf32>
      %25 = arith.mulf %24, %24 : vector<32x128xf32>
      %cst_18 = arith.constant dense<0.000000e+00> : vector<32xf32>
      %26 = vector.multi_reduction <add>, %25, %cst_18 [1] : vector<32x128xf32> to vector<32xf32>
      %27 = vector.shape_cast %26 : vector<32xf32> to vector<32x1xf32>
      %cst_19 = arith.constant 1.280000e+02 : f32
      %28 = vector.broadcast %cst_19 : f32 to vector<32x1xf32>
      %29 = arith.divf %27, %28 : vector<32x1xf32>
      %30 = vector.broadcast %22 : vector<32x1xf32> to vector<32x128xf32>
      %31 = arith.subf %18, %30 : vector<32x128xf32>
      %cst_20 = arith.constant 9.99999996E-13 : f32
      %32 = vector.broadcast %cst_20 : f32 to vector<32x1xf32>
      %33 = arith.addf %29, %32 : vector<32x1xf32>
      %34 = math.rsqrt %33 : vector<32x1xf32>
      %35 = vector.broadcast %34 : vector<32x1xf32> to vector<32x128xf32>
      %36 = arith.mulf %31, %35 : vector<32x128xf32>
      %c0_21 = arith.constant 0 : index
      %c0_22 = arith.constant 0 : index
      %37 = vector.load %arg6[%c0_21, %c0_22] : memref<1x128xf32, #tpu.memory_space<vmem>>, vector<1x128xf32>
      %38 = vector.broadcast %37 : vector<1x128xf32> to vector<32x128xf32>
      %39 = arith.mulf %36, %38 : vector<32x128xf32>
      %c0_23 = arith.constant 0 : index
      %c0_24 = arith.constant 0 : index
      %40 = vector.load %arg7[%c0_23, %c0_24] : memref<1x128xf32, #tpu.memory_space<vmem>>, vector<1x128xf32>
      %41 = vector.broadcast %40 : vector<1x128xf32> to vector<32x128xf32>
      %42 = arith.addf %39, %41 : vector<32x128xf32>
      %43 = arith.truncf %42 : vector<32x128xf32> to vector<32x128xbf16>
      %c0_25 = arith.constant 0 : index
      %c0_26 = arith.constant 0 : index
      %44 = vector.load %arg8[%c0_25, %c0_26] : memref<32x128xbf16, #tpu.memory_space<vmem>>, vector<32x128xbf16>
      tpu.vector_store %arg8[%c0_25, %c0_26], %43 {strides = array<i32>} : memref<32x128xbf16, #tpu.memory_space<vmem>>, vector<32x128xbf16>,
    } else {
    }
    return
  }
  func.func @transform_0(%arg0: i32, %arg1: i32) -> (i32, i32) {
    %c0_i32 = arith.constant 0 : i32
    return %arg0, %arg1 : i32, i32
  }
  func.func @transform_1(%arg0: i32, %arg1: i32) -> (i32, i32) {
    %c0_i32 = arith.constant 0 : i32
    %c0_i32_0 = arith.constant 0 : i32
    return %arg1, %c0_i32 : i32, i32
  }
  func.func @transform_2(%arg0: i32, %arg1: i32) -> (i32, i32) {
    %c0_i32 = arith.constant 0 : i32
    %c0_i32_0 = arith.constant 0 : i32
    %c0_i32_1 = arith.constant 0 : i32
    return %c0_i32, %c0_i32_0 : i32, i32
  }
  func.func @transform_3(%arg0: i32, %arg1: i32) -> (i32, i32) {
    %c0_i32 = arith.constant 0 : i32
    %c0_i32_0 = arith.constant 0 : i32
    return %arg0, %c0_i32 : i32, i32
  }
  func.func @transform_4(%arg0: i32, %arg1: i32) -> (i32, i32) {
    %c0_i32 = arith.constant 0 : i32
    %c0_i32_0 = arith.constant 0 : i32
    %c0_i32_1 = arith.constant 0 : i32
    return %c0_i32, %c0_i32_0 : i32, i32
  }
  func.func @transform_5(%arg0: i32, %arg1: i32) -> (i32, i32) {
    %c0_i32 = arith.constant 0 : i32
    %c0_i32_0 = arith.constant 0 : i32
    %c0_i32_1 = arith.constant 0 : i32
    return %c0_i32, %c0_i32_0 : i32, i32
  }
  func.func @transform_6(%arg0: i32, %arg1: i32) -> (i32, i32) {
    %c0_i32 = arith.constant 0 : i32
    %c0_i32_0 = arith.constant 0 : i32
    return %arg0, %c0_i32 : i32, i32
  }
}

module attributes {stable_mosaic.version = 11 : i64} {
  func.func @_fused_matmul_ln_kernel(%arg0: i32, %arg1: i32, %arg2: memref<32x128xbf16, #tpu.memory_space<vmem>>, %arg3: memref<128x128xbf16, #tpu.memory_space<vmem>>, %arg4: memref<1x128xf32, #tpu.memory_space<vmem>>, %arg5: memref<1x128xf32, #tpu.memory_space<vmem>>, %arg6: memref<1x128xf32, #tpu.memory_space<vmem>>, %arg7: memref<32x128xbf16, #tpu.memory_space<vmem>>, %arg8: memref<32x128xf32, #tpu.memory_space<vmem>>) attributes {dimension_semantics = [#tpu.dimension_semantics<parallel>, #tpu.dimension_semantics<arbitrary>], iteration_bounds = array<i64: 1, 1>, scalar_prefetch = 0 : i64, scratch_operands = 1 : i64, tpu.core_type = #tpu.core_type<tc>, window_params = [{transform_indices = @transform_0, window_bounds = array<i64: 32, 128>}, {transform_indices = @transform_1, window_bounds = array<i64: 128, 128>}, {pipeline_mode = #tpu.pipeline_mode<synchronous>, transform_indices = @transform_2, window_bounds = array<i64: 1, 128>}, {pipeline_mode = #tpu.pipeline_mode<synchronous>, transform_indices = @transform_3, window_bounds = array<i64: 1, 128>}, {pipeline_mode = #tpu.pipeline_mode<synchronous>, transform_indices = @transform_4, window_bounds = array<i64: 1, 128>}, {transform_indices = @transform_5, window_bounds = array<i64: 32, 128>}]} {
    %c0_i32 = arith.constant 0 : i32
    %0 = arith.cmpi eq, %arg1, %c0_i32 : i32
    %1 = arith.extui %0 : i1 to i32
    %c0_i32_0 = arith.constant 0 : i32
    %2 = arith.cmpi ne, %1, %c0_i32_0 : i32
    scf.if %2 {
      %cst_10 = arith.constant 0.000000e+00 : f32
      %12 = vector.broadcast %cst_10 : f32 to vector<32x128xf32>
      %c0_11 = arith.constant 0 : index
      %c0_12 = arith.constant 0 : index
      %13 = vector.load %arg8[%c0_11, %c0_12] : memref<32x128xf32, #tpu.memory_space<vmem>>, vector<32x128xf32>
      tpu.vector_store %arg8[%c0_11, %c0_12], %12 {strides = array<i32>} : memref<32x128xf32, #tpu.memory_space<vmem>>, vector<32x128xf32>,
    } else {
    }
    %c0 = arith.constant 0 : index
    %c0_1 = arith.constant 0 : index
    %3 = vector.load %arg8[%c0, %c0_1] : memref<32x128xf32, #tpu.memory_space<vmem>>, vector<32x128xf32>
    %c0_2 = arith.constant 0 : index
    %c0_3 = arith.constant 0 : index
    %4 = vector.load %arg2[%c0_2, %c0_3] : memref<32x128xbf16, #tpu.memory_space<vmem>>, vector<32x128xbf16>
    %c0_4 = arith.constant 0 : index
    %c0_5 = arith.constant 0 : index
    %5 = vector.load %arg3[%c0_4, %c0_5] : memref<128x128xbf16, #tpu.memory_space<vmem>>, vector<128x128xbf16>
    %cst = arith.constant dense<0.000000e+00> : vector<32x128xf32>
    %6 = tpu.matmul %4, %5, %cst {dimension_numbers = #tpu.dot_dimension_numbers<[1], [0], [0], [1], [0, 0, 1, 1], [], []>} : vector<32x128xbf16>, vector<128x128xbf16>, vector<32x128xf32> -> vector<32x128xf32>
    %7 = arith.addf %3, %6 : vector<32x128xf32>
    %c0_6 = arith.constant 0 : index
    %c0_7 = arith.constant 0 : index
    %8 = vector.load %arg8[%c0_6, %c0_7] : memref<32x128xf32, #tpu.memory_space<vmem>>, vector<32x128xf32>
    tpu.vector_store %arg8[%c0_6, %c0_7], %7 {strides = array<i32>} : memref<32x128xf32, #tpu.memory_space<vmem>>, vector<32x128xf32>,
    %c0_i32_8 = arith.constant 0 : i32
    %9 = arith.cmpi eq, %arg1, %c0_i32_8 : i32
    %10 = arith.extui %9 : i1 to i32
    %c0_i32_9 = arith.constant 0 : i32
    %11 = arith.cmpi ne, %10, %c0_i32_9 : i32
    scf.if %11 {
      %c0_10 = arith.constant 0 : index
      %c0_11 = arith.constant 0 : index
      %12 = vector.load %arg8[%c0_10, %c0_11] : memref<32x128xf32, #tpu.memory_space<vmem>>, vector<32x128xf32>
      %c0_12 = arith.constant 0 : index
      %c0_13 = arith.constant 0 : index
      %13 = vector.load %arg4[%c0_12, %c0_13] : memref<1x128xf32, #tpu.memory_space<vmem>>, vector<1x128xf32>
      %14 = vector.broadcast %13 : vector<1x128xf32> to vector<32x128xf32>
      %15 = arith.addf %12, %14 : vector<32x128xf32>
      %cst_14 = arith.constant 5.000000e-01 : f32
      %16 = vector.broadcast %cst_14 : f32 to vector<32x128xf32>
      %17 = arith.mulf %16, %15 : vector<32x128xf32>
      %cst_15 = arith.constant 0.707106769 : f32
      %18 = vector.broadcast %cst_15 : f32 to vector<32x128xf32>
      %19 = arith.mulf %15, %18 : vector<32x128xf32>
      %20 = math.erf %19 : vector<32x128xf32>
      %cst_16 = arith.constant 1.000000e+00 : f32
      %21 = vector.broadcast %cst_16 : f32 to vector<32x128xf32>
      %22 = arith.addf %21, %20 : vector<32x128xf32>
      %23 = arith.mulf %17, %22 : vector<32x128xf32>
      %cst_17 = arith.constant dense<0.000000e+00> : vector<32xf32>
      %24 = vector.multi_reduction <add>, %23, %cst_17 [1] : vector<32x128xf32> to vector<32xf32>
      %25 = vector.shape_cast %24 : vector<32xf32> to vector<32x1xf32>
      %cst_18 = arith.constant 1.280000e+02 : f32
      %26 = vector.broadcast %cst_18 : f32 to vector<32x1xf32>
      %27 = arith.divf %25, %26 : vector<32x1xf32>
      %28 = vector.broadcast %27 : vector<32x1xf32> to vector<32x128xf32>
      %29 = arith.subf %23, %28 : vector<32x128xf32>
      %30 = arith.mulf %29, %29 : vector<32x128xf32>
      %cst_19 = arith.constant dense<0.000000e+00> : vector<32xf32>
      %31 = vector.multi_reduction <add>, %30, %cst_19 [1] : vector<32x128xf32> to vector<32xf32>
      %32 = vector.shape_cast %31 : vector<32xf32> to vector<32x1xf32>
      %cst_20 = arith.constant 1.280000e+02 : f32
      %33 = vector.broadcast %cst_20 : f32 to vector<32x1xf32>
      %34 = arith.divf %32, %33 : vector<32x1xf32>
      %35 = vector.broadcast %27 : vector<32x1xf32> to vector<32x128xf32>
      %36 = arith.subf %23, %35 : vector<32x128xf32>
      %cst_21 = arith.constant 9.99999996E-13 : f32
      %37 = vector.broadcast %cst_21 : f32 to vector<32x1xf32>
      %38 = arith.addf %34, %37 : vector<32x1xf32>
      %39 = math.rsqrt %38 : vector<32x1xf32>
      %40 = vector.broadcast %39 : vector<32x1xf32> to vector<32x128xf32>
      %41 = arith.mulf %36, %40 : vector<32x128xf32>
      %c0_22 = arith.constant 0 : index
      %c0_23 = arith.constant 0 : index
      %42 = vector.load %arg5[%c0_22, %c0_23] : memref<1x128xf32, #tpu.memory_space<vmem>>, vector<1x128xf32>
      %43 = vector.broadcast %42 : vector<1x128xf32> to vector<32x128xf32>
      %44 = arith.mulf %41, %43 : vector<32x128xf32>
      %c0_24 = arith.constant 0 : index
      %c0_25 = arith.constant 0 : index
      %45 = vector.load %arg6[%c0_24, %c0_25] : memref<1x128xf32, #tpu.memory_space<vmem>>, vector<1x128xf32>
      %46 = vector.broadcast %45 : vector<1x128xf32> to vector<32x128xf32>
      %47 = arith.addf %44, %46 : vector<32x128xf32>
      %48 = arith.truncf %47 : vector<32x128xf32> to vector<32x128xbf16>
      %c0_26 = arith.constant 0 : index
      %c0_27 = arith.constant 0 : index
      %49 = vector.load %arg7[%c0_26, %c0_27] : memref<32x128xbf16, #tpu.memory_space<vmem>>, vector<32x128xbf16>
      tpu.vector_store %arg7[%c0_26, %c0_27], %48 {strides = array<i32>} : memref<32x128xbf16, #tpu.memory_space<vmem>>, vector<32x128xbf16>,
    } else {
    }
    return
  }
  func.func @transform_0(%arg0: i32, %arg1: i32) -> (i32, i32) {
    %c0_i32 = arith.constant 0 : i32
    return %arg0, %arg1 : i32, i32
  }
  func.func @transform_1(%arg0: i32, %arg1: i32) -> (i32, i32) {
    %c0_i32 = arith.constant 0 : i32
    %c0_i32_0 = arith.constant 0 : i32
    return %arg1, %c0_i32 : i32, i32
  }
  func.func @transform_2(%arg0: i32, %arg1: i32) -> (i32, i32) {
    %c0_i32 = arith.constant 0 : i32
    %c0_i32_0 = arith.constant 0 : i32
    %c0_i32_1 = arith.constant 0 : i32
    return %c0_i32, %c0_i32_0 : i32, i32
  }
  func.func @transform_3(%arg0: i32, %arg1: i32) -> (i32, i32) {
    %c0_i32 = arith.constant 0 : i32
    %c0_i32_0 = arith.constant 0 : i32
    %c0_i32_1 = arith.constant 0 : i32
    return %c0_i32, %c0_i32_0 : i32, i32
  }
  func.func @transform_4(%arg0: i32, %arg1: i32) -> (i32, i32) {
    %c0_i32 = arith.constant 0 : i32
    %c0_i32_0 = arith.constant 0 : i32
    %c0_i32_1 = arith.constant 0 : i32
    return %c0_i32, %c0_i32_0 : i32, i32
  }
  func.func @transform_5(%arg0: i32, %arg1: i32) -> (i32, i32) {
    %c0_i32 = arith.constant 0 : i32
    %c0_i32_0 = arith.constant 0 : i32
    return %arg0, %c0_i32 : i32, i32
  }
}

module attributes {stable_mosaic.version = 11 : i64} {
  func.func @_linear_kernel(%arg0: i32, %arg1: i32, %arg2: i32, %arg3: memref<32x128xbf16, #tpu.memory_space<vmem>>, %arg4: memref<128x512xbf16, #tpu.memory_space<vmem>>, %arg5: memref<1x512xf32, #tpu.memory_space<vmem>>, %arg6: memref<32x512xf32, #tpu.memory_space<vmem>>, %arg7: memref<32x512xf32, #tpu.memory_space<vmem>>) attributes {dimension_semantics = [#tpu.dimension_semantics<parallel>, #tpu.dimension_semantics<parallel>, #tpu.dimension_semantics<arbitrary>], iteration_bounds = array<i64: 1, 1, 1>, scalar_prefetch = 0 : i64, scratch_operands = 1 : i64, tpu.core_type = #tpu.core_type<tc>, window_params = [{transform_indices = @transform_0, window_bounds = array<i64: 32, 128>}, {transform_indices = @transform_1, window_bounds = array<i64: 128, 512>}, {transform_indices = @transform_2, window_bounds = array<i64: 1, 512>}, {transform_indices = @transform_3, window_bounds = array<i64: 32, 512>}]} {
    %c0_i32 = arith.constant 0 : i32
    %0 = arith.cmpi eq, %arg2, %c0_i32 : i32
    %1 = arith.extui %0 : i1 to i32
    %c0_i32_0 = arith.constant 0 : i32
    %2 = arith.cmpi ne, %1, %c0_i32_0 : i32
    scf.if %2 {
      %cst_10 = arith.constant 0.000000e+00 : f32
      %12 = vector.broadcast %cst_10 : f32 to vector<32x512xf32>
      %c0_11 = arith.constant 0 : index
      %c0_12 = arith.constant 0 : index
      %13 = vector.load %arg7[%c0_11, %c0_12] : memref<32x512xf32, #tpu.memory_space<vmem>>, vector<32x512xf32>
      tpu.vector_store %arg7[%c0_11, %c0_12], %12 {strides = array<i32>} : memref<32x512xf32, #tpu.memory_space<vmem>>, vector<32x512xf32>,
    } else {
    }
    %c0 = arith.constant 0 : index
    %c0_1 = arith.constant 0 : index
    %3 = vector.load %arg7[%c0, %c0_1] : memref<32x512xf32, #tpu.memory_space<vmem>>, vector<32x512xf32>
    %c0_2 = arith.constant 0 : index
    %c0_3 = arith.constant 0 : index
    %4 = vector.load %arg3[%c0_2, %c0_3] : memref<32x128xbf16, #tpu.memory_space<vmem>>, vector<32x128xbf16>
    %c0_4 = arith.constant 0 : index
    %c0_5 = arith.constant 0 : index
    %5 = vector.load %arg4[%c0_4, %c0_5] : memref<128x512xbf16, #tpu.memory_space<vmem>>, vector<128x512xbf16>
    %cst = arith.constant dense<0.000000e+00> : vector<32x512xf32>
    %6 = tpu.matmul %4, %5, %cst {dimension_numbers = #tpu.dot_dimension_numbers<[1], [0], [0], [1], [0, 0, 1, 1], [], []>} : vector<32x128xbf16>, vector<128x512xbf16>, vector<32x512xf32> -> vector<32x512xf32>
    %7 = arith.addf %3, %6 : vector<32x512xf32>
    %c0_6 = arith.constant 0 : index
    %c0_7 = arith.constant 0 : index
    %8 = vector.load %arg7[%c0_6, %c0_7] : memref<32x512xf32, #tpu.memory_space<vmem>>, vector<32x512xf32>
    tpu.vector_store %arg7[%c0_6, %c0_7], %7 {strides = array<i32>} : memref<32x512xf32, #tpu.memory_space<vmem>>, vector<32x512xf32>,
    %c0_i32_8 = arith.constant 0 : i32
    %9 = arith.cmpi eq, %arg2, %c0_i32_8 : i32
    %10 = arith.extui %9 : i1 to i32
    %c0_i32_9 = arith.constant 0 : i32
    %11 = arith.cmpi ne, %10, %c0_i32_9 : i32
    scf.if %11 {
      %c0_10 = arith.constant 0 : index
      %c0_11 = arith.constant 0 : index
      %12 = vector.load %arg7[%c0_10, %c0_11] : memref<32x512xf32, #tpu.memory_space<vmem>>, vector<32x512xf32>
      %c0_12 = arith.constant 0 : index
      %c0_13 = arith.constant 0 : index
      %13 = vector.load %arg5[%c0_12, %c0_13] : memref<1x512xf32, #tpu.memory_space<vmem>>, vector<1x512xf32>
      %14 = vector.broadcast %13 : vector<1x512xf32> to vector<32x512xf32>
      %15 = arith.addf %12, %14 : vector<32x512xf32>
      %c0_14 = arith.constant 0 : index
      %c0_15 = arith.constant 0 : index
      %16 = vector.load %arg6[%c0_14, %c0_15] : memref<32x512xf32, #tpu.memory_space<vmem>>, vector<32x512xf32>
      tpu.vector_store %arg6[%c0_14, %c0_15], %15 {strides = array<i32>} : memref<32x512xf32, #tpu.memory_space<vmem>>, vector<32x512xf32>,
    } else {
    }
    return
  }
  func.func @transform_0(%arg0: i32, %arg1: i32, %arg2: i32) -> (i32, i32) {
    %c0_i32 = arith.constant 0 : i32
    return %arg0, %arg2 : i32, i32
  }
  func.func @transform_1(%arg0: i32, %arg1: i32, %arg2: i32) -> (i32, i32) {
    %c0_i32 = arith.constant 0 : i32
    return %arg2, %arg1 : i32, i32
  }
  func.func @transform_2(%arg0: i32, %arg1: i32, %arg2: i32) -> (i32, i32) {
    %c0_i32 = arith.constant 0 : i32
    %c0_i32_0 = arith.constant 0 : i32
    return %c0_i32, %arg1 : i32, i32
  }
  func.func @transform_3(%arg0: i32, %arg1: i32, %arg2: i32) -> (i32, i32) {
    %c0_i32 = arith.constant 0 : i32
    return %arg0, %arg1 : i32, i32
  }
}

</mosaic_0001>

<llo_original>
// kernel: bert_base_forward.13
$region0: #{bert_base_forward.13}
  #allocation0 [shape = 'u32[]', space=smem, size = 0x4, offset = 0x4, fixed_abs, tag = 'smem constant byte address 0x4 - core index']
  #allocation1 [shape = 'u32[144,128]{1,0:T(1,128)}', space=vmem, size = 0x12000, scoped, tag = 'internal scratch']
  %s0 = inlined_call_operand.vmem [shape: f32[32,128], index: 0, kind: input, shape index: {}]
  %s1 = inlined_call_operand.vmem [shape: f32[1,128], index: 1, kind: input, shape index: {}]
  %s2 = inlined_call_operand.vmem [shape: f32[1,128], index: 2, kind: input, shape index: {}]
  %s3 = inlined_call_operand.vmem [shape: bf16[32,128], index: 3, kind: output, shape index: {}]
  %s4 = sld [smem:[#allocation0]]
  $region22: #{bert_base_forward.13} parent=0
    _
  %s6 = ssub.s32 1, %s4
  %s7 = scalar_select 0, %s6, %s4
  // Predicated region
  $region2: #{bert_base_forward.13} parent=0 // pred_check
    _
  $region3: #{bert_base_forward.13} parent=0 // pred_check_branch
    %9 = sbr.rel (0) target = $region5
  $region4: #{bert_base_forward.13} parent=0 // pred_region
    _
  $region5: #{bert_base_forward.13} parent=0 // pred_fallthru
    _
  // Predicated region
  $region6: #{bert_base_forward.13} parent=0 // pred_check
    _
  $region7: #{bert_base_forward.13} parent=0 // pred_check_branch
    %11 = sbr.rel (0) target = $region9
  $region8: #{bert_base_forward.13} parent=0 // pred_region
    _
  $region9: #{bert_base_forward.13} parent=0 // pred_fallthru
    _
  // Predicated region
  $region10: #{bert_base_forward.13} parent=0 // pred_check
    _
  $region11: #{bert_base_forward.13} parent=0 // pred_check_branch
    %13 = sbr.rel (0) target = $region13
  $region12: #{bert_base_forward.13} parent=0 // pred_region
    _
  $region13: #{bert_base_forward.13} parent=0 // pred_fallthru
    _
  %v14 = vld [vmem:[%s0] sm:$0xff]
  %v15 = vld [vmem:[%s0 + $0x8] sm:$0xff]
  %v16 = vld [vmem:[%s0 + $0x10] sm:$0xff]
  %v17 = vld [vmem:[%s0 + $0x18] sm:$0xff]
  %18 = vadd.xlane.f32.xlu0 %v14
  %v19 = vpop.xlane.xlu0 %18
  %20 = vadd.xlane.f32.xlu0 %v15
  %v21 = vpop.xlane.xlu0 %20
  %22 = vadd.xlane.f32.xlu0 %v16
  %v23 = vpop.xlane.xlu0 %22
  %24 = vadd.xlane.f32.xlu0 %v17
  %v25 = vpop.xlane.xlu0 %24
  %v26 = vrcp.pop 128.0
  %v27 = vmul.f32 %v19, %v26
  %v28 = vmul.f32 %v21, %v26
  %v29 = vmul.f32 %v23, %v26
  %v30 = vmul.f32 %v25, %v26
  %v31 = vsub.f32 %v14, %v27
  %v32 = vsub.f32 %v15, %v28
  %v33 = vsub.f32 %v16, %v29
  %v34 = vsub.f32 %v17, %v30
  %v35 = vmul.f32 %v31, %v31
  %v36 = vmul.f32 %v32, %v32
  %v37 = vmul.f32 %v33, %v33
  %v38 = vmul.f32 %v34, %v34
  %39 = vadd.xlane.f32.xlu0 %v35
  %v40 = vpop.xlane.xlu0 %39
  %41 = vadd.xlane.f32.xlu0 %v36
  %v42 = vpop.xlane.xlu0 %41
  %43 = vadd.xlane.f32.xlu0 %v37
  %v44 = vpop.xlane.xlu0 %43
  %45 = vadd.xlane.f32.xlu0 %v38
  %v46 = vpop.xlane.xlu0 %45
  %v47 = vmul.f32 %v40, %v26
  %v48 = vmul.f32 %v42, %v26
  %v49 = vmul.f32 %v44, %v26
  %v50 = vmul.f32 %v46, %v26
  %v51 = vadd.f32 %v47, 1e-12
  %v52 = vadd.f32 %v48, 1e-12
  %v53 = vadd.f32 %v49, 1e-12
  %v54 = vadd.f32 %v50, 1e-12
  %v55 = vrsqrt.pop %v51
  %v56 = vrsqrt.pop %v52
  %v57 = vrsqrt.pop %v53
  %v58 = vrsqrt.pop %v54
  %v59 = vmul.f32 %v31, %v55
  %v60 = vmul.f32 %v32, %v56
  %v61 = vmul.f32 %v33, %v57
  %v62 = vmul.f32 %v34, %v58
  %v63 = vld [vmem:[%s1] sm:$0x1]
  %v65 = vlaneseq
  %v66 = vshrl.u32 %v65, 7
  %v67 = vsub.s32 0, %v66
  %v68 = vrot.slane %v63, %v67
  %v70 = vmul.f32 %v59, %v68
  %v71 = vmul.f32 %v60, %v68
  %v72 = vmul.f32 %v61, %v68
  %v73 = vmul.f32 %v62, %v68
  %v74 = vld [vmem:[%s2] sm:$0x1]
  %v76 = vlaneseq
  %v77 = vshrl.u32 %v76, 7
  %v78 = vsub.s32 0, %v77
  %v79 = vrot.slane %v74, %v78
  %v81 = vadd.f32 %v70, %v79
  %v82 = vadd.f32 %v71, %v79
  %v83 = vadd.f32 %v72, %v79
  %v84 = vadd.f32 %v73, %v79
  %v85 = vpack.c.bf16 %v82, %v81
  %v86 = vpack.c.bf16 %v84, %v83
  %v89 = vunpack.c.l.b16 %v85
  %v90 = vunpack.c.h.b16 %v85
  %v91 = vunpack.c.l.b16 %v86
  %v92 = vunpack.c.h.b16 %v86
  %v93 = vpack.c.b16 %v89, %v89
  %v94 = vpack.c.b16 %v90, %v90
  %v95 = vpack.c.b16 %v91, %v91
  %v96 = vpack.c.b16 %v92, %v92
  %101 = vst [vmem:[%s3] sm:$0xf] %v93
  %102 = vst [vmem:[%s3 + $0x4] sm:$0xf] %v94
  %103 = vst [vmem:[%s3 + $0x8] sm:$0xf] %v95
  %104 = vst [vmem:[%s3 + $0xc] sm:$0xf] %v96
  // Predicated region
  $region14: #{bert_base_forward.13} parent=0 // pred_check
    _
  $region15: #{bert_base_forward.13} parent=0 // pred_check_branch
    %106 = sbr.rel (0) target = $region17
  $region16: #{bert_base_forward.13} parent=0 // pred_region
    _
  $region17: #{bert_base_forward.13} parent=0 // pred_fallthru
    _
  // Predicated region
  $region18: #{bert_base_forward.13} parent=0 // pred_check
    _
  $region19: #{bert_base_forward.13} parent=0 // pred_check_branch
    %108 = sbr.rel (0) target = $region21
  $region20: #{bert_base_forward.13} parent=0 // pred_region
    _
  $region21: #{bert_base_forward.13} parent=0 // pred_fallthru
    _

// kernel: bert_base_forward.14
$region0: #{bert_base_forward.14}
  #allocation0 [shape = 'u32[]', space=smem, size = 0x4, offset = 0x4, fixed_abs, tag = 'smem constant byte address 0x4 - core index']
  #allocation1 [shape = 'u32[144,128]{1,0:T(1,128)}', space=vmem, size = 0x12000, scoped, tag = 'internal scratch']
  #allocation2 [shape = 'f32[32,128]{1,0:T(8,128)}', space=vmem, size = 0x4000, scoped, tag = 'scratch operand']
  %s0 = inlined_call_operand.vmem [shape: bf16[32,128], index: 0, kind: input, shape index: {}]
  %s1 = inlined_call_operand.vmem [shape: bf16[128,384], index: 1, kind: input, shape index: {}]
  %s2 = inlined_call_operand.vmem [shape: f32[1,384], index: 2, kind: input, shape index: {}]
  %s3 = inlined_call_operand.vmem [shape: bf16[32,384], index: 3, kind: output, shape index: {}]
  %s4 = sld [smem:[#allocation0]]
  $region131: #{bert_base_forward.14} parent=0
    _
  %s6 = ssub.s32 1, %s4
  %s7 = scalar_select 0, %s6, %s4
  $region1: #{bert_base_forward.14} parent=0
    #allocation3 [shape = 'u8[65536]{0}', space=vmem, size = 0x10000, scoped, tag = 'input window, operand 1']
    #allocation4 [shape = 'u8[16384]{0}', space=vmem, size = 0x4000, scoped, tag = 'output window, operand 0']
    loop: start=0, step=1, limit=5
    $region2: #{bert_base_forward.14} parent=1 // loop_pre_header
      _
    $region3: #{bert_base_forward.14} parent=1 // loop_header
      %s9 = sphi 0, %s13
      %p10 = scmp.ge.s32.totalorder %s9, 5
      %s16 = sphi 0, %s35
      %s17 = sphi 0, %s31
      %s18 = sphi 0, %s27
      %s19 = sphi 0, %s16
      %s20 = sphi 0, %s17
      %s21 = sphi 0, %s18
      %s22 = sphi 0, %s19
      %s23 = sphi 0, %s20
      %s24 = sphi 0, %s21
      %s40 = sphi 0, %s42
      %s43 = sphi 0, %s40
      %s44 = sphi 0, %s43
      %s60 = sphi 0, %s44
      %s68 = sphi 0, %s70
      %s71 = sphi 0, %s68
      %s72 = sphi 0, %s71
      %s88 = sphi 0, %s72
      %s94 = sphi 0, %s96
      %s97 = sphi 0, %s94
      %s98 = sphi 0, %s97
      %s114 = sphi 0, %s98
      %s122 = sphi 0, %s124
      %s125 = sphi 0, %s122
      %s126 = sphi 0, %s125
      %s142 = sphi 0, %s126
    $region4: #{bert_base_forward.14} parent=1 // loop_header_branch
      %12 = sbr.rel (%p10) target = $region8
    $region5: #{bert_base_forward.14} parent=1 // loop_body
      %s14 = ssub.s32 %s9, 1
      %s15 = ssub.s32 %s9, 2
      %s25 = sadd.s32 1, %s18
      %p26 = scmp.ge.s32.totalorder %s25, 1
      %s27 = scalar_select %p26, 0, %s25
      %s28 = sadd.s32 1, %s17
      %s29 = scalar_select %p26, %s28, %s17
      %p30 = scmp.ge.s32.totalorder %s29, 3
      %s31 = scalar_select %p30, 0, %s29
      %s32 = sadd.s32 1, %s16
      %s33 = scalar_select %p30, %s32, %s16
      %p34 = scmp.ge.s32.totalorder %s33, 1
      %s35 = scalar_select %p34, 0, %s33
      %s36 = ssub.s32 %s16, %s35
      %s37 = ssub.s32 %s18, %s27
      %s38 = sor.u32 %s36, %s37
      %p39 = scmp.eq.s32.totalorder %s38, 0
      %s41 = sadd.s32 %s40, 1
      %s42 = scalar_select %p39, %s40, %s41
      %p45 = pneg %p39
      %p46 = scmp.eq.s32.totalorder %s9, 2
      %p47 = por %p45, %p46
      %p48 = scmp.ne.s32.totalorder %s40, %s43
      %p49 = scmp.eq.s32.totalorder %s9, 0
      %p50 = por %p48, %p49
      %p51 = scmp.ne.s32.totalorder %s40, %s43
      %p52 = scmp.eq.s32.totalorder %s14, 2
      %p53 = por %p51, %p52
      %p54 = scmp.ne.s32.totalorder %s43, %s44
      %p55 = scmp.eq.s32.totalorder %s14, 0
      %p56 = por %p54, %p55
      %p57 = scmp.ne.s32.totalorder %s43, %s44
      %p58 = scmp.eq.s32.totalorder %s15, 2
      %p59 = por %p57, %p58
      %p61 = scmp.ne.s32.totalorder %s44, %s60
      %p62 = scmp.eq.s32.totalorder %s15, 0
      %p63 = por %p61, %p62
      %s64 = ssub.s32 %s18, %s27
      %s65 = ssub.s32 %s17, %s31
      %s66 = sor.u32 %s64, %s65
      %p67 = scmp.eq.s32.totalorder %s66, 0
      %s69 = sadd.s32 %s68, 1
      %s70 = scalar_select %p67, %s68, %s69
      %p73 = pneg %p67
      %p74 = scmp.eq.s32.totalorder %s9, 2
      %p75 = por %p73, %p74
      %p76 = scmp.ne.s32.totalorder %s68, %s71
      %p77 = scmp.eq.s32.totalorder %s9, 0
      %p78 = por %p76, %p77
      %p79 = scmp.ne.s32.totalorder %s68, %s71
      %p80 = scmp.eq.s32.totalorder %s14, 2
      %p81 = por %p79, %p80
      %p82 = scmp.ne.s32.totalorder %s71, %s72
      %p83 = scmp.eq.s32.totalorder %s14, 0
      %p84 = por %p82, %p83
      %p85 = scmp.ne.s32.totalorder %s71, %s72
      %p86 = scmp.eq.s32.totalorder %s15, 2
      %p87 = por %p85, %p86
      %p89 = scmp.ne.s32.totalorder %s72, %s88
      %p90 = scmp.eq.s32.totalorder %s15, 0
      %p91 = por %p89, %p90
      %s92 = ssub.s32 %s17, %s31
      %p93 = scmp.eq.s32.totalorder %s92, 0
      %s95 = sadd.s32 %s94, 1
      %s96 = scalar_select %p93, %s94, %s95
      %p99 = pneg %p93
      %p100 = scmp.eq.s32.totalorder %s9, 2
      %p101 = por %p99, %p100
      %p102 = scmp.ne.s32.totalorder %s94, %s97
      %p103 = scmp.eq.s32.totalorder %s9, 0
      %p104 = por %p102, %p103
      %p105 = scmp.ne.s32.totalorder %s94, %s97
      %p106 = scmp.eq.s32.totalorder %s14, 2
      %p107 = por %p105, %p106
      %p108 = scmp.ne.s32.totalorder %s97, %s98
      %p109 = scmp.eq.s32.totalorder %s14, 0
      %p110 = por %p108, %p109
      %p111 = scmp.ne.s32.totalorder %s97, %s98
      %p112 = scmp.eq.s32.totalorder %s15, 2
      %p113 = por %p111, %p112
      %p115 = scmp.ne.s32.totalorder %s98, %s114
      %p116 = scmp.eq.s32.totalorder %s15, 0
      %p117 = por %p115, %p116
      %s118 = ssub.s32 %s16, %s35
      %s119 = ssub.s32 %s17, %s31
      %s120 = sor.u32 %s118, %s119
      %p121 = scmp.eq.s32.totalorder %s120, 0
      %s123 = sadd.s32 %s122, 1
      %s124 = scalar_select %p121, %s122, %s123
      %p127 = pneg %p121
      %p128 = scmp.eq.s32.totalorder %s9, 2
      %p129 = por %p127, %p128
      %p130 = scmp.ne.s32.totalorder %s122, %s125
      %p131 = scmp.eq.s32.totalorder %s9, 0
      %p132 = por %p130, %p131
      %p133 = scmp.ne.s32.totalorder %s122, %s125
      %p134 = scmp.eq.s32.totalorder %s14, 2
      %p135 = por %p133, %p134
      %p136 = scmp.ne.s32.totalorder %s125, %s126
      %p137 = scmp.eq.s32.totalorder %s14, 0
      %p138 = por %p136, %p137
      %p139 = scmp.ne.s32.totalorder %s125, %s126
      %p140 = scmp.eq.s32.totalorder %s15, 2
      %p141 = por %p139, %p140
      %p143 = scmp.ne.s32.totalorder %s126, %s142
      %p144 = scmp.eq.s32.totalorder %s15, 0
      %p145 = por %p143, %p144
      %p146 = scmp.le.s32.totalorder 1, %s9
      %p147 = scmp.lt.s32.totalorder %s9, 4
      %p148 = pnand %p146, %p147
      %p149 = pneg %p148
      // Predicated region
      $region9: #{bert_base_forward.14} parent=5 // pred_check
        _
      $region10: #{bert_base_forward.14} parent=5 // pred_check_branch
        %151 = sbr.rel (%p148) target = $region12
      $region11: #{bert_base_forward.14} parent=5 // pred_region
        %s152 = ssub.s32 %s9, 1
        // Predicated region
        $region13: #{bert_base_forward.14} parent=11 // pred_check
          %p153 = pneg %p56
        $region14: #{bert_base_forward.14} parent=11 // pred_check_branch
          %155 = sbr.rel (%p153) target = $region16
        $region15: #{bert_base_forward.14} parent=11 // pred_region
          %s156 = smul.u32 4, %s19
          %p157 = scmp.lt.s32.totalorder %s156, 3
          %s158 = scalar_select %p157, %s156, 3
          %p159 = scmp.lt.s32.totalorder %s21, 0
          %s160 = scalar_select %p159, %s21, 0
          %s161 = sadd.s32 %s160, %s158
          %s162 = smul.addr %s161, 4
          %s163 = scalar_lea.vmem %s0, %s162
          %s164 = smul.u32 4, %s19
        $region16: #{bert_base_forward.14} parent=11 // pred_fallthru
          _
      $region12: #{bert_base_forward.14} parent=5 // pred_fallthru
        _
      %p165 = scmp.lt.s32.totalorder %s9, 3
      // Predicated region
      $region17: #{bert_base_forward.14} parent=5 // pred_check
        %p166 = pneg %p165
      $region18: #{bert_base_forward.14} parent=5 // pred_check_branch
        %168 = sbr.rel (%p166) target = $region20
      $region19: #{bert_base_forward.14} parent=5 // pred_region
        // Predicated region
        $region21: #{bert_base_forward.14} parent=19 // pred_check
          %p169 = pneg %p78
        $region22: #{bert_base_forward.14} parent=19 // pred_check_branch
          %171 = sbr.rel (%p169) target = $region24
        $region23: #{bert_base_forward.14} parent=19 // pred_region
          %s172 = sand.u32 %s68, 1
          %s173 = sand.u32 %s68, 1
          %s174 = smul.addr %s173, 64
          %s175 = scalar_lea.vmem [#allocation3], %s174
          %s176 = smul.u32 16, %s18
          %s177 = smul.addr %s176, 3
          %s178 = sadd.s32 %s17, %s177
          %s179 = smul.addr %s178, 4
          %s180 = scalar_lea.vmem %s1, %s179
          // Predicated region
          $region25: #{bert_base_forward.14} parent=23 // pred_check
            _
          $region26: #{bert_base_forward.14} parent=23 // pred_check_branch
            %182 = sbr.rel (0) target = $region28
          $region27: #{bert_base_forward.14} parent=23 // pred_region
            // Predicated region
            $region29: #{bert_base_forward.14} parent=27 // pred_check
              _
            $region30: #{bert_base_forward.14} parent=27 // pred_check_branch
              %184 = sbr.rel target = $region32
            $region31: #{bert_base_forward.14} parent=27 // pred_region
              // Predicated region
              $region44: #{bert_base_forward.14} parent=31 // pred_check
                _
              $region45: #{bert_base_forward.14} parent=31 // pred_check_branch
                %229 = sbr.rel (0) target = $region47
              $region46: #{bert_base_forward.14} parent=31 // pred_region
                loop: start=0, step=1, limit=1
                $region48: #{bert_base_forward.14} parent=46 // loop_pre_header
                  _
                $region49: #{bert_base_forward.14} parent=46 // loop_header
                  %s231 = sphi 0, %s235
                  %p232 = scmp.ge.s32.totalorder %s231, 1
                  %s236 = sphi %s180, %s180
                  %s237 = sphi %s175, %s175
                $region50: #{bert_base_forward.14} parent=46 // loop_header_branch
                  %234 = sbr.rel (%p232) target = $region54
                $region51: #{bert_base_forward.14} parent=46 // loop_body
                  _
                $region52: #{bert_base_forward.14} parent=46 // loop_footer
                  %s235 = sadd.s32 1, %s231
                $region53: #{bert_base_forward.14} parent=46 // loop_footer_branch
                  %230 = sbr.rel target = $region49
                $region54: #{bert_base_forward.14} parent=46 // loop_exit
                  _
                loop: start=0, step=1, limit=1
                $region55: #{bert_base_forward.14} parent=46 // loop_pre_header
                  _
                $region56: #{bert_base_forward.14} parent=46 // loop_header
                  %s240 = sphi 0, %s244
                  %p241 = scmp.ge.s32.totalorder %s240, 1
                  %s245 = sphi %s180, %s180
                  %s246 = sphi %s175, %s175
                $region57: #{bert_base_forward.14} parent=46 // loop_header_branch
                  %243 = sbr.rel (%p241) target = $region61
                $region58: #{bert_base_forward.14} parent=46 // loop_body
                  %v247 = vld [vmem:[%s245] sm:$0xf]
                  %248 = vst [vmem:[%s246] sm:$0xf] %v247
                  %v249 = vld [vmem:[%s245 + $0xc] sm:$0xf]
                  %250 = vst [vmem:[%s246 + $0x4] sm:$0xf] %v249
                  %v251 = vld [vmem:[%s245 + $0x18] sm:$0xf]
                  %252 = vst [vmem:[%s246 + $0x8] sm:$0xf] %v251
                  %v253 = vld [vmem:[%s245 + $0x24] sm:$0xf]
                  %254 = vst [vmem:[%s246 + $0xc] sm:$0xf] %v253
                  %v255 = vld [vmem:[%s245 + $0x30] sm:$0xf]
                  %256 = vst [vmem:[%s246 + $0x10] sm:$0xf] %v255
                  %v257 = vld [vmem:[%s245 + $0x3c] sm:$0xf]
                  %258 = vst [vmem:[%s246 + $0x14] sm:$0xf] %v257
                  %v259 = vld [vmem:[%s245 + $0x48] sm:$0xf]
                  %260 = vst [vmem:[%s246 + $0x18] sm:$0xf] %v259
                  %v261 = vld [vmem:[%s245 + $0x54] sm:$0xf]
                  %262 = vst [vmem:[%s246 + $0x1c] sm:$0xf] %v261
                  %v263 = vld [vmem:[%s245 + $0x60] sm:$0xf]
                  %264 = vst [vmem:[%s246 + $0x20] sm:$0xf] %v263
                  %v265 = vld [vmem:[%s245 + $0x6c] sm:$0xf]
                  %266 = vst [vmem:[%s246 + $0x24] sm:$0xf] %v265
                  %v267 = vld [vmem:[%s245 + $0x78] sm:$0xf]
                  %268 = vst [vmem:[%s246 + $0x28] sm:$0xf] %v267
                  %v269 = vld [vmem:[%s245 + $0x84] sm:$0xf]
                  %270 = vst [vmem:[%s246 + $0x2c] sm:$0xf] %v269
                  %v271 = vld [vmem:[%s245 + $0x90] sm:$0xf]
                  %272 = vst [vmem:[%s246 + $0x30] sm:$0xf] %v271
                  %v273 = vld [vmem:[%s245 + $0x9c] sm:$0xf]
                  %274 = vst [vmem:[%s246 + $0x34] sm:$0xf] %v273
                  %v275 = vld [vmem:[%s245 + $0xa8] sm:$0xf]
                  %276 = vst [vmem:[%s246 + $0x38] sm:$0xf] %v275
                  %v277 = vld [vmem:[%s245 + $0xb4] sm:$0xf]
                  %278 = vst [vmem:[%s246 + $0x3c] sm:$0xf] %v277
                $region59: #{bert_base_forward.14} parent=46 // loop_footer
                  %s244 = sadd.s32 1, %s240
                $region60: #{bert_base_forward.14} parent=46 // loop_footer_branch
                  %239 = sbr.rel target = $region56
                $region61: #{bert_base_forward.14} parent=46 // loop_exit
                  _
              $region47: #{bert_base_forward.14} parent=31 // pred_fallthru
                _
            $region32: #{bert_base_forward.14} parent=27 // pred_fallthru
              _
            // Predicated region
            $region33: #{bert_base_forward.14} parent=27 // pred_check
              _
            $region34: #{bert_base_forward.14} parent=27 // pred_check_branch
              %186 = sbr.rel (0) target = $region36
            $region35: #{bert_base_forward.14} parent=27 // pred_region
              loop: start=0, step=1, limit=1
              $region37: #{bert_base_forward.14} parent=35 // loop_pre_header
                _
              $region38: #{bert_base_forward.14} parent=35 // loop_header
                %s189 = sphi 0, %s193
                %p190 = scmp.ge.s32.totalorder %s189, 1
                %s194 = sphi %s180, %s180
                %s195 = sphi %s175, %s175
              $region39: #{bert_base_forward.14} parent=35 // loop_header_branch
                %192 = sbr.rel (%p190) target = $region43
              $region40: #{bert_base_forward.14} parent=35 // loop_body
                %v196 = vld [vmem:[%s194] sm:$0xf]
                %197 = vst [vmem:[%s195] sm:$0xf] %v196
                %v198 = vld [vmem:[%s194 + $0xc] sm:$0xf]
                %199 = vst [vmem:[%s195 + $0x4] sm:$0xf] %v198
                %v200 = vld [vmem:[%s194 + $0x18] sm:$0xf]
                %201 = vst [vmem:[%s195 + $0x8] sm:$0xf] %v200
                %v202 = vld [vmem:[%s194 + $0x24] sm:$0xf]
                %203 = vst [vmem:[%s195 + $0xc] sm:$0xf] %v202
                %v204 = vld [vmem:[%s194 + $0x30] sm:$0xf]
                %205 = vst [vmem:[%s195 + $0x10] sm:$0xf] %v204
                %v206 = vld [vmem:[%s194 + $0x3c] sm:$0xf]
                %207 = vst [vmem:[%s195 + $0x14] sm:$0xf] %v206
                %v208 = vld [vmem:[%s194 + $0x48] sm:$0xf]
                %209 = vst [vmem:[%s195 + $0x18] sm:$0xf] %v208
                %v210 = vld [vmem:[%s194 + $0x54] sm:$0xf]
                %211 = vst [vmem:[%s195 + $0x1c] sm:$0xf] %v210
                %v212 = vld [vmem:[%s194 + $0x60] sm:$0xf]
                %213 = vst [vmem:[%s195 + $0x20] sm:$0xf] %v212
                %v214 = vld [vmem:[%s194 + $0x6c] sm:$0xf]
                %215 = vst [vmem:[%s195 + $0x24] sm:$0xf] %v214
                %v216 = vld [vmem:[%s194 + $0x78] sm:$0xf]
                %217 = vst [vmem:[%s195 + $0x28] sm:$0xf] %v216
                %v218 = vld [vmem:[%s194 + $0x84] sm:$0xf]
                %219 = vst [vmem:[%s195 + $0x2c] sm:$0xf] %v218
                %v220 = vld [vmem:[%s194 + $0x90] sm:$0xf]
                %221 = vst [vmem:[%s195 + $0x30] sm:$0xf] %v220
                %v222 = vld [vmem:[%s194 + $0x9c] sm:$0xf]
                %223 = vst [vmem:[%s195 + $0x34] sm:$0xf] %v222
                %v224 = vld [vmem:[%s194 + $0xa8] sm:$0xf]
                %225 = vst [vmem:[%s195 + $0x38] sm:$0xf] %v224
                %v226 = vld [vmem:[%s194 + $0xb4] sm:$0xf]
                %227 = vst [vmem:[%s195 + $0x3c] sm:$0xf] %v226
              $region41: #{bert_base_forward.14} parent=35 // loop_footer
                %s193 = sadd.s32 1, %s189
              $region42: #{bert_base_forward.14} parent=35 // loop_footer_branch
                %188 = sbr.rel target = $region38
              $region43: #{bert_base_forward.14} parent=35 // loop_exit
                _
            $region36: #{bert_base_forward.14} parent=27 // pred_fallthru
              _
          $region28: #{bert_base_forward.14} parent=23 // pred_fallthru
            _
          %279 = vnop
        $region24: #{bert_base_forward.14} parent=19 // pred_fallthru
          _
        // Predicated region
        $region62: #{bert_base_forward.14} parent=19 // pred_check
          %p280 = pneg %p104
        $region63: #{bert_base_forward.14} parent=19 // pred_check_branch
          %282 = sbr.rel (%p280) target = $region65
        $region64: #{bert_base_forward.14} parent=19 // pred_region
          %p283 = scmp.lt.s32.totalorder %s17, 2
          %s284 = scalar_select %p283, %s17, 2
          %s285 = scalar_lea.vmem %s2, %s284
        $region65: #{bert_base_forward.14} parent=19 // pred_fallthru
          _
      $region20: #{bert_base_forward.14} parent=5 // pred_fallthru
        _
      %p286 = scmp.le.s32.totalorder 1, %s9
      %p287 = scmp.lt.s32.totalorder %s9, 4
      %p288 = pnand %p286, %p287
      %p289 = pneg %p288
      // Predicated region
      $region66: #{bert_base_forward.14} parent=5 // pred_check
        _
      $region67: #{bert_base_forward.14} parent=5 // pred_check_branch
        %291 = sbr.rel (%p288) target = $region69
      $region68: #{bert_base_forward.14} parent=5 // pred_region
        %s292 = ssub.s32 %s9, 1
        %s293 = sand.u32 %s71, 1
        %s294 = sand.u32 %s71, 1
        %s295 = smul.addr %s294, 64
        %s296 = scalar_lea.vmem [#allocation3], %s295
        // Predicated region
        $region70: #{bert_base_forward.14} parent=68 // pred_check
          %p297 = pneg %p84
        $region71: #{bert_base_forward.14} parent=68 // pred_check_branch
          %299 = sbr.rel (%p297) target = $region73
        $region72: #{bert_base_forward.14} parent=68 // pred_region
          _
        $region73: #{bert_base_forward.14} parent=68 // pred_fallthru
          _
        %s300 = smul.u32 4, %s19
        %p301 = scmp.lt.s32.totalorder %s300, 3
        %s302 = scalar_select %p301, %s300, 3
        %p303 = scmp.lt.s32.totalorder %s21, 0
        %s304 = scalar_select %p303, %s21, 0
        %s305 = sadd.s32 %s304, %s302
        %s306 = smul.addr %s305, 4
        %s307 = scalar_lea.vmem %s0, %s306
        %p308 = pneg %p56
        %p309 = pneg %p53
        %s310 = sand.u32 %s71, 1
        %s311 = sand.u32 %s71, 1
        %s312 = smul.addr %s311, 64
        %s313 = scalar_lea.vmem [#allocation3], %s312
        %p314 = pneg %p84
        %p315 = pneg %p81
        %p316 = scmp.lt.s32.totalorder %s20, 2
        %s317 = scalar_select %p316, %s20, 2
        %s318 = scalar_lea.vmem %s2, %s317
        %p319 = pneg %p110
        %p320 = pneg %p107
        %p321 = pneg %p138
        %p322 = pneg %p135
        %s323 = sand.u32 %s125, 1
        %s324 = sand.u32 %s125, 1
        %s325 = smul.addr %s324, 16
        %s326 = scalar_lea.vmem [#allocation4], %s325
        %s327 = smul.u32 4, %s19
        %p328 = scmp.lt.s32.totalorder %s327, 3
        %s329 = scalar_select %p328, %s327, 3
        %p330 = scmp.lt.s32.totalorder %s21, 0
        %s331 = scalar_select %p330, %s21, 0
        %s332 = sadd.s32 %s331, %s329
        %s333 = smul.addr %s332, 4
        %s334 = scalar_lea.vmem %s0, %s333
        %s335 = smul.u32 4, %s19
        %s336 = smul.u32 16, %s21
        %p337 = scmp.lt.s32.totalorder %s20, 2
        %s338 = scalar_select %p337, %s20, 2
        %s339 = scalar_lea.vmem %s2, %s338
        %s340 = smul.u32 4, %s19
        %p342 = scmp.eq.s32.totalorder %s21, 0
        // Predicated region
        $region74: #{bert_base_forward.14} parent=68 // pred_check
          %p343 = pneg %p342
        $region75: #{bert_base_forward.14} parent=68 // pred_check_branch
          %345 = sbr.rel (%p343) target = $region77
        $region76: #{bert_base_forward.14} parent=68 // pred_region
          %346 = vst [vmem:[#allocation2] sm:$0xff] 0.0
          %347 = vst [vmem:[#allocation2 + $0x8] sm:$0xff] 0.0
          %348 = vst [vmem:[#allocation2 + $0x10] sm:$0xff] 0.0
          %349 = vst [vmem:[#allocation2 + $0x18] sm:$0xff] 0.0
        $region77: #{bert_base_forward.14} parent=68 // pred_fallthru
          _
        %v350 = vld [vmem:[#allocation2] sm:$0xff]
        %v351 = vld [vmem:[#allocation2 + $0x8] sm:$0xff]
        %v352 = vld [vmem:[#allocation2 + $0x10] sm:$0xff]
        %v353 = vld [vmem:[#allocation2 + $0x18] sm:$0xff]
        %v354 = vld [vmem:[%s334] sm:$0xf]
        %v355 = vld [vmem:[%s334 + $0x4] sm:$0xf]
        %v356 = vld [vmem:[%s334 + $0x8] sm:$0xf]
        %v357 = vld [vmem:[%s334 + $0xc] sm:$0xf]
        %v358 = vld [vmem:[%s296] sm:$0xf]
        %v359 = vld [vmem:[%s296 + $0x4] sm:$0xf]
        %v360 = vld [vmem:[%s296 + $0x8] sm:$0xf]
        %v361 = vld [vmem:[%s296 + $0xc] sm:$0xf]
        %v362 = vld [vmem:[%s296 + $0x10] sm:$0xf]
        %v363 = vld [vmem:[%s296 + $0x14] sm:$0xf]
        %v364 = vld [vmem:[%s296 + $0x18] sm:$0xf]
        %v365 = vld [vmem:[%s296 + $0x1c] sm:$0xf]
        %v366 = vld [vmem:[%s296 + $0x20] sm:$0xf]
        %v367 = vld [vmem:[%s296 + $0x24] sm:$0xf]
        %v368 = vld [vmem:[%s296 + $0x28] sm:$0xf]
        %v369 = vld [vmem:[%s296 + $0x2c] sm:$0xf]
        %v370 = vld [vmem:[%s296 + $0x30] sm:$0xf]
        %v371 = vld [vmem:[%s296 + $0x34] sm:$0xf]
        %v372 = vld [vmem:[%s296 + $0x38] sm:$0xf]
        %v373 = vld [vmem:[%s296 + $0x3c] sm:$0xf]
        %v378 = vunpack.c.l.b16 %v354
        %v379 = vunpack.c.l.b16 %v355
        %v380 = vunpack.c.l.b16 %v356
        %v381 = vunpack.c.l.b16 %v357
        %v382 = vpack.c.b16 %v379, %v378
        %v383 = vpack.c.b16 %v381, %v380
        %v402 = vunpack.c.l.b16 %v358
        %v403 = vunpack.c.l.b16 %v359
        %v404 = vunpack.c.l.b16 %v360
        %v405 = vunpack.c.l.b16 %v361
        %v406 = vunpack.c.l.b16 %v362
        %v407 = vunpack.c.l.b16 %v363
        %v408 = vunpack.c.l.b16 %v364
        %v409 = vunpack.c.l.b16 %v365
        %v410 = vunpack.c.l.b16 %v366
        %v411 = vunpack.c.l.b16 %v367
        %v412 = vunpack.c.l.b16 %v368
        %v413 = vunpack.c.l.b16 %v369
        %v414 = vunpack.c.l.b16 %v370
        %v415 = vunpack.c.l.b16 %v371
        %v416 = vunpack.c.l.b16 %v372
        %v417 = vunpack.c.l.b16 %v373
        %v418 = vpack.c.b16 %v403, %v402
        %v419 = vpack.c.b16 %v405, %v404
        %v420 = vpack.c.b16 %v407, %v406
        %v421 = vpack.c.b16 %v409, %v408
        %v422 = vpack.c.b16 %v411, %v410
        %v423 = vpack.c.b16 %v413, %v412
        %v424 = vpack.c.b16 %v415, %v414
        %v425 = vpack.c.b16 %v417, %v416
        %434 = vmatprep.subr.bf16.mxu0 0
        %435 = vmatpush1.bf16.msra.mxu0 %v418
        %436 = vmatprep.subr.bf16.mxu0 0
        %437 = vmatpush1.bf16.msra.mxu0 %v419
        %438 = vmatprep.subr.bf16.mxu0 0
        %439 = vmatpush1.bf16.msra.mxu0 %v420
        %440 = vmatprep.subr.bf16.mxu0 0
        %441 = vmatpush1.bf16.msra.mxu0 %v421
        %442 = vmatprep.subr.bf16.mxu0 0
        %443 = vmatpush1.bf16.msra.mxu0 %v422
        %444 = vmatprep.subr.bf16.mxu0 0
        %445 = vmatpush1.bf16.msra.mxu0 %v423
        %446 = vmatprep.subr.bf16.mxu0 0
        %447 = vmatpush1.bf16.msra.mxu0 %v424
        %448 = vmatprep.subr.bf16.mxu0 0
        %449 = vmatpush1.bf16.msra.mxu0 %v425
        %450 = vmatprep.subr.bf16.mxu0 0
        %451 = vmatpush1.bf16.msra.mxu0 0
        %452 = vmatprep.subr.bf16.mxu0 0
        %453 = vmatpush1.bf16.msra.mxu0 0
        %454 = vmatprep.subr.bf16.mxu0 0
        %455 = vmatpush1.bf16.msra.mxu0 0
        %456 = vmatprep.subr.bf16.mxu0 0
        %457 = vmatpush1.bf16.msra.mxu0 0
        %458 = vmatprep.subr.bf16.mxu0 0
        %459 = vmatpush1.bf16.msra.mxu0 0
        %460 = vmatprep.subr.bf16.mxu0 0
        %461 = vmatpush1.bf16.msra.mxu0 0
        %462 = vmatprep.subr.bf16.mxu0 0
        %463 = vmatpush1.bf16.msra.mxu0 0
        %464 = vmatprep.subr.bf16.mxu0 0
        %465 = vmatpush1.bf16.msra.mxu0 0
        %466 = vmatprep.mubr.bf16.mxu0 0
        %467 = vmatmul.mubr.bf16.gmra.mrb[0].mxu0 %v382
        %v468 = vpop.f32.mrb[0].mxu0
        %v469 = vadd.f32 0.0, %v468
        %v470 = vpop.f32.mrb[0].mxu0
        %v471 = vpop.f32.mrb[0].mxu0
        %v472 = vadd.f32 0.0, %v471
        %v473 = vpop.f32.mrb[0].mxu0
        %474 = vmatprep.mubr.bf16.mxu0 0
        %475 = vmatmul.mubr.bf16.gmra.mrb[0].mxu0 %v383
        %v476 = vpop.f32.mrb[0].mxu0
        %v477 = vadd.f32 0.0, %v476
        %v478 = vpop.f32.mrb[0].mxu0
        %v479 = vpop.f32.mrb[0].mxu0
        %v480 = vadd.f32 0.0, %v479
        %v481 = vpop.f32.mrb[0].mxu0
        %482 = vdwg.mxu0
        %v483 = vadd.f32 %v350, %v469
        %v484 = vadd.f32 %v351, %v472
        %v485 = vadd.f32 %v352, %v477
        %v486 = vadd.f32 %v353, %v480
        %487 = vst [vmem:[#allocation2] sm:$0xff] %v483
        %488 = vst [vmem:[#allocation2 + $0x8] sm:$0xff] %v484
        %489 = vst [vmem:[#allocation2 + $0x10] sm:$0xff] %v485
        %490 = vst [vmem:[#allocation2 + $0x18] sm:$0xff] %v486
        // Predicated region
        $region78: #{bert_base_forward.14} parent=68 // pred_check
          %p491 = pneg %p342
        $region79: #{bert_base_forward.14} parent=68 // pred_check_branch
          %493 = sbr.rel (%p491) target = $region81
        $region80: #{bert_base_forward.14} parent=68 // pred_region
          %v494 = vld [vmem:[#allocation2] sm:$0xff]
          %v495 = vld [vmem:[#allocation2 + $0x8] sm:$0xff]
          %v496 = vld [vmem:[#allocation2 + $0x10] sm:$0xff]
          %v497 = vld [vmem:[#allocation2 + $0x18] sm:$0xff]
          %v498 = vld [vmem:[%s339] sm:$0x1]
          %v500 = vlaneseq
          %v501 = vshrl.u32 %v500, 7
          %v502 = vsub.s32 0, %v501
          %v503 = vrot.slane %v498, %v502
          %v505 = vadd.f32 %v494, %v503
          %v506 = vadd.f32 %v495, %v503
          %v507 = vadd.f32 %v496, %v503
          %v508 = vadd.f32 %v497, %v503
          %v509 = vpack.c.bf16 %v506, %v505
          %v510 = vpack.c.bf16 %v508, %v507
          %v513 = vunpack.c.l.b16 %v509
          %v514 = vunpack.c.h.b16 %v509
          %v515 = vunpack.c.l.b16 %v510
          %v516 = vunpack.c.h.b16 %v510
          %v517 = vpack.c.b16 %v513, %v513
          %v518 = vpack.c.b16 %v514, %v514
          %v519 = vpack.c.b16 %v515, %v515
          %v520 = vpack.c.b16 %v516, %v516
          %525 = vst [vmem:[%s326] sm:$0xf] %v517
          %526 = vst [vmem:[%s326 + $0x4] sm:$0xf] %v518
          %527 = vst [vmem:[%s326 + $0x8] sm:$0xf] %v519
          %528 = vst [vmem:[%s326 + $0xc] sm:$0xf] %v520
        $region81: #{bert_base_forward.14} parent=68 // pred_fallthru
          _
        %s529 = sand.u32 %s125, 1
        %s530 = sand.u32 %s125, 1
        %s531 = smul.addr %s530, 16
        %s532 = scalar_lea.vmem [#allocation4], %s531
        // Predicated region
        $region82: #{bert_base_forward.14} parent=68 // pred_check
          %p533 = pneg %p135
        $region83: #{bert_base_forward.14} parent=68 // pred_check_branch
          %535 = sbr.rel (%p533) target = $region85
        $region84: #{bert_base_forward.14} parent=68 // pred_region
          %s536 = smul.u32 4, %s19
          %s537 = smul.addr %s536, 3
          %s538 = sadd.s32 %s20, %s537
          %s539 = smul.addr %s538, 4
          %s540 = scalar_lea.vmem %s3, %s539
          // Predicated region
          $region86: #{bert_base_forward.14} parent=84 // pred_check
            _
          $region87: #{bert_base_forward.14} parent=84 // pred_check_branch
            %542 = sbr.rel (0) target = $region89
          $region88: #{bert_base_forward.14} parent=84 // pred_region
            // Predicated region
            $region90: #{bert_base_forward.14} parent=88 // pred_check
              _
            $region91: #{bert_base_forward.14} parent=88 // pred_check_branch
              %544 = sbr.rel target = $region93
            $region92: #{bert_base_forward.14} parent=88 // pred_region
              // Predicated region
              $region105: #{bert_base_forward.14} parent=92 // pred_check
                _
              $region106: #{bert_base_forward.14} parent=92 // pred_check_branch
                %565 = sbr.rel (0) target = $region108
              $region107: #{bert_base_forward.14} parent=92 // pred_region
                loop: start=0, step=1, limit=1
                $region109: #{bert_base_forward.14} parent=107 // loop_pre_header
                  _
                $region110: #{bert_base_forward.14} parent=107 // loop_header
                  %s567 = sphi 0, %s571
                  %p568 = scmp.ge.s32.totalorder %s567, 1
                  %s572 = sphi %s532, %s532
                  %s573 = sphi %s540, %s540
                $region111: #{bert_base_forward.14} parent=107 // loop_header_branch
                  %570 = sbr.rel (%p568) target = $region115
                $region112: #{bert_base_forward.14} parent=107 // loop_body
                  _
                $region113: #{bert_base_forward.14} parent=107 // loop_footer
                  %s571 = sadd.s32 1, %s567
                $region114: #{bert_base_forward.14} parent=107 // loop_footer_branch
                  %566 = sbr.rel target = $region110
                $region115: #{bert_base_forward.14} parent=107 // loop_exit
                  _
                loop: start=0, step=1, limit=1
                $region116: #{bert_base_forward.14} parent=107 // loop_pre_header
                  _
                $region117: #{bert_base_forward.14} parent=107 // loop_header
                  %s576 = sphi 0, %s580
                  %p577 = scmp.ge.s32.totalorder %s576, 1
                  %s581 = sphi %s532, %s532
                  %s582 = sphi %s540, %s540
                $region118: #{bert_base_forward.14} parent=107 // loop_header_branch
                  %579 = sbr.rel (%p577) target = $region122
                $region119: #{bert_base_forward.14} parent=107 // loop_body
                  %v583 = vld [vmem:[%s581] sm:$0xf]
                  %584 = vst [vmem:[%s582] sm:$0xf] %v583
                  %v585 = vld [vmem:[%s581 + $0x4] sm:$0xf]
                  %586 = vst [vmem:[%s582 + $0xc] sm:$0xf] %v585
                  %v587 = vld [vmem:[%s581 + $0x8] sm:$0xf]
                  %588 = vst [vmem:[%s582 + $0x18] sm:$0xf] %v587
                  %v589 = vld [vmem:[%s581 + $0xc] sm:$0xf]
                  %590 = vst [vmem:[%s582 + $0x24] sm:$0xf] %v589
                $region120: #{bert_base_forward.14} parent=107 // loop_footer
                  %s580 = sadd.s32 1, %s576
                $region121: #{bert_base_forward.14} parent=107 // loop_footer_branch
                  %575 = sbr.rel target = $region117
                $region122: #{bert_base_forward.14} parent=107 // loop_exit
                  _
              $region108: #{bert_base_forward.14} parent=92 // pred_fallthru
                _
            $region93: #{bert_base_forward.14} parent=88 // pred_fallthru
              _
            // Predicated region
            $region94: #{bert_base_forward.14} parent=88 // pred_check
              _
            $region95: #{bert_base_forward.14} parent=88 // pred_check_branch
              %546 = sbr.rel (0) target = $region97
            $region96: #{bert_base_forward.14} parent=88 // pred_region
              loop: start=0, step=1, limit=1
              $region98: #{bert_base_forward.14} parent=96 // loop_pre_header
                _
              $region99: #{bert_base_forward.14} parent=96 // loop_header
                %s549 = sphi 0, %s553
                %p550 = scmp.ge.s32.totalorder %s549, 1
                %s554 = sphi %s532, %s532
                %s555 = sphi %s540, %s540
              $region100: #{bert_base_forward.14} parent=96 // loop_header_branch
                %552 = sbr.rel (%p550) target = $region104
              $region101: #{bert_base_forward.14} parent=96 // loop_body
                %v556 = vld [vmem:[%s554] sm:$0xf]
                %557 = vst [vmem:[%s555] sm:$0xf] %v556
                %v558 = vld [vmem:[%s554 + $0x4] sm:$0xf]
                %559 = vst [vmem:[%s555 + $0xc] sm:$0xf] %v558
                %v560 = vld [vmem:[%s554 + $0x8] sm:$0xf]
                %561 = vst [vmem:[%s555 + $0x18] sm:$0xf] %v560
                %v562 = vld [vmem:[%s554 + $0xc] sm:$0xf]
                %563 = vst [vmem:[%s555 + $0x24] sm:$0xf] %v562
              $region102: #{bert_base_forward.14} parent=96 // loop_footer
                %s553 = sadd.s32 1, %s549
              $region103: #{bert_base_forward.14} parent=96 // loop_footer_branch
                %548 = sbr.rel target = $region99
              $region104: #{bert_base_forward.14} parent=96 // loop_exit
                _
            $region97: #{bert_base_forward.14} parent=88 // pred_fallthru
              _
          $region89: #{bert_base_forward.14} parent=84 // pred_fallthru
            _
          %591 = vnop
        $region85: #{bert_base_forward.14} parent=68 // pred_fallthru
          _
      $region69: #{bert_base_forward.14} parent=5 // pred_fallthru
        _
      %p592 = scmp.le.s32.totalorder 2, %s9
      // Predicated region
      $region123: #{bert_base_forward.14} parent=5 // pred_check
        %p593 = pneg %p592
      $region124: #{bert_base_forward.14} parent=5 // pred_check_branch
        %595 = sbr.rel (%p593) target = $region126
      $region125: #{bert_base_forward.14} parent=5 // pred_region
        %s596 = ssub.s32 %s9, 2
        // Predicated region
        $region127: #{bert_base_forward.14} parent=125 // pred_check
          %p597 = pneg %p141
        $region128: #{bert_base_forward.14} parent=125 // pred_check_branch
          %599 = sbr.rel (%p597) target = $region130
        $region129: #{bert_base_forward.14} parent=125 // pred_region
          %s600 = sand.u32 %s126, 1
          %s601 = sand.u32 %s126, 1
          %s602 = smul.addr %s601, 16
          %s603 = scalar_lea.vmem [#allocation4], %s602
        $region130: #{bert_base_forward.14} parent=125 // pred_fallthru
          _
      $region126: #{bert_base_forward.14} parent=5 // pred_fallthru
        _
    $region6: #{bert_base_forward.14} parent=1 // loop_footer
      %s13 = sadd.s32 1, %s9
    $region7: #{bert_base_forward.14} parent=1 // loop_footer_branch
      %8 = sbr.rel target = $region3
    $region8: #{bert_base_forward.14} parent=1 // loop_exit
      _

// kernel: bert_base_forward.16
$region0: #{bert_base_forward.16}
  #allocation0 [shape = 'u32[]', space=smem, size = 0x4, offset = 0x4, fixed_abs, tag = 'smem constant byte address 0x4 - core index']
  #allocation1 [shape = 'u32[144,128]{1,0:T(1,128)}', space=vmem, size = 0x12000, scoped, tag = 'internal scratch']
  #allocation2 [shape = 'f32[32,128]{1,0:T(8,128)}', space=vmem, size = 0x4000, scoped, tag = 'scratch operand']
  %s0 = inlined_call_operand.vmem [shape: bf16[32,128], index: 0, kind: input, shape index: {}]
  %s1 = inlined_call_operand.vmem [shape: bf16[128,128], index: 1, kind: input, shape index: {}]
  %s2 = inlined_call_operand.vmem [shape: f32[1,128], index: 2, kind: input, shape index: {}]
  %s3 = inlined_call_operand.vmem [shape: bf16[32,128], index: 3, kind: input, shape index: {}]
  %s4 = inlined_call_operand.vmem [shape: f32[1,128], index: 4, kind: input, shape index: {}]
  %s5 = inlined_call_operand.vmem [shape: f32[1,128], index: 5, kind: input, shape index: {}]
  %s6 = inlined_call_operand.vmem [shape: bf16[32,128], index: 6, kind: output, shape index: {}]
  %s7 = sld [smem:[#allocation0]]
  $region42: #{bert_base_forward.16} parent=0
    _
  %s9 = ssub.s32 1, %s7
  %s10 = scalar_select 0, %s9, %s7
  // Predicated region
  $region2: #{bert_base_forward.16} parent=0 // pred_check
    _
  $region3: #{bert_base_forward.16} parent=0 // pred_check_branch
    %12 = sbr.rel (0) target = $region5
  $region4: #{bert_base_forward.16} parent=0 // pred_region
    _
  $region5: #{bert_base_forward.16} parent=0 // pred_fallthru
    _
  // Predicated region
  $region6: #{bert_base_forward.16} parent=0 // pred_check
    _
  $region7: #{bert_base_forward.16} parent=0 // pred_check_branch
    %14 = sbr.rel (0) target = $region9
  $region8: #{bert_base_forward.16} parent=0 // pred_region
    _
  $region9: #{bert_base_forward.16} parent=0 // pred_fallthru
    _
  // Predicated region
  $region10: #{bert_base_forward.16} parent=0 // pred_check
    _
  $region11: #{bert_base_forward.16} parent=0 // pred_check_branch
    %16 = sbr.rel (0) target = $region13
  $region12: #{bert_base_forward.16} parent=0 // pred_region
    _
  $region13: #{bert_base_forward.16} parent=0 // pred_fallthru
    _
  // Predicated region
  $region14: #{bert_base_forward.16} parent=0 // pred_check
    _
  $region15: #{bert_base_forward.16} parent=0 // pred_check_branch
    %18 = sbr.rel (0) target = $region17
  $region16: #{bert_base_forward.16} parent=0 // pred_region
    _
  $region17: #{bert_base_forward.16} parent=0 // pred_fallthru
    _
  // Predicated region
  $region18: #{bert_base_forward.16} parent=0 // pred_check
    _
  $region19: #{bert_base_forward.16} parent=0 // pred_check_branch
    %20 = sbr.rel (0) target = $region21
  $region20: #{bert_base_forward.16} parent=0 // pred_region
    _
  $region21: #{bert_base_forward.16} parent=0 // pred_fallthru
    _
  // Predicated region
  $region22: #{bert_base_forward.16} parent=0 // pred_check
    _
  $region23: #{bert_base_forward.16} parent=0 // pred_check_branch
    %22 = sbr.rel (0) target = $region25
  $region24: #{bert_base_forward.16} parent=0 // pred_region
    _
  $region25: #{bert_base_forward.16} parent=0 // pred_fallthru
    _
  %p24 = scmp.eq.s32.totalorder 0, 0
  // Predicated region
  $region26: #{bert_base_forward.16} parent=0 // pred_check
    %p25 = pneg %p24
  $region27: #{bert_base_forward.16} parent=0 // pred_check_branch
    %27 = sbr.rel (%p25) target = $region29
  $region28: #{bert_base_forward.16} parent=0 // pred_region
    %28 = vst [vmem:[#allocation2] sm:$0xff] 0.0
    %29 = vst [vmem:[#allocation2 + $0x8] sm:$0xff] 0.0
    %30 = vst [vmem:[#allocation2 + $0x10] sm:$0xff] 0.0
    %31 = vst [vmem:[#allocation2 + $0x18] sm:$0xff] 0.0
  $region29: #{bert_base_forward.16} parent=0 // pred_fallthru
    _
  %v32 = vld [vmem:[#allocation2] sm:$0xff]
  %v33 = vld [vmem:[#allocation2 + $0x8] sm:$0xff]
  %v34 = vld [vmem:[#allocation2 + $0x10] sm:$0xff]
  %v35 = vld [vmem:[#allocation2 + $0x18] sm:$0xff]
  %v36 = vld [vmem:[%s0] sm:$0xf]
  %v37 = vld [vmem:[%s0 + $0x4] sm:$0xf]
  %v38 = vld [vmem:[%s0 + $0x8] sm:$0xf]
  %v39 = vld [vmem:[%s0 + $0xc] sm:$0xf]
  %v40 = vld [vmem:[%s1] sm:$0xf]
  %v41 = vld [vmem:[%s1 + $0x4] sm:$0xf]
  %v42 = vld [vmem:[%s1 + $0x8] sm:$0xf]
  %v43 = vld [vmem:[%s1 + $0xc] sm:$0xf]
  %v44 = vld [vmem:[%s1 + $0x10] sm:$0xf]
  %v45 = vld [vmem:[%s1 + $0x14] sm:$0xf]
  %v46 = vld [vmem:[%s1 + $0x18] sm:$0xf]
  %v47 = vld [vmem:[%s1 + $0x1c] sm:$0xf]
  %v48 = vld [vmem:[%s1 + $0x20] sm:$0xf]
  %v49 = vld [vmem:[%s1 + $0x24] sm:$0xf]
  %v50 = vld [vmem:[%s1 + $0x28] sm:$0xf]
  %v51 = vld [vmem:[%s1 + $0x2c] sm:$0xf]
  %v52 = vld [vmem:[%s1 + $0x30] sm:$0xf]
  %v53 = vld [vmem:[%s1 + $0x34] sm:$0xf]
  %v54 = vld [vmem:[%s1 + $0x38] sm:$0xf]
  %v55 = vld [vmem:[%s1 + $0x3c] sm:$0xf]
  %v60 = vunpack.c.l.b16 %v36
  %v61 = vunpack.c.l.b16 %v37
  %v62 = vunpack.c.l.b16 %v38
  %v63 = vunpack.c.l.b16 %v39
  %v64 = vpack.c.b16 %v61, %v60
  %v65 = vpack.c.b16 %v63, %v62
  %v84 = vunpack.c.l.b16 %v40
  %v85 = vunpack.c.l.b16 %v41
  %v86 = vunpack.c.l.b16 %v42
  %v87 = vunpack.c.l.b16 %v43
  %v88 = vunpack.c.l.b16 %v44
  %v89 = vunpack.c.l.b16 %v45
  %v90 = vunpack.c.l.b16 %v46
  %v91 = vunpack.c.l.b16 %v47
  %v92 = vunpack.c.l.b16 %v48
  %v93 = vunpack.c.l.b16 %v49
  %v94 = vunpack.c.l.b16 %v50
  %v95 = vunpack.c.l.b16 %v51
  %v96 = vunpack.c.l.b16 %v52
  %v97 = vunpack.c.l.b16 %v53
  %v98 = vunpack.c.l.b16 %v54
  %v99 = vunpack.c.l.b16 %v55
  %v100 = vpack.c.b16 %v85, %v84
  %v101 = vpack.c.b16 %v87, %v86
  %v102 = vpack.c.b16 %v89, %v88
  %v103 = vpack.c.b16 %v91, %v90
  %v104 = vpack.c.b16 %v93, %v92
  %v105 = vpack.c.b16 %v95, %v94
  %v106 = vpack.c.b16 %v97, %v96
  %v107 = vpack.c.b16 %v99, %v98
  %116 = vmatprep.subr.bf16.mxu0 0
  %117 = vmatpush1.bf16.msra.mxu0 %v100
  %118 = vmatprep.subr.bf16.mxu0 0
  %119 = vmatpush1.bf16.msra.mxu0 %v101
  %120 = vmatprep.subr.bf16.mxu0 0
  %121 = vmatpush1.bf16.msra.mxu0 %v102
  %122 = vmatprep.subr.bf16.mxu0 0
  %123 = vmatpush1.bf16.msra.mxu0 %v103
  %124 = vmatprep.subr.bf16.mxu0 0
  %125 = vmatpush1.bf16.msra.mxu0 %v104
  %126 = vmatprep.subr.bf16.mxu0 0
  %127 = vmatpush1.bf16.msra.mxu0 %v105
  %128 = vmatprep.subr.bf16.mxu0 0
  %129 = vmatpush1.bf16.msra.mxu0 %v106
  %130 = vmatprep.subr.bf16.mxu0 0
  %131 = vmatpush1.bf16.msra.mxu0 %v107
  %132 = vmatprep.subr.bf16.mxu0 0
  %133 = vmatpush1.bf16.msra.mxu0 0
  %134 = vmatprep.subr.bf16.mxu0 0
  %135 = vmatpush1.bf16.msra.mxu0 0
  %136 = vmatprep.subr.bf16.mxu0 0
  %137 = vmatpush1.bf16.msra.mxu0 0
  %138 = vmatprep.subr.bf16.mxu0 0
  %139 = vmatpush1.bf16.msra.mxu0 0
  %140 = vmatprep.subr.bf16.mxu0 0
  %141 = vmatpush1.bf16.msra.mxu0 0
  %142 = vmatprep.subr.bf16.mxu0 0
  %143 = vmatpush1.bf16.msra.mxu0 0
  %144 = vmatprep.subr.bf16.mxu0 0
  %145 = vmatpush1.bf16.msra.mxu0 0
  %146 = vmatprep.subr.bf16.mxu0 0
  %147 = vmatpush1.bf16.msra.mxu0 0
  %148 = vmatprep.mubr.bf16.mxu0 0
  %149 = vmatmul.mubr.bf16.gmra.mrb[0].mxu0 %v64
  %v150 = vpop.f32.mrb[0].mxu0
  %v151 = vadd.f32 0.0, %v150
  %v152 = vpop.f32.mrb[0].mxu0
  %v153 = vpop.f32.mrb[0].mxu0
  %v154 = vadd.f32 0.0, %v153
  %v155 = vpop.f32.mrb[0].mxu0
  %156 = vmatprep.mubr.bf16.mxu0 0
  %157 = vmatmul.mubr.bf16.gmra.mrb[0].mxu0 %v65
  %v158 = vpop.f32.mrb[0].mxu0
  %v159 = vadd.f32 0.0, %v158
  %v160 = vpop.f32.mrb[0].mxu0
  %v161 = vpop.f32.mrb[0].mxu0
  %v162 = vadd.f32 0.0, %v161
  %v163 = vpop.f32.mrb[0].mxu0
  %164 = vdwg.mxu0
  %v165 = vadd.f32 %v32, %v151
  %v166 = vadd.f32 %v33, %v154
  %v167 = vadd.f32 %v34, %v159
  %v168 = vadd.f32 %v35, %v162
  %169 = vst [vmem:[#allocation2] sm:$0xff] %v165
  %170 = vst [vmem:[#allocation2 + $0x8] sm:$0xff] %v166
  %171 = vst [vmem:[#allocation2 + $0x10] sm:$0xff] %v167
  %172 = vst [vmem:[#allocation2 + $0x18] sm:$0xff] %v168
  // Predicated region
  $region30: #{bert_base_forward.16} parent=0 // pred_check
    %p173 = pneg %p24
  $region31: #{bert_base_forward.16} parent=0 // pred_check_branch
    %175 = sbr.rel (%p173) target = $region33
  $region32: #{bert_base_forward.16} parent=0 // pred_region
    %v176 = vld [vmem:[#allocation2] sm:$0xff]
    %v177 = vld [vmem:[#allocation2 + $0x8] sm:$0xff]
    %v178 = vld [vmem:[#allocation2 + $0x10] sm:$0xff]
    %v179 = vld [vmem:[#allocation2 + $0x18] sm:$0xff]
    %v180 = vld [vmem:[%s2] sm:$0x1]
    %v182 = vlaneseq
    %v183 = vshrl.u32 %v182, 7
    %v184 = vsub.s32 0, %v183
    %v185 = vrot.slane %v180, %v184
    %v187 = vadd.f32 %v176, %v185
    %v188 = vadd.f32 %v177, %v185
    %v189 = vadd.f32 %v178, %v185
    %v190 = vadd.f32 %v179, %v185
    %v191 = vld [vmem:[%s3] sm:$0xf]
    %v192 = vld [vmem:[%s3 + $0x4] sm:$0xf]
    %v193 = vld [vmem:[%s3 + $0x8] sm:$0xf]
    %v194 = vld [vmem:[%s3 + $0xc] sm:$0xf]
    %v195 = vunpack.c.l.bf16 %v191
    %v196 = vunpack.c.l.bf16 %v192
    %v197 = vunpack.c.l.bf16 %v193
    %v198 = vunpack.c.l.bf16 %v194
    %v199 = vadd.f32 %v187, %v195
    %v200 = vadd.f32 %v188, %v196
    %v201 = vadd.f32 %v189, %v197
    %v202 = vadd.f32 %v190, %v198
    %203 = vadd.xlane.f32.xlu0 %v199
    %v204 = vpop.xlane.xlu0 %203
    %205 = vadd.xlane.f32.xlu0 %v200
    %v206 = vpop.xlane.xlu0 %205
    %207 = vadd.xlane.f32.xlu0 %v201
    %v208 = vpop.xlane.xlu0 %207
    %209 = vadd.xlane.f32.xlu0 %v202
    %v210 = vpop.xlane.xlu0 %209
    %v211 = vrcp.pop 128.0
    %v212 = vmul.f32 %v204, %v211
    %v213 = vmul.f32 %v206, %v211
    %v214 = vmul.f32 %v208, %v211
    %v215 = vmul.f32 %v210, %v211
    %v216 = vsub.f32 %v199, %v212
    %v217 = vsub.f32 %v200, %v213
    %v218 = vsub.f32 %v201, %v214
    %v219 = vsub.f32 %v202, %v215
    %v220 = vmul.f32 %v216, %v216
    %v221 = vmul.f32 %v217, %v217
    %v222 = vmul.f32 %v218, %v218
    %v223 = vmul.f32 %v219, %v219
    %224 = vadd.xlane.f32.xlu0 %v220
    %v225 = vpop.xlane.xlu0 %224
    %226 = vadd.xlane.f32.xlu0 %v221
    %v227 = vpop.xlane.xlu0 %226
    %228 = vadd.xlane.f32.xlu0 %v222
    %v229 = vpop.xlane.xlu0 %228
    %230 = vadd.xlane.f32.xlu0 %v223
    %v231 = vpop.xlane.xlu0 %230
    %v232 = vmul.f32 %v225, %v211
    %v233 = vmul.f32 %v227, %v211
    %v234 = vmul.f32 %v229, %v211
    %v235 = vmul.f32 %v231, %v211
    %v236 = vadd.f32 %v232, 1e-12
    %v237 = vadd.f32 %v233, 1e-12
    %v238 = vadd.f32 %v234, 1e-12
    %v239 = vadd.f32 %v235, 1e-12
    %v240 = vrsqrt.pop %v236
    %v241 = vrsqrt.pop %v237
    %v242 = vrsqrt.pop %v238
    %v243 = vrsqrt.pop %v239
    %v244 = vmul.f32 %v216, %v240
    %v245 = vmul.f32 %v217, %v241
    %v246 = vmul.f32 %v218, %v242
    %v247 = vmul.f32 %v219, %v243
    %v248 = vld [vmem:[%s4] sm:$0x1]
    %v250 = vlaneseq
    %v251 = vshrl.u32 %v250, 7
    %v252 = vsub.s32 0, %v251
    %v253 = vrot.slane %v248, %v252
    %v255 = vmul.f32 %v244, %v253
    %v256 = vmul.f32 %v245, %v253
    %v257 = vmul.f32 %v246, %v253
    %v258 = vmul.f32 %v247, %v253
    %v259 = vld [vmem:[%s5] sm:$0x1]
    %v261 = vlaneseq
    %v262 = vshrl.u32 %v261, 7
    %v263 = vsub.s32 0, %v262
    %v264 = vrot.slane %v259, %v263
    %v266 = vadd.f32 %v255, %v264
    %v267 = vadd.f32 %v256, %v264
    %v268 = vadd.f32 %v257, %v264
    %v269 = vadd.f32 %v258, %v264
    %v270 = vpack.c.bf16 %v267, %v266
    %v271 = vpack.c.bf16 %v269, %v268
    %v274 = vunpack.c.l.b16 %v270
    %v275 = vunpack.c.h.b16 %v270
    %v276 = vunpack.c.l.b16 %v271
    %v277 = vunpack.c.h.b16 %v271
    %v278 = vpack.c.b16 %v274, %v274
    %v279 = vpack.c.b16 %v275, %v275
    %v280 = vpack.c.b16 %v276, %v276
    %v281 = vpack.c.b16 %v277, %v277
    %286 = vst [vmem:[%s6] sm:$0xf] %v278
    %287 = vst [vmem:[%s6 + $0x4] sm:$0xf] %v279
    %288 = vst [vmem:[%s6 + $0x8] sm:$0xf] %v280
    %289 = vst [vmem:[%s6 + $0xc] sm:$0xf] %v281
  $region33: #{bert_base_forward.16} parent=0 // pred_fallthru
    _
  // Predicated region
  $region34: #{bert_base_forward.16} parent=0 // pred_check
    _
  $region35: #{bert_base_forward.16} parent=0 // pred_check_branch
    %291 = sbr.rel (0) target = $region37
  $region36: #{bert_base_forward.16} parent=0 // pred_region
    _
  $region37: #{bert_base_forward.16} parent=0 // pred_fallthru
    _
  // Predicated region
  $region38: #{bert_base_forward.16} parent=0 // pred_check
    _
  $region39: #{bert_base_forward.16} parent=0 // pred_check_branch
    %293 = sbr.rel (0) target = $region41
  $region40: #{bert_base_forward.16} parent=0 // pred_region
    _
  $region41: #{bert_base_forward.16} parent=0 // pred_fallthru
    _

// kernel: bert_base_forward.15
$region0: #{bert_base_forward.15}
  #allocation0 [shape = 'u32[]', space=smem, size = 0x4, offset = 0x4, fixed_abs, tag = 'smem constant byte address 0x4 - core index']
  #allocation1 [shape = 'u32[144,128]{1,0:T(1,128)}', space=vmem, size = 0x12000, scoped, tag = 'internal scratch']
  #allocation2 [shape = 'f32[4,16,1]{2,1,0:T(8,128)}', space=vmem, size = 0x8000, scoped, tag = 'scratch operand']
  #allocation3 [shape = 'f32[4,16,1]{2,1,0:T(8,128)}', space=vmem, size = 0x8000, scoped, tag = 'scratch operand']
  #allocation4 [shape = 'f32[4,16,32]{2,1,0:T(8,128)}', space=vmem, size = 0x8000, scoped, tag = 'scratch operand']
  %s0 = inlined_call_operand.vmem [shape: bf16[2,16,384], index: 0, kind: input, shape index: {}, may-alias: {0,1,2}]
  %s1 = inlined_call_operand.vmem [shape: bf16[2,16,384], index: 1, kind: input, shape index: {}, may-alias: {0,1,2}]
  %s2 = inlined_call_operand.vmem [shape: bf16[2,16,384], index: 2, kind: input, shape index: {}, may-alias: {0,1,2}]
  %s3 = inlined_call_operand.vmem [shape: f32[2,1,16], index: 3, kind: input, shape index: {}]
  %s4 = inlined_call_operand.vmem [shape: bf16[2,16,128], index: 4, kind: output, shape index: {}]
  %s5 = sld [smem:[#allocation0]]
  $region180: #{bert_base_forward.15} parent=0
    _
  %s7 = ssub.s32 1, %s5
  %s8 = scalar_select 0, %s7, %s5
  $region1: #{bert_base_forward.15} parent=0
    #allocation5 [shape = 'u8[8192]{0}', space=vmem, size = 0x2000, scoped, tag = 'input window, operand 0']
    #allocation6 [shape = 'u8[8192]{0}', space=vmem, size = 0x2000, scoped, tag = 'input window, operand 1']
    #allocation7 [shape = 'u8[8192]{0}', space=vmem, size = 0x2000, scoped, tag = 'input window, operand 2']
    loop: start=0, step=1, limit=4
    $region2: #{bert_base_forward.15} parent=1 // loop_pre_header
      _
    $region3: #{bert_base_forward.15} parent=1 // loop_header
      %s10 = sphi 0, %s14
      %p11 = scmp.ge.s32.totalorder %s10, 4
      %s17 = sphi 0, %s36
      %s18 = sphi 0, %s32
      %s19 = sphi 0, %s28
      %s20 = sphi 0, %s17
      %s21 = sphi 0, %s18
      %s22 = sphi 0, %s19
      %s23 = sphi 0, %s20
      %s24 = sphi 0, %s21
      %s25 = sphi 0, %s22
      %s41 = sphi 0, %s43
      %s44 = sphi 0, %s41
      %s45 = sphi 0, %s44
      %s61 = sphi 0, %s45
      %s69 = sphi 0, %s71
      %s72 = sphi 0, %s69
      %s73 = sphi 0, %s72
      %s89 = sphi 0, %s73
      %s97 = sphi 0, %s99
      %s100 = sphi 0, %s97
      %s101 = sphi 0, %s100
      %s117 = sphi 0, %s101
      %s125 = sphi 0, %s127
      %s128 = sphi 0, %s125
      %s129 = sphi 0, %s128
      %s145 = sphi 0, %s129
      %s153 = sphi 0, %s155
      %s156 = sphi 0, %s153
      %s157 = sphi 0, %s156
      %s173 = sphi 0, %s157
    $region4: #{bert_base_forward.15} parent=1 // loop_header_branch
      %13 = sbr.rel (%p11) target = $region8
    $region5: #{bert_base_forward.15} parent=1 // loop_body
      %s15 = ssub.s32 %s10, 1
      %s16 = ssub.s32 %s10, 2
      %s26 = sadd.s32 1, %s19
      %p27 = scmp.ge.s32.totalorder %s26, 1
      %s28 = scalar_select %p27, 0, %s26
      %s29 = sadd.s32 1, %s18
      %s30 = scalar_select %p27, %s29, %s18
      %p31 = scmp.ge.s32.totalorder %s30, 1
      %s32 = scalar_select %p31, 0, %s30
      %s33 = sadd.s32 1, %s17
      %s34 = scalar_select %p31, %s33, %s17
      %p35 = scmp.ge.s32.totalorder %s34, 2
      %s36 = scalar_select %p35, 0, %s34
      %s37 = ssub.s32 %s17, %s36
      %s38 = ssub.s32 %s18, %s32
      %s39 = sor.u32 %s37, %s38
      %p40 = scmp.eq.s32.totalorder %s39, 0
      %s42 = sadd.s32 %s41, 1
      %s43 = scalar_select %p40, %s41, %s42
      %p46 = pneg %p40
      %p47 = scmp.eq.s32.totalorder %s10, 1
      %p48 = por %p46, %p47
      %p49 = scmp.ne.s32.totalorder %s41, %s44
      %p50 = scmp.eq.s32.totalorder %s10, 0
      %p51 = por %p49, %p50
      %p52 = scmp.ne.s32.totalorder %s41, %s44
      %p53 = scmp.eq.s32.totalorder %s15, 1
      %p54 = por %p52, %p53
      %p55 = scmp.ne.s32.totalorder %s44, %s45
      %p56 = scmp.eq.s32.totalorder %s15, 0
      %p57 = por %p55, %p56
      %p58 = scmp.ne.s32.totalorder %s44, %s45
      %p59 = scmp.eq.s32.totalorder %s16, 1
      %p60 = por %p58, %p59
      %p62 = scmp.ne.s32.totalorder %s45, %s61
      %p63 = scmp.eq.s32.totalorder %s16, 0
      %p64 = por %p62, %p63
      %s65 = ssub.s32 %s17, %s36
      %s66 = ssub.s32 %s19, %s28
      %s67 = sor.u32 %s65, %s66
      %p68 = scmp.eq.s32.totalorder %s67, 0
      %s70 = sadd.s32 %s69, 1
      %s71 = scalar_select %p68, %s69, %s70
      %p74 = pneg %p68
      %p75 = scmp.eq.s32.totalorder %s10, 1
      %p76 = por %p74, %p75
      %p77 = scmp.ne.s32.totalorder %s69, %s72
      %p78 = scmp.eq.s32.totalorder %s10, 0
      %p79 = por %p77, %p78
      %p80 = scmp.ne.s32.totalorder %s69, %s72
      %p81 = scmp.eq.s32.totalorder %s15, 1
      %p82 = por %p80, %p81
      %p83 = scmp.ne.s32.totalorder %s72, %s73
      %p84 = scmp.eq.s32.totalorder %s15, 0
      %p85 = por %p83, %p84
      %p86 = scmp.ne.s32.totalorder %s72, %s73
      %p87 = scmp.eq.s32.totalorder %s16, 1
      %p88 = por %p86, %p87
      %p90 = scmp.ne.s32.totalorder %s73, %s89
      %p91 = scmp.eq.s32.totalorder %s16, 0
      %p92 = por %p90, %p91
      %s93 = ssub.s32 %s17, %s36
      %s94 = ssub.s32 %s19, %s28
      %s95 = sor.u32 %s93, %s94
      %p96 = scmp.eq.s32.totalorder %s95, 0
      %s98 = sadd.s32 %s97, 1
      %s99 = scalar_select %p96, %s97, %s98
      %p102 = pneg %p96
      %p103 = scmp.eq.s32.totalorder %s10, 1
      %p104 = por %p102, %p103
      %p105 = scmp.ne.s32.totalorder %s97, %s100
      %p106 = scmp.eq.s32.totalorder %s10, 0
      %p107 = por %p105, %p106
      %p108 = scmp.ne.s32.totalorder %s97, %s100
      %p109 = scmp.eq.s32.totalorder %s15, 1
      %p110 = por %p108, %p109
      %p111 = scmp.ne.s32.totalorder %s100, %s101
      %p112 = scmp.eq.s32.totalorder %s15, 0
      %p113 = por %p111, %p112
      %p114 = scmp.ne.s32.totalorder %s100, %s101
      %p115 = scmp.eq.s32.totalorder %s16, 1
      %p116 = por %p114, %p115
      %p118 = scmp.ne.s32.totalorder %s101, %s117
      %p119 = scmp.eq.s32.totalorder %s16, 0
      %p120 = por %p118, %p119
      %s121 = ssub.s32 %s17, %s36
      %s122 = ssub.s32 %s19, %s28
      %s123 = sor.u32 %s121, %s122
      %p124 = scmp.eq.s32.totalorder %s123, 0
      %s126 = sadd.s32 %s125, 1
      %s127 = scalar_select %p124, %s125, %s126
      %p130 = pneg %p124
      %p131 = scmp.eq.s32.totalorder %s10, 1
      %p132 = por %p130, %p131
      %p133 = scmp.ne.s32.totalorder %s125, %s128
      %p134 = scmp.eq.s32.totalorder %s10, 0
      %p135 = por %p133, %p134
      %p136 = scmp.ne.s32.totalorder %s125, %s128
      %p137 = scmp.eq.s32.totalorder %s15, 1
      %p138 = por %p136, %p137
      %p139 = scmp.ne.s32.totalorder %s128, %s129
      %p140 = scmp.eq.s32.totalorder %s15, 0
      %p141 = por %p139, %p140
      %p142 = scmp.ne.s32.totalorder %s128, %s129
      %p143 = scmp.eq.s32.totalorder %s16, 1
      %p144 = por %p142, %p143
      %p146 = scmp.ne.s32.totalorder %s129, %s145
      %p147 = scmp.eq.s32.totalorder %s16, 0
      %p148 = por %p146, %p147
      %s149 = ssub.s32 %s17, %s36
      %s150 = ssub.s32 %s18, %s32
      %s151 = sor.u32 %s149, %s150
      %p152 = scmp.eq.s32.totalorder %s151, 0
      %s154 = sadd.s32 %s153, 1
      %s155 = scalar_select %p152, %s153, %s154
      %p158 = pneg %p152
      %p159 = scmp.eq.s32.totalorder %s10, 1
      %p160 = por %p158, %p159
      %p161 = scmp.ne.s32.totalorder %s153, %s156
      %p162 = scmp.eq.s32.totalorder %s10, 0
      %p163 = por %p161, %p162
      %p164 = scmp.ne.s32.totalorder %s153, %s156
      %p165 = scmp.eq.s32.totalorder %s15, 1
      %p166 = por %p164, %p165
      %p167 = scmp.ne.s32.totalorder %s156, %s157
      %p168 = scmp.eq.s32.totalorder %s15, 0
      %p169 = por %p167, %p168
      %p170 = scmp.ne.s32.totalorder %s156, %s157
      %p171 = scmp.eq.s32.totalorder %s16, 1
      %p172 = por %p170, %p171
      %p174 = scmp.ne.s32.totalorder %s157, %s173
      %p175 = scmp.eq.s32.totalorder %s16, 0
      %p176 = por %p174, %p175
      %p177 = scmp.le.s32.totalorder 1, %s10
      %p178 = scmp.lt.s32.totalorder %s10, 3
      %p179 = pnand %p177, %p178
      %p180 = pneg %p179
      // Predicated region
      $region9: #{bert_base_forward.15} parent=5 // pred_check
        _
      $region10: #{bert_base_forward.15} parent=5 // pred_check_branch
        %182 = sbr.rel (%p179) target = $region12
      $region11: #{bert_base_forward.15} parent=5 // pred_region
        %s183 = ssub.s32 %s10, 1
      $region12: #{bert_base_forward.15} parent=5 // pred_fallthru
        _
      %p184 = scmp.lt.s32.totalorder %s10, 2
      // Predicated region
      $region13: #{bert_base_forward.15} parent=5 // pred_check
        %p185 = pneg %p184
      $region14: #{bert_base_forward.15} parent=5 // pred_check_branch
        %187 = sbr.rel (%p185) target = $region16
      $region15: #{bert_base_forward.15} parent=5 // pred_region
        // Predicated region
        $region17: #{bert_base_forward.15} parent=15 // pred_check
          %p188 = pneg %p51
        $region18: #{bert_base_forward.15} parent=15 // pred_check_branch
          %190 = sbr.rel (%p188) target = $region20
        $region19: #{bert_base_forward.15} parent=15 // pred_region
          %s191 = sand.u32 %s41, 1
          %s192 = sand.u32 %s41, 1
          %s193 = smul.addr %s192, 8
          %s194 = scalar_lea.vmem [#allocation5], %s193
          %s195 = smul.u32 2, %s18
          %s196 = smul.addr %s195, 3
          %s197 = smul.addr %s17, 6
          %s198 = sadd.s32 %s196, %s197
          %s199 = smul.addr %s198, 4
          %s200 = scalar_lea.vmem %s0, %s199
          // Predicated region
          $region21: #{bert_base_forward.15} parent=19 // pred_check
            _
          $region22: #{bert_base_forward.15} parent=19 // pred_check_branch
            %202 = sbr.rel (0) target = $region24
          $region23: #{bert_base_forward.15} parent=19 // pred_region
            // Predicated region
            $region25: #{bert_base_forward.15} parent=23 // pred_check
              _
            $region26: #{bert_base_forward.15} parent=23 // pred_check_branch
              %204 = sbr.rel target = $region28
            $region27: #{bert_base_forward.15} parent=23 // pred_region
              // Predicated region
              $region40: #{bert_base_forward.15} parent=27 // pred_check
                _
              $region41: #{bert_base_forward.15} parent=27 // pred_check_branch
                %221 = sbr.rel (0) target = $region43
              $region42: #{bert_base_forward.15} parent=27 // pred_region
                loop: start=0, step=1, limit=1
                $region44: #{bert_base_forward.15} parent=42 // loop_pre_header
                  _
                $region45: #{bert_base_forward.15} parent=42 // loop_header
                  %s223 = sphi 0, %s227
                  %p224 = scmp.ge.s32.totalorder %s223, 1
                  %s228 = sphi %s200, %s200
                  %s229 = sphi %s194, %s194
                $region46: #{bert_base_forward.15} parent=42 // loop_header_branch
                  %226 = sbr.rel (%p224) target = $region50
                $region47: #{bert_base_forward.15} parent=42 // loop_body
                  _
                $region48: #{bert_base_forward.15} parent=42 // loop_footer
                  %s227 = sadd.s32 1, %s223
                $region49: #{bert_base_forward.15} parent=42 // loop_footer_branch
                  %222 = sbr.rel target = $region45
                $region50: #{bert_base_forward.15} parent=42 // loop_exit
                  _
                loop: start=0, step=1, limit=1
                $region51: #{bert_base_forward.15} parent=42 // loop_pre_header
                  _
                $region52: #{bert_base_forward.15} parent=42 // loop_header
                  %s232 = sphi 0, %s236
                  %p233 = scmp.ge.s32.totalorder %s232, 1
                  %s237 = sphi %s200, %s200
                  %s238 = sphi %s194, %s194
                $region53: #{bert_base_forward.15} parent=42 // loop_header_branch
                  %235 = sbr.rel (%p233) target = $region57
                $region54: #{bert_base_forward.15} parent=42 // loop_body
                  %v239 = vld [vmem:[%s237] sm:$0xf]
                  %240 = vst [vmem:[%s238] sm:$0xf] %v239
                  %v241 = vld [vmem:[%s237 + $0xc] sm:$0xf]
                  %242 = vst [vmem:[%s238 + $0x4] sm:$0xf] %v241
                $region55: #{bert_base_forward.15} parent=42 // loop_footer
                  %s236 = sadd.s32 1, %s232
                $region56: #{bert_base_forward.15} parent=42 // loop_footer_branch
                  %231 = sbr.rel target = $region52
                $region57: #{bert_base_forward.15} parent=42 // loop_exit
                  _
              $region43: #{bert_base_forward.15} parent=27 // pred_fallthru
                _
            $region28: #{bert_base_forward.15} parent=23 // pred_fallthru
              _
            // Predicated region
            $region29: #{bert_base_forward.15} parent=23 // pred_check
              _
            $region30: #{bert_base_forward.15} parent=23 // pred_check_branch
              %206 = sbr.rel (0) target = $region32
            $region31: #{bert_base_forward.15} parent=23 // pred_region
              loop: start=0, step=1, limit=1
              $region33: #{bert_base_forward.15} parent=31 // loop_pre_header
                _
              $region34: #{bert_base_forward.15} parent=31 // loop_header
                %s209 = sphi 0, %s213
                %p210 = scmp.ge.s32.totalorder %s209, 1
                %s214 = sphi %s200, %s200
                %s215 = sphi %s194, %s194
              $region35: #{bert_base_forward.15} parent=31 // loop_header_branch
                %212 = sbr.rel (%p210) target = $region39
              $region36: #{bert_base_forward.15} parent=31 // loop_body
                %v216 = vld [vmem:[%s214] sm:$0xf]
                %217 = vst [vmem:[%s215] sm:$0xf] %v216
                %v218 = vld [vmem:[%s214 + $0xc] sm:$0xf]
                %219 = vst [vmem:[%s215 + $0x4] sm:$0xf] %v218
              $region37: #{bert_base_forward.15} parent=31 // loop_footer
                %s213 = sadd.s32 1, %s209
              $region38: #{bert_base_forward.15} parent=31 // loop_footer_branch
                %208 = sbr.rel target = $region34
              $region39: #{bert_base_forward.15} parent=31 // loop_exit
                _
            $region32: #{bert_base_forward.15} parent=23 // pred_fallthru
              _
          $region24: #{bert_base_forward.15} parent=19 // pred_fallthru
            _
          %243 = vnop
        $region20: #{bert_base_forward.15} parent=15 // pred_fallthru
          _
        // Predicated region
        $region58: #{bert_base_forward.15} parent=15 // pred_check
          %p244 = pneg %p79
        $region59: #{bert_base_forward.15} parent=15 // pred_check_branch
          %246 = sbr.rel (%p244) target = $region61
        $region60: #{bert_base_forward.15} parent=15 // pred_region
          %s247 = sand.u32 %s69, 1
          %s248 = sand.u32 %s69, 1
          %s249 = smul.addr %s248, 8
          %s250 = scalar_lea.vmem [#allocation6], %s249
          %s251 = smul.u32 2, %s19
          %s252 = smul.addr %s251, 3
          %s253 = sadd.s32 1, %s252
          %s254 = smul.addr %s17, 6
          %s255 = sadd.s32 %s253, %s254
          %s256 = smul.addr %s255, 4
          %s257 = scalar_lea.vmem %s1, %s256
          // Predicated region
          $region62: #{bert_base_forward.15} parent=60 // pred_check
            _
          $region63: #{bert_base_forward.15} parent=60 // pred_check_branch
            %259 = sbr.rel (0) target = $region65
          $region64: #{bert_base_forward.15} parent=60 // pred_region
            // Predicated region
            $region66: #{bert_base_forward.15} parent=64 // pred_check
              _
            $region67: #{bert_base_forward.15} parent=64 // pred_check_branch
              %261 = sbr.rel target = $region69
            $region68: #{bert_base_forward.15} parent=64 // pred_region
              // Predicated region
              $region81: #{bert_base_forward.15} parent=68 // pred_check
                _
              $region82: #{bert_base_forward.15} parent=68 // pred_check_branch
                %278 = sbr.rel (0) target = $region84
              $region83: #{bert_base_forward.15} parent=68 // pred_region
                loop: start=0, step=1, limit=1
                $region85: #{bert_base_forward.15} parent=83 // loop_pre_header
                  _
                $region86: #{bert_base_forward.15} parent=83 // loop_header
                  %s280 = sphi 0, %s284
                  %p281 = scmp.ge.s32.totalorder %s280, 1
                  %s285 = sphi %s257, %s257
                  %s286 = sphi %s250, %s250
                $region87: #{bert_base_forward.15} parent=83 // loop_header_branch
                  %283 = sbr.rel (%p281) target = $region91
                $region88: #{bert_base_forward.15} parent=83 // loop_body
                  _
                $region89: #{bert_base_forward.15} parent=83 // loop_footer
                  %s284 = sadd.s32 1, %s280
                $region90: #{bert_base_forward.15} parent=83 // loop_footer_branch
                  %279 = sbr.rel target = $region86
                $region91: #{bert_base_forward.15} parent=83 // loop_exit
                  _
                loop: start=0, step=1, limit=1
                $region92: #{bert_base_forward.15} parent=83 // loop_pre_header
                  _
                $region93: #{bert_base_forward.15} parent=83 // loop_header
                  %s289 = sphi 0, %s293
                  %p290 = scmp.ge.s32.totalorder %s289, 1
                  %s294 = sphi %s257, %s257
                  %s295 = sphi %s250, %s250
                $region94: #{bert_base_forward.15} parent=83 // loop_header_branch
                  %292 = sbr.rel (%p290) target = $region98
                $region95: #{bert_base_forward.15} parent=83 // loop_body
                  %v296 = vld [vmem:[%s294] sm:$0xf]
                  %297 = vst [vmem:[%s295] sm:$0xf] %v296
                  %v298 = vld [vmem:[%s294 + $0xc] sm:$0xf]
                  %299 = vst [vmem:[%s295 + $0x4] sm:$0xf] %v298
                $region96: #{bert_base_forward.15} parent=83 // loop_footer
                  %s293 = sadd.s32 1, %s289
                $region97: #{bert_base_forward.15} parent=83 // loop_footer_branch
                  %288 = sbr.rel target = $region93
                $region98: #{bert_base_forward.15} parent=83 // loop_exit
                  _
              $region84: #{bert_base_forward.15} parent=68 // pred_fallthru
                _
            $region69: #{bert_base_forward.15} parent=64 // pred_fallthru
              _
            // Predicated region
            $region70: #{bert_base_forward.15} parent=64 // pred_check
              _
            $region71: #{bert_base_forward.15} parent=64 // pred_check_branch
              %263 = sbr.rel (0) target = $region73
            $region72: #{bert_base_forward.15} parent=64 // pred_region
              loop: start=0, step=1, limit=1
              $region74: #{bert_base_forward.15} parent=72 // loop_pre_header
                _
              $region75: #{bert_base_forward.15} parent=72 // loop_header
                %s266 = sphi 0, %s270
                %p267 = scmp.ge.s32.totalorder %s266, 1
                %s271 = sphi %s257, %s257
                %s272 = sphi %s250, %s250
              $region76: #{bert_base_forward.15} parent=72 // loop_header_branch
                %269 = sbr.rel (%p267) target = $region80
              $region77: #{bert_base_forward.15} parent=72 // loop_body
                %v273 = vld [vmem:[%s271] sm:$0xf]
                %274 = vst [vmem:[%s272] sm:$0xf] %v273
                %v275 = vld [vmem:[%s271 + $0xc] sm:$0xf]
                %276 = vst [vmem:[%s272 + $0x4] sm:$0xf] %v275
              $region78: #{bert_base_forward.15} parent=72 // loop_footer
                %s270 = sadd.s32 1, %s266
              $region79: #{bert_base_forward.15} parent=72 // loop_footer_branch
                %265 = sbr.rel target = $region75
              $region80: #{bert_base_forward.15} parent=72 // loop_exit
                _
            $region73: #{bert_base_forward.15} parent=64 // pred_fallthru
              _
          $region65: #{bert_base_forward.15} parent=60 // pred_fallthru
            _
          %300 = vnop
        $region61: #{bert_base_forward.15} parent=15 // pred_fallthru
          _
        // Predicated region
        $region99: #{bert_base_forward.15} parent=15 // pred_check
          %p301 = pneg %p107
        $region100: #{bert_base_forward.15} parent=15 // pred_check_branch
          %303 = sbr.rel (%p301) target = $region102
        $region101: #{bert_base_forward.15} parent=15 // pred_region
          %s304 = sand.u32 %s97, 1
          %s305 = sand.u32 %s97, 1
          %s306 = smul.addr %s305, 8
          %s307 = scalar_lea.vmem [#allocation7], %s306
          %s308 = smul.u32 2, %s19
          %s309 = smul.addr %s308, 3
          %s310 = sadd.s32 2, %s309
          %s311 = smul.addr %s17, 6
          %s312 = sadd.s32 %s310, %s311
          %s313 = smul.addr %s312, 4
          %s314 = scalar_lea.vmem %s2, %s313
          // Predicated region
          $region103: #{bert_base_forward.15} parent=101 // pred_check
            _
          $region104: #{bert_base_forward.15} parent=101 // pred_check_branch
            %316 = sbr.rel (0) target = $region106
          $region105: #{bert_base_forward.15} parent=101 // pred_region
            // Predicated region
            $region107: #{bert_base_forward.15} parent=105 // pred_check
              _
            $region108: #{bert_base_forward.15} parent=105 // pred_check_branch
              %318 = sbr.rel target = $region110
            $region109: #{bert_base_forward.15} parent=105 // pred_region
              // Predicated region
              $region122: #{bert_base_forward.15} parent=109 // pred_check
                _
              $region123: #{bert_base_forward.15} parent=109 // pred_check_branch
                %335 = sbr.rel (0) target = $region125
              $region124: #{bert_base_forward.15} parent=109 // pred_region
                loop: start=0, step=1, limit=1
                $region126: #{bert_base_forward.15} parent=124 // loop_pre_header
                  _
                $region127: #{bert_base_forward.15} parent=124 // loop_header
                  %s337 = sphi 0, %s341
                  %p338 = scmp.ge.s32.totalorder %s337, 1
                  %s342 = sphi %s314, %s314
                  %s343 = sphi %s307, %s307
                $region128: #{bert_base_forward.15} parent=124 // loop_header_branch
                  %340 = sbr.rel (%p338) target = $region132
                $region129: #{bert_base_forward.15} parent=124 // loop_body
                  _
                $region130: #{bert_base_forward.15} parent=124 // loop_footer
                  %s341 = sadd.s32 1, %s337
                $region131: #{bert_base_forward.15} parent=124 // loop_footer_branch
                  %336 = sbr.rel target = $region127
                $region132: #{bert_base_forward.15} parent=124 // loop_exit
                  _
                loop: start=0, step=1, limit=1
                $region133: #{bert_base_forward.15} parent=124 // loop_pre_header
                  _
                $region134: #{bert_base_forward.15} parent=124 // loop_header
                  %s346 = sphi 0, %s350
                  %p347 = scmp.ge.s32.totalorder %s346, 1
                  %s351 = sphi %s314, %s314
                  %s352 = sphi %s307, %s307
                $region135: #{bert_base_forward.15} parent=124 // loop_header_branch
                  %349 = sbr.rel (%p347) target = $region139
                $region136: #{bert_base_forward.15} parent=124 // loop_body
                  %v353 = vld [vmem:[%s351] sm:$0xf]
                  %354 = vst [vmem:[%s352] sm:$0xf] %v353
                  %v355 = vld [vmem:[%s351 + $0xc] sm:$0xf]
                  %356 = vst [vmem:[%s352 + $0x4] sm:$0xf] %v355
                $region137: #{bert_base_forward.15} parent=124 // loop_footer
                  %s350 = sadd.s32 1, %s346
                $region138: #{bert_base_forward.15} parent=124 // loop_footer_branch
                  %345 = sbr.rel target = $region134
                $region139: #{bert_base_forward.15} parent=124 // loop_exit
                  _
              $region125: #{bert_base_forward.15} parent=109 // pred_fallthru
                _
            $region110: #{bert_base_forward.15} parent=105 // pred_fallthru
              _
            // Predicated region
            $region111: #{bert_base_forward.15} parent=105 // pred_check
              _
            $region112: #{bert_base_forward.15} parent=105 // pred_check_branch
              %320 = sbr.rel (0) target = $region114
            $region113: #{bert_base_forward.15} parent=105 // pred_region
              loop: start=0, step=1, limit=1
              $region115: #{bert_base_forward.15} parent=113 // loop_pre_header
                _
              $region116: #{bert_base_forward.15} parent=113 // loop_header
                %s323 = sphi 0, %s327
                %p324 = scmp.ge.s32.totalorder %s323, 1
                %s328 = sphi %s314, %s314
                %s329 = sphi %s307, %s307
              $region117: #{bert_base_forward.15} parent=113 // loop_header_branch
                %326 = sbr.rel (%p324) target = $region121
              $region118: #{bert_base_forward.15} parent=113 // loop_body
                %v330 = vld [vmem:[%s328] sm:$0xf]
                %331 = vst [vmem:[%s329] sm:$0xf] %v330
                %v332 = vld [vmem:[%s328 + $0xc] sm:$0xf]
                %333 = vst [vmem:[%s329 + $0x4] sm:$0xf] %v332
              $region119: #{bert_base_forward.15} parent=113 // loop_footer
                %s327 = sadd.s32 1, %s323
              $region120: #{bert_base_forward.15} parent=113 // loop_footer_branch
                %322 = sbr.rel target = $region116
              $region121: #{bert_base_forward.15} parent=113 // loop_exit
                _
            $region114: #{bert_base_forward.15} parent=105 // pred_fallthru
              _
          $region106: #{bert_base_forward.15} parent=101 // pred_fallthru
            _
          %357 = vnop
        $region102: #{bert_base_forward.15} parent=15 // pred_fallthru
          _
        // Predicated region
        $region140: #{bert_base_forward.15} parent=15 // pred_check
          %p358 = pneg %p135
        $region141: #{bert_base_forward.15} parent=15 // pred_check_branch
          %360 = sbr.rel (%p358) target = $region143
        $region142: #{bert_base_forward.15} parent=15 // pred_region
          %p361 = scmp.lt.s32.totalorder %s17, 1
          %s362 = scalar_select %p361, %s17, 1
          %p363 = scmp.lt.s32.totalorder %s19, 0
          %s364 = scalar_select %p363, %s19, 0
          %s365 = sadd.s32 %s364, %s362
          %s366 = scalar_lea.vmem %s3, %s365
        $region143: #{bert_base_forward.15} parent=15 // pred_fallthru
          _
      $region16: #{bert_base_forward.15} parent=5 // pred_fallthru
        _
      %p367 = scmp.le.s32.totalorder 1, %s10
      %p368 = scmp.lt.s32.totalorder %s10, 3
      %p369 = pnand %p367, %p368
      %p370 = pneg %p369
      // Predicated region
      $region144: #{bert_base_forward.15} parent=5 // pred_check
        _
      $region145: #{bert_base_forward.15} parent=5 // pred_check_branch
        %372 = sbr.rel (%p369) target = $region147
      $region146: #{bert_base_forward.15} parent=5 // pred_region
        %s373 = ssub.s32 %s10, 1
        %s374 = sand.u32 %s44, 1
        %s375 = sand.u32 %s44, 1
        %s376 = smul.addr %s375, 8
        %s377 = scalar_lea.vmem [#allocation5], %s376
        // Predicated region
        $region148: #{bert_base_forward.15} parent=146 // pred_check
          %p378 = pneg %p57
        $region149: #{bert_base_forward.15} parent=146 // pred_check_branch
          %380 = sbr.rel (%p378) target = $region151
        $region150: #{bert_base_forward.15} parent=146 // pred_region
          _
        $region151: #{bert_base_forward.15} parent=146 // pred_fallthru
          _
        %s381 = sand.u32 %s72, 1
        %s382 = sand.u32 %s72, 1
        %s383 = smul.addr %s382, 8
        %s384 = scalar_lea.vmem [#allocation6], %s383
        // Predicated region
        $region152: #{bert_base_forward.15} parent=146 // pred_check
          %p385 = pneg %p85
        $region153: #{bert_base_forward.15} parent=146 // pred_check_branch
          %387 = sbr.rel (%p385) target = $region155
        $region154: #{bert_base_forward.15} parent=146 // pred_region
          _
        $region155: #{bert_base_forward.15} parent=146 // pred_fallthru
          _
        %s388 = sand.u32 %s100, 1
        %s389 = sand.u32 %s100, 1
        %s390 = smul.addr %s389, 8
        %s391 = scalar_lea.vmem [#allocation7], %s390
        // Predicated region
        $region156: #{bert_base_forward.15} parent=146 // pred_check
          %p392 = pneg %p113
        $region157: #{bert_base_forward.15} parent=146 // pred_check_branch
          %394 = sbr.rel (%p392) target = $region159
        $region158: #{bert_base_forward.15} parent=146 // pred_region
          _
        $region159: #{bert_base_forward.15} parent=146 // pred_fallthru
          _
        %s395 = sand.u32 %s44, 1
        %s396 = sand.u32 %s44, 1
        %s397 = smul.addr %s396, 8
        %s398 = scalar_lea.vmem [#allocation5], %s397
        %p399 = pneg %p57
        %p400 = pneg %p54
        %s401 = sand.u32 %s72, 1
        %s402 = sand.u32 %s72, 1
        %s403 = smul.addr %s402, 8
        %s404 = scalar_lea.vmem [#allocation6], %s403
        %p405 = pneg %p85
        %p406 = pneg %p82
        %s407 = sand.u32 %s100, 1
        %s408 = sand.u32 %s100, 1
        %s409 = smul.addr %s408, 8
        %s410 = scalar_lea.vmem [#allocation7], %s409
        %p411 = pneg %p113
        %p412 = pneg %p110
        %p413 = scmp.lt.s32.totalorder %s20, 1
        %s414 = scalar_select %p413, %s20, 1
        %p415 = scmp.lt.s32.totalorder %s22, 0
        %s416 = scalar_select %p415, %s22, 0
        %s417 = sadd.s32 %s416, %s414
        %s418 = scalar_lea.vmem %s3, %s417
        %p419 = pneg %p141
        %p420 = pneg %p138
        %p421 = pneg %p169
        %p422 = pneg %p166
        %s423 = smul.u32 2, %s21
        %p424 = scmp.lt.s32.totalorder %s20, 1
        %s425 = scalar_select %p424, %s20, 1
        %p426 = scmp.lt.s32.totalorder %s423, 1
        %s427 = scalar_select %p426, %s423, 1
        %s428 = smul.addr %s425, 2
        %s429 = sadd.s32 %s427, %s428
        %s430 = smul.addr %s429, 4
        %s431 = scalar_lea.vmem %s4, %s430
        %s432 = smul.u32 2, %s21
        %s433 = smul.u32 2, %s22
        %s434 = smul.u32 2, %s22
        %p435 = scmp.lt.s32.totalorder %s20, 1
        %s436 = scalar_select %p435, %s20, 1
        %p437 = scmp.lt.s32.totalorder %s22, 0
        %s438 = scalar_select %p437, %s22, 0
        %s439 = sadd.s32 %s438, %s436
        %s440 = scalar_lea.vmem %s3, %s439
        %s441 = smul.u32 2, %s21
        %p442 = scmp.lt.s32.totalorder %s20, 1
        %s443 = scalar_select %p442, %s20, 1
        %p444 = scmp.lt.s32.totalorder %s441, 1
        %s445 = scalar_select %p444, %s441, 1
        %s446 = smul.addr %s443, 2
        %s447 = sadd.s32 %s445, %s446
        %s448 = smul.addr %s447, 4
        %s449 = scalar_lea.vmem %s4, %s448
        %s450 = smul.u32 2, %s21
        %p452 = scmp.eq.s32.totalorder %s22, 0
        // Predicated region
        $region160: #{bert_base_forward.15} parent=146 // pred_check
          %p453 = pneg %p452
        $region161: #{bert_base_forward.15} parent=146 // pred_check_branch
          %455 = sbr.rel (%p453) target = $region163
        $region162: #{bert_base_forward.15} parent=146 // pred_region
          %vm456 = vcmask 7168
          %457 = vst.msk [vmem:[#allocation2] sm:$0xff] %vm456, -inf
          %458 = vst.msk [vmem:[#allocation2 + $0x8] sm:$0xff] %vm456, -inf
          %459 = vst.msk [vmem:[#allocation2 + $0x10] sm:$0xff] %vm456, -inf
          %460 = vst.msk [vmem:[#allocation2 + $0x18] sm:$0xff] %vm456, -inf
          %461 = vst.msk [vmem:[#allocation2 + $0x20] sm:$0xff] %vm456, -inf
          %462 = vst.msk [vmem:[#allocation2 + $0x28] sm:$0xff] %vm456, -inf
          %463 = vst.msk [vmem:[#allocation2 + $0x30] sm:$0xff] %vm456, -inf
          %464 = vst.msk [vmem:[#allocation2 + $0x38] sm:$0xff] %vm456, -inf
          %465 = vst.msk [vmem:[#allocation3] sm:$0xff] %vm456, 0.0
          %466 = vst.msk [vmem:[#allocation3 + $0x8] sm:$0xff] %vm456, 0.0
          %467 = vst.msk [vmem:[#allocation3 + $0x10] sm:$0xff] %vm456, 0.0
          %468 = vst.msk [vmem:[#allocation3 + $0x18] sm:$0xff] %vm456, 0.0
          %469 = vst.msk [vmem:[#allocation3 + $0x20] sm:$0xff] %vm456, 0.0
          %470 = vst.msk [vmem:[#allocation3 + $0x28] sm:$0xff] %vm456, 0.0
          %471 = vst.msk [vmem:[#allocation3 + $0x30] sm:$0xff] %vm456, 0.0
          %472 = vst.msk [vmem:[#allocation3 + $0x38] sm:$0xff] %vm456, 0.0
          %vm473 = vcmask 261120
          %474 = vst.msk [vmem:[#allocation4] sm:$0xff] %vm473, 0.0
          %475 = vst.msk [vmem:[#allocation4 + $0x8] sm:$0xff] %vm473, 0.0
          %476 = vst.msk [vmem:[#allocation4 + $0x10] sm:$0xff] %vm473, 0.0
          %477 = vst.msk [vmem:[#allocation4 + $0x18] sm:$0xff] %vm473, 0.0
          %478 = vst.msk [vmem:[#allocation4 + $0x20] sm:$0xff] %vm473, 0.0
          %479 = vst.msk [vmem:[#allocation4 + $0x28] sm:$0xff] %vm473, 0.0
          %480 = vst.msk [vmem:[#allocation4 + $0x30] sm:$0xff] %vm473, 0.0
          %481 = vst.msk [vmem:[#allocation4 + $0x38] sm:$0xff] %vm473, 0.0
        $region163: #{bert_base_forward.15} parent=146 // pred_fallthru
          _
        %v482 = vld [vmem:[%s377] sm:$0xf]
        %v483 = vld [vmem:[%s377 + $0x4] sm:$0xf]
        %v484 = vld [vmem:[%s384] sm:$0xf]
        %v485 = vld [vmem:[%s384 + $0x4] sm:$0xf]
        %v486 = vld [vmem:[%s391] sm:$0xf]
        %v487 = vld [vmem:[%s391 + $0x4] sm:$0xf]
        %v488 = vld [vmem:[%s440] sm:$0x1]
        %v491 = vunpack.c.l.b16 %v482
        %v492 = vunpack.c.l.b16 %v483
        %v493 = vpack.c.b16 %v492, %v491
        %v496 = vunpack.c.l.b16 %v484
        %v497 = vunpack.c.l.b16 %v485
        %v498 = vpack.c.b16 %v497, %v496
        %vm499 = vcmask 261120
        %v501 = vsel %vm499, %v493, 0
        %v504 = vsel %vm499, %v498, 0
        %506 = vmatprep.subr.bf16.mxu0 0
        %507 = vmatpush1.bf16.xpose.msra.mxu0 %v504
        %508 = vmatprep.subr.bf16.mxu0 0
        %509 = vmatpush1.bf16.xpose.msra.mxu0 0
        %510 = vmatprep.subr.bf16.mxu0 0
        %511 = vmatpush1.bf16.xpose.msra.mxu0 0
        %512 = vmatprep.subr.bf16.mxu0 0
        %513 = vmatpush1.bf16.xpose.msra.mxu0 0
        %514 = vmatprep.subr.bf16.mxu0 0
        %515 = vmatpush1.bf16.xpose.msra.mxu0 0
        %516 = vmatprep.subr.bf16.mxu0 0
        %517 = vmatpush1.bf16.xpose.msra.mxu0 0
        %518 = vmatprep.subr.bf16.mxu0 0
        %519 = vmatpush1.bf16.xpose.msra.mxu0 0
        %520 = vmatprep.subr.bf16.mxu0 0
        %521 = vmatpush1.bf16.xpose.msra.mxu0 0
        %522 = vmatprep.subr.bf16.mxu0 0
        %523 = vmatpush1.bf16.xpose.msra.mxu0 0
        %524 = vmatprep.subr.bf16.mxu0 0
        %525 = vmatpush1.bf16.xpose.msra.mxu0 0
        %526 = vmatprep.subr.bf16.mxu0 0
        %527 = vmatpush1.bf16.xpose.msra.mxu0 0
        %528 = vmatprep.subr.bf16.mxu0 0
        %529 = vmatpush1.bf16.xpose.msra.mxu0 0
        %530 = vmatprep.subr.bf16.mxu0 0
        %531 = vmatpush1.bf16.xpose.msra.mxu0 0
        %532 = vmatprep.subr.bf16.mxu0 0
        %533 = vmatpush1.bf16.xpose.msra.mxu0 0
        %534 = vmatprep.subr.bf16.mxu0 0
        %535 = vmatpush1.bf16.xpose.msra.mxu0 0
        %536 = vmatprep.subr.bf16.mxu0 0
        %537 = vmatpush1.bf16.xpose.msra.mxu0 0
        %538 = vmatprep.mubr.bf16.mxu0 0
        %539 = vmatmul.mubr.bf16.gmra.mrb[0].mxu0 %v501
        %v540 = vpop.f32.mrb[0].mxu0
        %v541 = vadd.f32 0.0, %v540
        %v542 = vpop.f32.mrb[0].mxu0
        %v543 = vpop.f32.mrb[0].mxu0
        %v544 = vadd.f32 0.0, %v543
        %v545 = vpop.f32.mrb[0].mxu0
        %546 = vdwg.mxu0
        %v547 = vmul.f32 %v541, 0.17677669
        %v548 = vmul.f32 %v544, 0.17677669
        %v550 = vlaneseq
        %v551 = vshrl.u32 %v550, 7
        %v552 = vsub.s32 0, %v551
        %v553 = vrot.slane %v488, %v552
        %v555 = vadd.f32 %v547, %v553
        %v556 = vadd.f32 %v548, %v553
        %v557 = vld [vmem:[#allocation2] sm:$0xff]
        %v558 = vld [vmem:[#allocation2 + $0x8] sm:$0xff]
        %vm559 = vcmask 130048
        %v560 = vsel %vm559, %v555, -inf
        %561 = vmax.xlane.f32.xlu0 %v560
        %v562 = vpop.xlane.xlu0 %561
        %v563 = vsel %vm559, %v556, -inf
        %564 = vmax.xlane.f32.xlu0 %v563
        %v565 = vpop.xlane.xlu0 %564
        %v566 = vmax.f32 %v557, %v562
        %v567 = vmax.f32 %v558, %v565
        %v568 = vsub.f32 %v557, %v566
        %v569 = vsub.f32 %v558, %v567
        %v570 = vmul.f32 %v568, 1.442695
        %v571 = vpow.pop %v570
        %v572 = vmul.f32 %v569, 1.442695
        %v573 = vpow.pop %v572
        %575 = vset.pattern.permute.xlu0 0
        %576 = vperm.xlu0 %575, %v566
        %v577 = vpop.permute.xlu0 %576
        %580 = vset.pattern.permute.xlu0 0
        %581 = vperm.xlu0 %580, %v567
        %v582 = vpop.permute.xlu0 %581
        %v584 = vsub.f32 %v555, %v577
        %v585 = vsub.f32 %v556, %v582
        %v586 = vmul.f32 %v584, 1.442695
        %v587 = vpow.pop %v586
        %v588 = vmul.f32 %v585, 1.442695
        %v589 = vpow.pop %v588
        %v590 = vld [vmem:[#allocation3] sm:$0xff]
        %v591 = vld [vmem:[#allocation3 + $0x8] sm:$0xff]
        %v592 = vmul.f32 %v571, %v590
        %v593 = vmul.f32 %v573, %v591
        %v594 = vsel %vm559, %v587, 0.0
        %595 = vadd.xlane.f32.xlu0 %v594
        %v596 = vpop.xlane.xlu0 %595
        %v597 = vsel %vm559, %v589, 0.0
        %598 = vadd.xlane.f32.xlu0 %v597
        %v599 = vpop.xlane.xlu0 %598
        %v600 = vadd.f32 %v592, %v596
        %v601 = vadd.f32 %v593, %v599
        %vm602 = vcmask 7168
        %603 = vst.msk [vmem:[#allocation3] sm:$0xff] %vm602, %v600
        %604 = vst.msk [vmem:[#allocation3 + $0x8] sm:$0xff] %vm602, %v601
        %v605 = vld [vmem:[#allocation4] sm:$0xff]
        %v606 = vld [vmem:[#allocation4 + $0x8] sm:$0xff]
        %608 = vset.pattern.permute.xlu0 0
        %609 = vperm.xlu0 %608, %v571
        %v610 = vpop.permute.xlu0 %609
        %613 = vset.pattern.permute.xlu0 0
        %614 = vperm.xlu0 %613, %v573
        %v615 = vpop.permute.xlu0 %614
        %v617 = vmul.f32 %v610, %v605
        %v618 = vmul.f32 %v615, %v606
        %v619 = vpack.c.bf16 %v589, %v587
        %v622 = vunpack.c.l.b16 %v486
        %v623 = vunpack.c.l.b16 %v487
        %v624 = vpack.c.b16 %v623, %v622
        %v627 = vsel %vm559, %v619, 0
        %629 = vmatprep.subr.bf16.mxu0 0
        %630 = vmatpush1.bf16.msra.mxu0 %v624
        %631 = vmatprep.subr.bf16.mxu0 0
        %632 = vmatpush1.bf16.msra.mxu0 0
        %633 = vmatprep.subr.bf16.mxu0 0
        %634 = vmatpush1.bf16.msra.mxu0 0
        %635 = vmatprep.subr.bf16.mxu0 0
        %636 = vmatpush1.bf16.msra.mxu0 0
        %637 = vmatprep.subr.bf16.mxu0 0
        %638 = vmatpush1.bf16.msra.mxu0 0
        %639 = vmatprep.subr.bf16.mxu0 0
        %640 = vmatpush1.bf16.msra.mxu0 0
        %641 = vmatprep.subr.bf16.mxu0 0
        %642 = vmatpush1.bf16.msra.mxu0 0
        %643 = vmatprep.subr.bf16.mxu0 0
        %644 = vmatpush1.bf16.msra.mxu0 0
        %645 = vmatprep.subr.bf16.mxu0 0
        %646 = vmatpush1.bf16.msra.mxu0 0
        %647 = vmatprep.subr.bf16.mxu0 0
        %648 = vmatpush1.bf16.msra.mxu0 0
        %649 = vmatprep.subr.bf16.mxu0 0
        %650 = vmatpush1.bf16.msra.mxu0 0
        %651 = vmatprep.subr.bf16.mxu0 0
        %652 = vmatpush1.bf16.msra.mxu0 0
        %653 = vmatprep.subr.bf16.mxu0 0
        %654 = vmatpush1.bf16.msra.mxu0 0
        %655 = vmatprep.subr.bf16.mxu0 0
        %656 = vmatpush1.bf16.msra.mxu0 0
        %657 = vmatprep.subr.bf16.mxu0 0
        %658 = vmatpush1.bf16.msra.mxu0 0
        %659 = vmatprep.subr.bf16.mxu0 0
        %660 = vmatpush1.bf16.msra.mxu0 0
        %661 = vmatprep.mubr.bf16.mxu0 0
        %662 = vmatmul.mubr.bf16.gmra.mrb[0].mxu0 %v627
        %v663 = vpop.f32.mrb[0].mxu0
        %v664 = vadd.f32 0.0, %v663
        %v665 = vpop.f32.mrb[0].mxu0
        %v666 = vpop.f32.mrb[0].mxu0
        %v667 = vadd.f32 0.0, %v666
        %v668 = vpop.f32.mrb[0].mxu0
        %669 = vdwg.mxu0
        %v670 = vadd.f32 %v617, %v664
        %v671 = vadd.f32 %v618, %v667
        %672 = vst.msk [vmem:[#allocation4] sm:$0xff] %vm499, %v670
        %673 = vst.msk [vmem:[#allocation4 + $0x8] sm:$0xff] %vm499, %v671
        %674 = vst.msk [vmem:[#allocation2] sm:$0xff] %vm602, %v566
        %675 = vst.msk [vmem:[#allocation2 + $0x8] sm:$0xff] %vm602, %v567
        %676 = vrot.lane.b32.xlu0 %v493, 96
        %v677 = vpop.permute.xlu0 %676
        %678 = vrot.lane.b32.xlu0 %v498, 96
        %v679 = vpop.permute.xlu0 %678
        %v681 = vsel %vm499, %v677, 0
        %v684 = vsel %vm499, %v679, 0
        %686 = vmatprep.subr.bf16.mxu0 0
        %687 = vmatpush1.bf16.xpose.msra.mxu0 %v684
        %688 = vmatprep.subr.bf16.mxu0 0
        %689 = vmatpush1.bf16.xpose.msra.mxu0 0
        %690 = vmatprep.subr.bf16.mxu0 0
        %691 = vmatpush1.bf16.xpose.msra.mxu0 0
        %692 = vmatprep.subr.bf16.mxu0 0
        %693 = vmatpush1.bf16.xpose.msra.mxu0 0
        %694 = vmatprep.subr.bf16.mxu0 0
        %695 = vmatpush1.bf16.xpose.msra.mxu0 0
        %696 = vmatprep.subr.bf16.mxu0 0
        %697 = vmatpush1.bf16.xpose.msra.mxu0 0
        %698 = vmatprep.subr.bf16.mxu0 0
        %699 = vmatpush1.bf16.xpose.msra.mxu0 0
        %700 = vmatprep.subr.bf16.mxu0 0
        %701 = vmatpush1.bf16.xpose.msra.mxu0 0
        %702 = vmatprep.subr.bf16.mxu0 0
        %703 = vmatpush1.bf16.xpose.msra.mxu0 0
        %704 = vmatprep.subr.bf16.mxu0 0
        %705 = vmatpush1.bf16.xpose.msra.mxu0 0
        %706 = vmatprep.subr.bf16.mxu0 0
        %707 = vmatpush1.bf16.xpose.msra.mxu0 0
        %708 = vmatprep.subr.bf16.mxu0 0
        %709 = vmatpush1.bf16.xpose.msra.mxu0 0
        %710 = vmatprep.subr.bf16.mxu0 0
        %711 = vmatpush1.bf16.xpose.msra.mxu0 0
        %712 = vmatprep.subr.bf16.mxu0 0
        %713 = vmatpush1.bf16.xpose.msra.mxu0 0
        %714 = vmatprep.subr.bf16.mxu0 0
        %715 = vmatpush1.bf16.xpose.msra.mxu0 0
        %716 = vmatprep.subr.bf16.mxu0 0
        %717 = vmatpush1.bf16.xpose.msra.mxu0 0
        %718 = vmatprep.mubr.bf16.mxu0 0
        %719 = vmatmul.mubr.bf16.gmra.mrb[0].mxu0 %v681
        %v720 = vpop.f32.mrb[0].mxu0
        %v721 = vadd.f32 0.0, %v720
        %v722 = vpop.f32.mrb[0].mxu0
        %v723 = vpop.f32.mrb[0].mxu0
        %v724 = vadd.f32 0.0, %v723
        %v725 = vpop.f32.mrb[0].mxu0
        %726 = vdwg.mxu0
        %v727 = vmul.f32 %v721, 0.17677669
        %v728 = vmul.f32 %v724, 0.17677669
        %v729 = vadd.f32 %v727, %v553
        %v730 = vadd.f32 %v728, %v553
        %s731 = scalar_lea.vmem [#allocation2], 16
        %v732 = vld [vmem:[%s731] sm:$0xff]
        %v733 = vld [vmem:[%s731 + $0x8] sm:$0xff]
        %v734 = vsel %vm559, %v729, -inf
        %735 = vmax.xlane.f32.xlu0 %v734
        %v736 = vpop.xlane.xlu0 %735
        %v737 = vsel %vm559, %v730, -inf
        %738 = vmax.xlane.f32.xlu0 %v737
        %v739 = vpop.xlane.xlu0 %738
        %v740 = vmax.f32 %v732, %v736
        %v741 = vmax.f32 %v733, %v739
        %v742 = vsub.f32 %v732, %v740
        %v743 = vsub.f32 %v733, %v741
        %v744 = vmul.f32 %v742, 1.442695
        %v745 = vpow.pop %v744
        %v746 = vmul.f32 %v743, 1.442695
        %v747 = vpow.pop %v746
        %749 = vset.pattern.permute.xlu0 0
        %750 = vperm.xlu0 %749, %v740
        %v751 = vpop.permute.xlu0 %750
        %754 = vset.pattern.permute.xlu0 0
        %755 = vperm.xlu0 %754, %v741
        %v756 = vpop.permute.xlu0 %755
        %v758 = vsub.f32 %v729, %v751
        %v759 = vsub.f32 %v730, %v756
        %v760 = vmul.f32 %v758, 1.442695
        %v761 = vpow.pop %v760
        %v762 = vmul.f32 %v759, 1.442695
        %v763 = vpow.pop %v762
        %s764 = scalar_lea.vmem [#allocation3], 16
        %v765 = vld [vmem:[%s764] sm:$0xff]
        %v766 = vld [vmem:[%s764 + $0x8] sm:$0xff]
        %v767 = vmul.f32 %v745, %v765
        %v768 = vmul.f32 %v747, %v766
        %v769 = vsel %vm559, %v761, 0.0
        %770 = vadd.xlane.f32.xlu0 %v769
        %v771 = vpop.xlane.xlu0 %770
        %v772 = vsel %vm559, %v763, 0.0
        %773 = vadd.xlane.f32.xlu0 %v772
        %v774 = vpop.xlane.xlu0 %773
        %v775 = vadd.f32 %v767, %v771
        %v776 = vadd.f32 %v768, %v774
        %777 = vst.msk [vmem:[%s764] sm:$0xff] %vm602, %v775
        %778 = vst.msk [vmem:[%s764 + $0x8] sm:$0xff] %vm602, %v776
        %s779 = scalar_lea.vmem [#allocation4], 16
        %v780 = vld [vmem:[%s779] sm:$0xff]
        %v781 = vld [vmem:[%s779 + $0x8] sm:$0xff]
        %783 = vset.pattern.permute.xlu0 0
        %784 = vperm.xlu0 %783, %v745
        %v785 = vpop.permute.xlu0 %784
        %788 = vset.pattern.permute.xlu0 0
        %789 = vperm.xlu0 %788, %v747
        %v790 = vpop.permute.xlu0 %789
        %v792 = vmul.f32 %v785, %v780
        %v793 = vmul.f32 %v790, %v781
        %v794 = vpack.c.bf16 %v763, %v761
        %795 = vrot.lane.b32.xlu0 %v624, 96
        %v796 = vpop.permute.xlu0 %795
        %v799 = vsel %vm559, %v794, 0
        %801 = vmatprep.subr.bf16.mxu0 0
        %802 = vmatpush1.bf16.msra.mxu0 %v796
        %803 = vmatprep.subr.bf16.mxu0 0
        %804 = vmatpush1.bf16.msra.mxu0 0
        %805 = vmatprep.subr.bf16.mxu0 0
        %806 = vmatpush1.bf16.msra.mxu0 0
        %807 = vmatprep.subr.bf16.mxu0 0
        %808 = vmatpush1.bf16.msra.mxu0 0
        %809 = vmatprep.subr.bf16.mxu0 0
        %810 = vmatpush1.bf16.msra.mxu0 0
        %811 = vmatprep.subr.bf16.mxu0 0
        %812 = vmatpush1.bf16.msra.mxu0 0
        %813 = vmatprep.subr.bf16.mxu0 0
        %814 = vmatpush1.bf16.msra.mxu0 0
        %815 = vmatprep.subr.bf16.mxu0 0
        %816 = vmatpush1.bf16.msra.mxu0 0
        %817 = vmatprep.subr.bf16.mxu0 0
        %818 = vmatpush1.bf16.msra.mxu0 0
        %819 = vmatprep.subr.bf16.mxu0 0
        %820 = vmatpush1.bf16.msra.mxu0 0
        %821 = vmatprep.subr.bf16.mxu0 0
        %822 = vmatpush1.bf16.msra.mxu0 0
        %823 = vmatprep.subr.bf16.mxu0 0
        %824 = vmatpush1.bf16.msra.mxu0 0
        %825 = vmatprep.subr.bf16.mxu0 0
        %826 = vmatpush1.bf16.msra.mxu0 0
        %827 = vmatprep.subr.bf16.mxu0 0
        %828 = vmatpush1.bf16.msra.mxu0 0
        %829 = vmatprep.subr.bf16.mxu0 0
        %830 = vmatpush1.bf16.msra.mxu0 0
        %831 = vmatprep.subr.bf16.mxu0 0
        %832 = vmatpush1.bf16.msra.mxu0 0
        %833 = vmatprep.mubr.bf16.mxu0 0
        %834 = vmatmul.mubr.bf16.gmra.mrb[0].mxu0 %v799
        %v835 = vpop.f32.mrb[0].mxu0
        %v836 = vadd.f32 0.0, %v835
        %v837 = vpop.f32.mrb[0].mxu0
        %v838 = vpop.f32.mrb[0].mxu0
        %v839 = vadd.f32 0.0, %v838
        %v840 = vpop.f32.mrb[0].mxu0
        %841 = vdwg.mxu0
        %v842 = vadd.f32 %v792, %v836
        %v843 = vadd.f32 %v793, %v839
        %844 = vst.msk [vmem:[%s779] sm:$0xff] %vm499, %v842
        %845 = vst.msk [vmem:[%s779 + $0x8] sm:$0xff] %vm499, %v843
        %846 = vst.msk [vmem:[%s731] sm:$0xff] %vm602, %v740
        %847 = vst.msk [vmem:[%s731 + $0x8] sm:$0xff] %vm602, %v741
        %848 = vrot.lane.b32.xlu0 %v493, 64
        %v849 = vpop.permute.xlu0 %848
        %850 = vrot.lane.b32.xlu0 %v498, 64
        %v851 = vpop.permute.xlu0 %850
        %v853 = vsel %vm499, %v849, 0
        %v856 = vsel %vm499, %v851, 0
        %858 = vmatprep.subr.bf16.mxu0 0
        %859 = vmatpush1.bf16.xpose.msra.mxu0 %v856
        %860 = vmatprep.subr.bf16.mxu0 0
        %861 = vmatpush1.bf16.xpose.msra.mxu0 0
        %862 = vmatprep.subr.bf16.mxu0 0
        %863 = vmatpush1.bf16.xpose.msra.mxu0 0
        %864 = vmatprep.subr.bf16.mxu0 0
        %865 = vmatpush1.bf16.xpose.msra.mxu0 0
        %866 = vmatprep.subr.bf16.mxu0 0
        %867 = vmatpush1.bf16.xpose.msra.mxu0 0
        %868 = vmatprep.subr.bf16.mxu0 0
        %869 = vmatpush1.bf16.xpose.msra.mxu0 0
        %870 = vmatprep.subr.bf16.mxu0 0
        %871 = vmatpush1.bf16.xpose.msra.mxu0 0
        %872 = vmatprep.subr.bf16.mxu0 0
        %873 = vmatpush1.bf16.xpose.msra.mxu0 0
        %874 = vmatprep.subr.bf16.mxu0 0
        %875 = vmatpush1.bf16.xpose.msra.mxu0 0
        %876 = vmatprep.subr.bf16.mxu0 0
        %877 = vmatpush1.bf16.xpose.msra.mxu0 0
        %878 = vmatprep.subr.bf16.mxu0 0
        %879 = vmatpush1.bf16.xpose.msra.mxu0 0
        %880 = vmatprep.subr.bf16.mxu0 0
        %881 = vmatpush1.bf16.xpose.msra.mxu0 0
        %882 = vmatprep.subr.bf16.mxu0 0
        %883 = vmatpush1.bf16.xpose.msra.mxu0 0
        %884 = vmatprep.subr.bf16.mxu0 0
        %885 = vmatpush1.bf16.xpose.msra.mxu0 0
        %886 = vmatprep.subr.bf16.mxu0 0
        %887 = vmatpush1.bf16.xpose.msra.mxu0 0
        %888 = vmatprep.subr.bf16.mxu0 0
        %889 = vmatpush1.bf16.xpose.msra.mxu0 0
        %890 = vmatprep.mubr.bf16.mxu0 0
        %891 = vmatmul.mubr.bf16.gmra.mrb[0].mxu0 %v853
        %v892 = vpop.f32.mrb[0].mxu0
        %v893 = vadd.f32 0.0, %v892
        %v894 = vpop.f32.mrb[0].mxu0
        %v895 = vpop.f32.mrb[0].mxu0
        %v896 = vadd.f32 0.0, %v895
        %v897 = vpop.f32.mrb[0].mxu0
        %898 = vdwg.mxu0
        %v899 = vmul.f32 %v893, 0.17677669
        %v900 = vmul.f32 %v896, 0.17677669
        %v901 = vadd.f32 %v899, %v553
        %v902 = vadd.f32 %v900, %v553
        %s903 = scalar_lea.vmem [#allocation2], 32
        %v904 = vld [vmem:[%s903] sm:$0xff]
        %v905 = vld [vmem:[%s903 + $0x8] sm:$0xff]
        %v906 = vsel %vm559, %v901, -inf
        %907 = vmax.xlane.f32.xlu0 %v906
        %v908 = vpop.xlane.xlu0 %907
        %v909 = vsel %vm559, %v902, -inf
        %910 = vmax.xlane.f32.xlu0 %v909
        %v911 = vpop.xlane.xlu0 %910
        %v912 = vmax.f32 %v904, %v908
        %v913 = vmax.f32 %v905, %v911
        %v914 = vsub.f32 %v904, %v912
        %v915 = vsub.f32 %v905, %v913
        %v916 = vmul.f32 %v914, 1.442695
        %v917 = vpow.pop %v916
        %v918 = vmul.f32 %v915, 1.442695
        %v919 = vpow.pop %v918
        %921 = vset.pattern.permute.xlu0 0
        %922 = vperm.xlu0 %921, %v912
        %v923 = vpop.permute.xlu0 %922
        %926 = vset.pattern.permute.xlu0 0
        %927 = vperm.xlu0 %926, %v913
        %v928 = vpop.permute.xlu0 %927
        %v930 = vsub.f32 %v901, %v923
        %v931 = vsub.f32 %v902, %v928
        %v932 = vmul.f32 %v930, 1.442695
        %v933 = vpow.pop %v932
        %v934 = vmul.f32 %v931, 1.442695
        %v935 = vpow.pop %v934
        %s936 = scalar_lea.vmem [#allocation3], 32
        %v937 = vld [vmem:[%s936] sm:$0xff]
        %v938 = vld [vmem:[%s936 + $0x8] sm:$0xff]
        %v939 = vmul.f32 %v917, %v937
        %v940 = vmul.f32 %v919, %v938
        %v941 = vsel %vm559, %v933, 0.0
        %942 = vadd.xlane.f32.xlu0 %v941
        %v943 = vpop.xlane.xlu0 %942
        %v944 = vsel %vm559, %v935, 0.0
        %945 = vadd.xlane.f32.xlu0 %v944
        %v946 = vpop.xlane.xlu0 %945
        %v947 = vadd.f32 %v939, %v943
        %v948 = vadd.f32 %v940, %v946
        %949 = vst.msk [vmem:[%s936] sm:$0xff] %vm602, %v947
        %950 = vst.msk [vmem:[%s936 + $0x8] sm:$0xff] %vm602, %v948
        %s951 = scalar_lea.vmem [#allocation4], 32
        %v952 = vld [vmem:[%s951] sm:$0xff]
        %v953 = vld [vmem:[%s951 + $0x8] sm:$0xff]
        %955 = vset.pattern.permute.xlu0 0
        %956 = vperm.xlu0 %955, %v917
        %v957 = vpop.permute.xlu0 %956
        %960 = vset.pattern.permute.xlu0 0
        %961 = vperm.xlu0 %960, %v919
        %v962 = vpop.permute.xlu0 %961
        %v964 = vmul.f32 %v957, %v952
        %v965 = vmul.f32 %v962, %v953
        %v966 = vpack.c.bf16 %v935, %v933
        %967 = vrot.lane.b32.xlu0 %v624, 64
        %v968 = vpop.permute.xlu0 %967
        %v971 = vsel %vm559, %v966, 0
        %973 = vmatprep.subr.bf16.mxu0 0
        %974 = vmatpush1.bf16.msra.mxu0 %v968
        %975 = vmatprep.subr.bf16.mxu0 0
        %976 = vmatpush1.bf16.msra.mxu0 0
        %977 = vmatprep.subr.bf16.mxu0 0
        %978 = vmatpush1.bf16.msra.mxu0 0
        %979 = vmatprep.subr.bf16.mxu0 0
        %980 = vmatpush1.bf16.msra.mxu0 0
        %981 = vmatprep.subr.bf16.mxu0 0
        %982 = vmatpush1.bf16.msra.mxu0 0
        %983 = vmatprep.subr.bf16.mxu0 0
        %984 = vmatpush1.bf16.msra.mxu0 0
        %985 = vmatprep.subr.bf16.mxu0 0
        %986 = vmatpush1.bf16.msra.mxu0 0
        %987 = vmatprep.subr.bf16.mxu0 0
        %988 = vmatpush1.bf16.msra.mxu0 0
        %989 = vmatprep.subr.bf16.mxu0 0
        %990 = vmatpush1.bf16.msra.mxu0 0
        %991 = vmatprep.subr.bf16.mxu0 0
        %992 = vmatpush1.bf16.msra.mxu0 0
        %993 = vmatprep.subr.bf16.mxu0 0
        %994 = vmatpush1.bf16.msra.mxu0 0
        %995 = vmatprep.subr.bf16.mxu0 0
        %996 = vmatpush1.bf16.msra.mxu0 0
        %997 = vmatprep.subr.bf16.mxu0 0
        %998 = vmatpush1.bf16.msra.mxu0 0
        %999 = vmatprep.subr.bf16.mxu0 0
        %1000 = vmatpush1.bf16.msra.mxu0 0
        %1001 = vmatprep.subr.bf16.mxu0 0
        %1002 = vmatpush1.bf16.msra.mxu0 0
        %1003 = vmatprep.subr.bf16.mxu0 0
        %1004 = vmatpush1.bf16.msra.mxu0 0
        %1005 = vmatprep.mubr.bf16.mxu0 0
        %1006 = vmatmul.mubr.bf16.gmra.mrb[0].mxu0 %v971
        %v1007 = vpop.f32.mrb[0].mxu0
        %v1008 = vadd.f32 0.0, %v1007
        %v1009 = vpop.f32.mrb[0].mxu0
        %v1010 = vpop.f32.mrb[0].mxu0
        %v1011 = vadd.f32 0.0, %v1010
        %v1012 = vpop.f32.mrb[0].mxu0
        %1013 = vdwg.mxu0
        %v1014 = vadd.f32 %v964, %v1008
        %v1015 = vadd.f32 %v965, %v1011
        %1016 = vst.msk [vmem:[%s951] sm:$0xff] %vm499, %v1014
        %1017 = vst.msk [vmem:[%s951 + $0x8] sm:$0xff] %vm499, %v1015
        %1018 = vst.msk [vmem:[%s903] sm:$0xff] %vm602, %v912
        %1019 = vst.msk [vmem:[%s903 + $0x8] sm:$0xff] %vm602, %v913
        %1020 = vrot.lane.b32.xlu0 %v493, 32
        %v1021 = vpop.permute.xlu0 %1020
        %1022 = vrot.lane.b32.xlu0 %v498, 32
        %v1023 = vpop.permute.xlu0 %1022
        %v1025 = vsel %vm499, %v1021, 0
        %v1028 = vsel %vm499, %v1023, 0
        %1030 = vmatprep.subr.bf16.mxu0 0
        %1031 = vmatpush1.bf16.xpose.msra.mxu0 %v1028
        %1032 = vmatprep.subr.bf16.mxu0 0
        %1033 = vmatpush1.bf16.xpose.msra.mxu0 0
        %1034 = vmatprep.subr.bf16.mxu0 0
        %1035 = vmatpush1.bf16.xpose.msra.mxu0 0
        %1036 = vmatprep.subr.bf16.mxu0 0
        %1037 = vmatpush1.bf16.xpose.msra.mxu0 0
        %1038 = vmatprep.subr.bf16.mxu0 0
        %1039 = vmatpush1.bf16.xpose.msra.mxu0 0
        %1040 = vmatprep.subr.bf16.mxu0 0
        %1041 = vmatpush1.bf16.xpose.msra.mxu0 0
        %1042 = vmatprep.subr.bf16.mxu0 0
        %1043 = vmatpush1.bf16.xpose.msra.mxu0 0
        %1044 = vmatprep.subr.bf16.mxu0 0
        %1045 = vmatpush1.bf16.xpose.msra.mxu0 0
        %1046 = vmatprep.subr.bf16.mxu0 0
        %1047 = vmatpush1.bf16.xpose.msra.mxu0 0
        %1048 = vmatprep.subr.bf16.mxu0 0
        %1049 = vmatpush1.bf16.xpose.msra.mxu0 0
        %1050 = vmatprep.subr.bf16.mxu0 0
        %1051 = vmatpush1.bf16.xpose.msra.mxu0 0
        %1052 = vmatprep.subr.bf16.mxu0 0
        %1053 = vmatpush1.bf16.xpose.msra.mxu0 0
        %1054 = vmatprep.subr.bf16.mxu0 0
        %1055 = vmatpush1.bf16.xpose.msra.mxu0 0
        %1056 = vmatprep.subr.bf16.mxu0 0
        %1057 = vmatpush1.bf16.xpose.msra.mxu0 0
        %1058 = vmatprep.subr.bf16.mxu0 0
        %1059 = vmatpush1.bf16.xpose.msra.mxu0 0
        %1060 = vmatprep.subr.bf16.mxu0 0
        %1061 = vmatpush1.bf16.xpose.msra.mxu0 0
        %1062 = vmatprep.mubr.bf16.mxu0 0
        %1063 = vmatmul.mubr.bf16.gmra.mrb[0].mxu0 %v1025
        %v1064 = vpop.f32.mrb[0].mxu0
        %v1065 = vadd.f32 0.0, %v1064
        %v1066 = vpop.f32.mrb[0].mxu0
        %v1067 = vpop.f32.mrb[0].mxu0
        %v1068 = vadd.f32 0.0, %v1067
        %v1069 = vpop.f32.mrb[0].mxu0
        %1070 = vdwg.mxu0
        %v1071 = vmul.f32 %v1065, 0.17677669
        %v1072 = vmul.f32 %v1068, 0.17677669
        %v1073 = vadd.f32 %v1071, %v553
        %v1074 = vadd.f32 %v1072, %v553
        %s1075 = scalar_lea.vmem [#allocation2], 48
        %v1076 = vld [vmem:[%s1075] sm:$0xff]
        %v1077 = vld [vmem:[%s1075 + $0x8] sm:$0xff]
        %v1078 = vsel %vm559, %v1073, -inf
        %1079 = vmax.xlane.f32.xlu0 %v1078
        %v1080 = vpop.xlane.xlu0 %1079
        %v1081 = vsel %vm559, %v1074, -inf
        %1082 = vmax.xlane.f32.xlu0 %v1081
        %v1083 = vpop.xlane.xlu0 %1082
        %v1084 = vmax.f32 %v1076, %v1080
        %v1085 = vmax.f32 %v1077, %v1083
        %v1086 = vsub.f32 %v1076, %v1084
        %v1087 = vsub.f32 %v1077, %v1085
        %v1088 = vmul.f32 %v1086, 1.442695
        %v1089 = vpow.pop %v1088
        %v1090 = vmul.f32 %v1087, 1.442695
        %v1091 = vpow.pop %v1090
        %1093 = vset.pattern.permute.xlu0 0
        %1094 = vperm.xlu0 %1093, %v1084
        %v1095 = vpop.permute.xlu0 %1094
        %1098 = vset.pattern.permute.xlu0 0
        %1099 = vperm.xlu0 %1098, %v1085
        %v1100 = vpop.permute.xlu0 %1099
        %v1102 = vsub.f32 %v1073, %v1095
        %v1103 = vsub.f32 %v1074, %v1100
        %v1104 = vmul.f32 %v1102, 1.442695
        %v1105 = vpow.pop %v1104
        %v1106 = vmul.f32 %v1103, 1.442695
        %v1107 = vpow.pop %v1106
        %s1108 = scalar_lea.vmem [#allocation3], 48
        %v1109 = vld [vmem:[%s1108] sm:$0xff]
        %v1110 = vld [vmem:[%s1108 + $0x8] sm:$0xff]
        %v1111 = vmul.f32 %v1089, %v1109
        %v1112 = vmul.f32 %v1091, %v1110
        %v1113 = vsel %vm559, %v1105, 0.0
        %1114 = vadd.xlane.f32.xlu0 %v1113
        %v1115 = vpop.xlane.xlu0 %1114
        %v1116 = vsel %vm559, %v1107, 0.0
        %1117 = vadd.xlane.f32.xlu0 %v1116
        %v1118 = vpop.xlane.xlu0 %1117
        %v1119 = vadd.f32 %v1111, %v1115
        %v1120 = vadd.f32 %v1112, %v1118
        %1121 = vst.msk [vmem:[%s1108] sm:$0xff] %vm602, %v1119
        %1122 = vst.msk [vmem:[%s1108 + $0x8] sm:$0xff] %vm602, %v1120
        %s1123 = scalar_lea.vmem [#allocation4], 48
        %v1124 = vld [vmem:[%s1123] sm:$0xff]
        %v1125 = vld [vmem:[%s1123 + $0x8] sm:$0xff]
        %1127 = vset.pattern.permute.xlu0 0
        %1128 = vperm.xlu0 %1127, %v1089
        %v1129 = vpop.permute.xlu0 %1128
        %1132 = vset.pattern.permute.xlu0 0
        %1133 = vperm.xlu0 %1132, %v1091
        %v1134 = vpop.permute.xlu0 %1133
        %v1136 = vmul.f32 %v1129, %v1124
        %v1137 = vmul.f32 %v1134, %v1125
        %v1138 = vpack.c.bf16 %v1107, %v1105
        %1139 = vrot.lane.b32.xlu0 %v624, 32
        %v1140 = vpop.permute.xlu0 %1139
        %v1143 = vsel %vm559, %v1138, 0
        %1145 = vmatprep.subr.bf16.mxu0 0
        %1146 = vmatpush1.bf16.msra.mxu0 %v1140
        %1147 = vmatprep.subr.bf16.mxu0 0
        %1148 = vmatpush1.bf16.msra.mxu0 0
        %1149 = vmatprep.subr.bf16.mxu0 0
        %1150 = vmatpush1.bf16.msra.mxu0 0
        %1151 = vmatprep.subr.bf16.mxu0 0
        %1152 = vmatpush1.bf16.msra.mxu0 0
        %1153 = vmatprep.subr.bf16.mxu0 0
        %1154 = vmatpush1.bf16.msra.mxu0 0
        %1155 = vmatprep.subr.bf16.mxu0 0
        %1156 = vmatpush1.bf16.msra.mxu0 0
        %1157 = vmatprep.subr.bf16.mxu0 0
        %1158 = vmatpush1.bf16.msra.mxu0 0
        %1159 = vmatprep.subr.bf16.mxu0 0
        %1160 = vmatpush1.bf16.msra.mxu0 0
        %1161 = vmatprep.subr.bf16.mxu0 0
        %1162 = vmatpush1.bf16.msra.mxu0 0
        %1163 = vmatprep.subr.bf16.mxu0 0
        %1164 = vmatpush1.bf16.msra.mxu0 0
        %1165 = vmatprep.subr.bf16.mxu0 0
        %1166 = vmatpush1.bf16.msra.mxu0 0
        %1167 = vmatprep.subr.bf16.mxu0 0
        %1168 = vmatpush1.bf16.msra.mxu0 0
        %1169 = vmatprep.subr.bf16.mxu0 0
        %1170 = vmatpush1.bf16.msra.mxu0 0
        %1171 = vmatprep.subr.bf16.mxu0 0
        %1172 = vmatpush1.bf16.msra.mxu0 0
        %1173 = vmatprep.subr.bf16.mxu0 0
        %1174 = vmatpush1.bf16.msra.mxu0 0
        %1175 = vmatprep.subr.bf16.mxu0 0
        %1176 = vmatpush1.bf16.msra.mxu0 0
        %1177 = vmatprep.mubr.bf16.mxu0 0
        %1178 = vmatmul.mubr.bf16.gmra.mrb[0].mxu0 %v1143
        %v1179 = vpop.f32.mrb[0].mxu0
        %v1180 = vadd.f32 0.0, %v1179
        %v1181 = vpop.f32.mrb[0].mxu0
        %v1182 = vpop.f32.mrb[0].mxu0
        %v1183 = vadd.f32 0.0, %v1182
        %v1184 = vpop.f32.mrb[0].mxu0
        %1185 = vdwg.mxu0
        %v1186 = vadd.f32 %v1136, %v1180
        %v1187 = vadd.f32 %v1137, %v1183
        %1188 = vst.msk [vmem:[%s1123] sm:$0xff] %vm499, %v1186
        %1189 = vst.msk [vmem:[%s1123 + $0x8] sm:$0xff] %vm499, %v1187
        %1190 = vst.msk [vmem:[%s1075] sm:$0xff] %vm602, %v1084
        %1191 = vst.msk [vmem:[%s1075 + $0x8] sm:$0xff] %vm602, %v1085
        // Predicated region
        $region164: #{bert_base_forward.15} parent=146 // pred_check
          %p1192 = pneg %p452
        $region165: #{bert_base_forward.15} parent=146 // pred_check_branch
          %1194 = sbr.rel (%p1192) target = $region167
        $region166: #{bert_base_forward.15} parent=146 // pred_region
          %v1195 = vld [vmem:[#allocation3] sm:$0xff]
          %v1196 = vld [vmem:[#allocation3 + $0x8] sm:$0xff]
          %v1197 = vrcp.pop %v1195
          %v1198 = vrcp.pop %v1196
          %v1199 = vld [vmem:[#allocation4] sm:$0xff]
          %v1200 = vld [vmem:[#allocation4 + $0x8] sm:$0xff]
          %1202 = vset.pattern.permute.xlu0 0
          %1203 = vperm.xlu0 %1202, %v1197
          %v1204 = vpop.permute.xlu0 %1203
          %1207 = vset.pattern.permute.xlu0 0
          %1208 = vperm.xlu0 %1207, %v1198
          %v1209 = vpop.permute.xlu0 %1208
          %v1211 = vmul.f32 %v1199, %v1204
          %v1212 = vmul.f32 %v1200, %v1209
          %v1213 = vpack.c.bf16 %v1212, %v1211
          %v1215 = vunpack.c.l.b16 %v1213
          %v1216 = vunpack.c.h.b16 %v1213
          %v1217 = vpack.c.b16 %v1215, %v1215
          %v1218 = vpack.c.b16 %v1216, %v1216
          %vm1221 = vcmask 257024
          %1222 = vst.msk [vmem:[%s449] sm:$0xf] %vm1221, %v1217
          %1223 = vst.msk [vmem:[%s449 + $0x4] sm:$0xf] %vm1221, %v1218
          %v1224 = vld [vmem:[%s764] sm:$0xff]
          %v1225 = vld [vmem:[%s764 + $0x8] sm:$0xff]
          %v1226 = vrcp.pop %v1224
          %v1227 = vrcp.pop %v1225
          %v1228 = vld [vmem:[%s779] sm:$0xff]
          %v1229 = vld [vmem:[%s779 + $0x8] sm:$0xff]
          %1231 = vset.pattern.permute.xlu0 0
          %1232 = vperm.xlu0 %1231, %v1226
          %v1233 = vpop.permute.xlu0 %1232
          %1236 = vset.pattern.permute.xlu0 0
          %1237 = vperm.xlu0 %1236, %v1227
          %v1238 = vpop.permute.xlu0 %1237
          %v1240 = vmul.f32 %v1228, %v1233
          %v1241 = vmul.f32 %v1229, %v1238
          %v1242 = vpack.c.bf16 %v1241, %v1240
          %v1244 = vunpack.c.l.b16 %v1242
          %v1245 = vunpack.c.h.b16 %v1242
          %v1246 = vpack.c.b16 %v1244, %v1244
          %v1247 = vpack.c.b16 %v1245, %v1245
          %1248 = vrot.lane.b32.xlu0 %v1246, 32
          %v1249 = vpop.permute.xlu0 %1248
          %1250 = vrot.lane.b32.xlu0 %v1247, 32
          %v1251 = vpop.permute.xlu0 %1250
          %vm1254 = vcmask 519424
          %1255 = vst.msk [vmem:[%s449] sm:$0xf] %vm1254, %v1249
          %1256 = vst.msk [vmem:[%s449 + $0x4] sm:$0xf] %vm1254, %v1251
          %v1257 = vld [vmem:[%s936] sm:$0xff]
          %v1258 = vld [vmem:[%s936 + $0x8] sm:$0xff]
          %v1259 = vrcp.pop %v1257
          %v1260 = vrcp.pop %v1258
          %v1261 = vld [vmem:[%s951] sm:$0xff]
          %v1262 = vld [vmem:[%s951 + $0x8] sm:$0xff]
          %1264 = vset.pattern.permute.xlu0 0
          %1265 = vperm.xlu0 %1264, %v1259
          %v1266 = vpop.permute.xlu0 %1265
          %1269 = vset.pattern.permute.xlu0 0
          %1270 = vperm.xlu0 %1269, %v1260
          %v1271 = vpop.permute.xlu0 %1270
          %v1273 = vmul.f32 %v1261, %v1266
          %v1274 = vmul.f32 %v1262, %v1271
          %v1275 = vpack.c.bf16 %v1274, %v1273
          %v1277 = vunpack.c.l.b16 %v1275
          %v1278 = vunpack.c.h.b16 %v1275
          %v1279 = vpack.c.b16 %v1277, %v1277
          %v1280 = vpack.c.b16 %v1278, %v1278
          %1281 = vrot.lane.b32.xlu0 %v1279, 64
          %v1282 = vpop.permute.xlu0 %1281
          %1283 = vrot.lane.b32.xlu0 %v1280, 64
          %v1284 = vpop.permute.xlu0 %1283
          %vm1287 = vcmask 781824
          %1288 = vst.msk [vmem:[%s449] sm:$0xf] %vm1287, %v1282
          %1289 = vst.msk [vmem:[%s449 + $0x4] sm:$0xf] %vm1287, %v1284
          %v1290 = vld [vmem:[%s1108] sm:$0xff]
          %v1291 = vld [vmem:[%s1108 + $0x8] sm:$0xff]
          %v1292 = vrcp.pop %v1290
          %v1293 = vrcp.pop %v1291
          %v1294 = vld [vmem:[%s1123] sm:$0xff]
          %v1295 = vld [vmem:[%s1123 + $0x8] sm:$0xff]
          %1297 = vset.pattern.permute.xlu0 0
          %1298 = vperm.xlu0 %1297, %v1292
          %v1299 = vpop.permute.xlu0 %1298
          %1302 = vset.pattern.permute.xlu0 0
          %1303 = vperm.xlu0 %1302, %v1293
          %v1304 = vpop.permute.xlu0 %1303
          %v1306 = vmul.f32 %v1294, %v1299
          %v1307 = vmul.f32 %v1295, %v1304
          %v1308 = vpack.c.bf16 %v1307, %v1306
          %v1310 = vunpack.c.l.b16 %v1308
          %v1311 = vunpack.c.h.b16 %v1308
          %v1312 = vpack.c.b16 %v1310, %v1310
          %v1313 = vpack.c.b16 %v1311, %v1311
          %1314 = vrot.lane.b32.xlu0 %v1312, 96
          %v1315 = vpop.permute.xlu0 %1314
          %1316 = vrot.lane.b32.xlu0 %v1313, 96
          %v1317 = vpop.permute.xlu0 %1316
          %vm1320 = vcmask 1044224
          %1321 = vst.msk [vmem:[%s449] sm:$0xf] %vm1320, %v1315
          %1322 = vst.msk [vmem:[%s449 + $0x4] sm:$0xf] %vm1320, %v1317
        $region167: #{bert_base_forward.15} parent=146 // pred_fallthru
          _
        %s1323 = smul.u32 2, %s21
        %p1324 = scmp.lt.s32.totalorder %s20, 1
        %s1325 = scalar_select %p1324, %s20, 1
        %p1326 = scmp.lt.s32.totalorder %s1323, 1
        %s1327 = scalar_select %p1326, %s1323, 1
        %s1328 = smul.addr %s1325, 2
        %s1329 = sadd.s32 %s1327, %s1328
        %s1330 = smul.addr %s1329, 4
        %s1331 = scalar_lea.vmem %s4, %s1330
        // Predicated region
        $region168: #{bert_base_forward.15} parent=146 // pred_check
          %p1332 = pneg %p166
        $region169: #{bert_base_forward.15} parent=146 // pred_check_branch
          %1334 = sbr.rel (%p1332) target = $region171
        $region170: #{bert_base_forward.15} parent=146 // pred_region
          %s1335 = smul.u32 2, %s21
        $region171: #{bert_base_forward.15} parent=146 // pred_fallthru
          _
      $region147: #{bert_base_forward.15} parent=5 // pred_fallthru
        _
      %p1336 = scmp.le.s32.totalorder 2, %s10
      // Predicated region
      $region172: #{bert_base_forward.15} parent=5 // pred_check
        %p1337 = pneg %p1336
      $region173: #{bert_base_forward.15} parent=5 // pred_check_branch
        %1339 = sbr.rel (%p1337) target = $region175
      $region174: #{bert_base_forward.15} parent=5 // pred_region
        %s1340 = ssub.s32 %s10, 2
        // Predicated region
        $region176: #{bert_base_forward.15} parent=174 // pred_check
          %p1341 = pneg %p172
        $region177: #{bert_base_forward.15} parent=174 // pred_check_branch
          %1343 = sbr.rel (%p1341) target = $region179
        $region178: #{bert_base_forward.15} parent=174 // pred_region
          %s1344 = smul.u32 2, %s24
          %p1345 = scmp.lt.s32.totalorder %s23, 1
          %s1346 = scalar_select %p1345, %s23, 1
          %p1347 = scmp.lt.s32.totalorder %s1344, 1
          %s1348 = scalar_select %p1347, %s1344, 1
          %s1349 = smul.addr %s1346, 2
          %s1350 = sadd.s32 %s1348, %s1349
          %s1351 = smul.addr %s1350, 4
          %s1352 = scalar_lea.vmem %s4, %s1351
        $region179: #{bert_base_forward.15} parent=174 // pred_fallthru
          _
      $region175: #{bert_base_forward.15} parent=5 // pred_fallthru
        _
    $region6: #{bert_base_forward.15} parent=1 // loop_footer
      %s14 = sadd.s32 1, %s10
    $region7: #{bert_base_forward.15} parent=1 // loop_footer_branch
      %9 = sbr.rel target = $region3
    $region8: #{bert_base_forward.15} parent=1 // loop_exit
      _

// kernel: bert_base_forward.17
$region0: #{bert_base_forward.17}
  #allocation0 [shape = 'u32[]', space=smem, size = 0x4, offset = 0x4, fixed_abs, tag = 'smem constant byte address 0x4 - core index']
  #allocation1 [shape = 'u32[144,128]{1,0:T(1,128)}', space=vmem, size = 0x12000, scoped, tag = 'internal scratch']
  #allocation2 [shape = 'f32[32,256]{1,0:T(8,128)}', space=vmem, size = 0x8000, scoped, tag = 'scratch operand']
  %s0 = inlined_call_operand.vmem [shape: bf16[32,128], index: 0, kind: input, shape index: {}]
  %s1 = inlined_call_operand.vmem [shape: bf16[128,256], index: 1, kind: input, shape index: {}]
  %s2 = inlined_call_operand.vmem [shape: f32[1,256], index: 2, kind: input, shape index: {}]
  %s3 = inlined_call_operand.vmem [shape: bf16[32,256], index: 3, kind: output, shape index: {}]
  %s4 = sld [smem:[#allocation0]]
  $region30: #{bert_base_forward.17} parent=0
    _
  %s6 = ssub.s32 1, %s4
  %s7 = scalar_select 0, %s6, %s4
  // Predicated region
  $region2: #{bert_base_forward.17} parent=0 // pred_check
    _
  $region3: #{bert_base_forward.17} parent=0 // pred_check_branch
    %9 = sbr.rel (0) target = $region5
  $region4: #{bert_base_forward.17} parent=0 // pred_region
    _
  $region5: #{bert_base_forward.17} parent=0 // pred_fallthru
    _
  // Predicated region
  $region6: #{bert_base_forward.17} parent=0 // pred_check
    _
  $region7: #{bert_base_forward.17} parent=0 // pred_check_branch
    %11 = sbr.rel (0) target = $region9
  $region8: #{bert_base_forward.17} parent=0 // pred_region
    _
  $region9: #{bert_base_forward.17} parent=0 // pred_fallthru
    _
  // Predicated region
  $region10: #{bert_base_forward.17} parent=0 // pred_check
    _
  $region11: #{bert_base_forward.17} parent=0 // pred_check_branch
    %13 = sbr.rel (0) target = $region13
  $region12: #{bert_base_forward.17} parent=0 // pred_region
    _
  $region13: #{bert_base_forward.17} parent=0 // pred_fallthru
    _
  %p15 = scmp.eq.s32.totalorder 0, 0
  // Predicated region
  $region14: #{bert_base_forward.17} parent=0 // pred_check
    %p16 = pneg %p15
  $region15: #{bert_base_forward.17} parent=0 // pred_check_branch
    %18 = sbr.rel (%p16) target = $region17
  $region16: #{bert_base_forward.17} parent=0 // pred_region
    %19 = vst [vmem:[#allocation2] sm:$0xff] 0.0
    %20 = vst [vmem:[#allocation2 + $0x8] sm:$0xff] 0.0
    %21 = vst [vmem:[#allocation2 + $0x10] sm:$0xff] 0.0
    %22 = vst [vmem:[#allocation2 + $0x18] sm:$0xff] 0.0
    %23 = vst [vmem:[#allocation2 + $0x20] sm:$0xff] 0.0
    %24 = vst [vmem:[#allocation2 + $0x28] sm:$0xff] 0.0
    %25 = vst [vmem:[#allocation2 + $0x30] sm:$0xff] 0.0
    %26 = vst [vmem:[#allocation2 + $0x38] sm:$0xff] 0.0
  $region17: #{bert_base_forward.17} parent=0 // pred_fallthru
    _
  %v27 = vld [vmem:[#allocation2] sm:$0xff]
  %v28 = vld [vmem:[#allocation2 + $0x8] sm:$0xff]
  %v29 = vld [vmem:[#allocation2 + $0x10] sm:$0xff]
  %v30 = vld [vmem:[#allocation2 + $0x18] sm:$0xff]
  %v31 = vld [vmem:[#allocation2 + $0x20] sm:$0xff]
  %v32 = vld [vmem:[#allocation2 + $0x28] sm:$0xff]
  %v33 = vld [vmem:[#allocation2 + $0x30] sm:$0xff]
  %v34 = vld [vmem:[#allocation2 + $0x38] sm:$0xff]
  %v35 = vld [vmem:[%s0] sm:$0xf]
  %v36 = vld [vmem:[%s0 + $0x4] sm:$0xf]
  %v37 = vld [vmem:[%s0 + $0x8] sm:$0xf]
  %v38 = vld [vmem:[%s0 + $0xc] sm:$0xf]
  %v39 = vld [vmem:[%s1] sm:$0xff]
  %v40 = vld [vmem:[%s1 + $0x8] sm:$0xff]
  %v41 = vld [vmem:[%s1 + $0x10] sm:$0xff]
  %v42 = vld [vmem:[%s1 + $0x18] sm:$0xff]
  %v43 = vld [vmem:[%s1 + $0x20] sm:$0xff]
  %v44 = vld [vmem:[%s1 + $0x28] sm:$0xff]
  %v45 = vld [vmem:[%s1 + $0x30] sm:$0xff]
  %v46 = vld [vmem:[%s1 + $0x38] sm:$0xff]
  %v47 = vld [vmem:[%s1 + $0x40] sm:$0xff]
  %v48 = vld [vmem:[%s1 + $0x48] sm:$0xff]
  %v49 = vld [vmem:[%s1 + $0x50] sm:$0xff]
  %v50 = vld [vmem:[%s1 + $0x58] sm:$0xff]
  %v51 = vld [vmem:[%s1 + $0x60] sm:$0xff]
  %v52 = vld [vmem:[%s1 + $0x68] sm:$0xff]
  %v53 = vld [vmem:[%s1 + $0x70] sm:$0xff]
  %v54 = vld [vmem:[%s1 + $0x78] sm:$0xff]
  %v59 = vunpack.c.l.b16 %v35
  %v60 = vunpack.c.l.b16 %v36
  %v61 = vunpack.c.l.b16 %v37
  %v62 = vunpack.c.l.b16 %v38
  %v63 = vpack.c.b16 %v60, %v59
  %v64 = vpack.c.b16 %v62, %v61
  %v83 = vunpack.c.l.b16 %v39
  %v84 = vunpack.c.h.b16 %v39
  %v85 = vunpack.c.l.b16 %v40
  %v86 = vunpack.c.h.b16 %v40
  %v87 = vunpack.c.l.b16 %v41
  %v88 = vunpack.c.h.b16 %v41
  %v89 = vunpack.c.l.b16 %v42
  %v90 = vunpack.c.h.b16 %v42
  %v91 = vunpack.c.l.b16 %v43
  %v92 = vunpack.c.h.b16 %v43
  %v93 = vunpack.c.l.b16 %v44
  %v94 = vunpack.c.h.b16 %v44
  %v95 = vunpack.c.l.b16 %v45
  %v96 = vunpack.c.h.b16 %v45
  %v97 = vunpack.c.l.b16 %v46
  %v98 = vunpack.c.h.b16 %v46
  %v99 = vunpack.c.l.b16 %v47
  %v100 = vunpack.c.h.b16 %v47
  %v101 = vunpack.c.l.b16 %v48
  %v102 = vunpack.c.h.b16 %v48
  %v103 = vunpack.c.l.b16 %v49
  %v104 = vunpack.c.h.b16 %v49
  %v105 = vunpack.c.l.b16 %v50
  %v106 = vunpack.c.h.b16 %v50
  %v107 = vunpack.c.l.b16 %v51
  %v108 = vunpack.c.h.b16 %v51
  %v109 = vunpack.c.l.b16 %v52
  %v110 = vunpack.c.h.b16 %v52
  %v111 = vunpack.c.l.b16 %v53
  %v112 = vunpack.c.h.b16 %v53
  %v113 = vunpack.c.l.b16 %v54
  %v114 = vunpack.c.h.b16 %v54
  %v115 = vpack.c.b16 %v85, %v83
  %v116 = vpack.c.b16 %v86, %v84
  %v117 = vpack.c.b16 %v89, %v87
  %v118 = vpack.c.b16 %v90, %v88
  %v119 = vpack.c.b16 %v93, %v91
  %v120 = vpack.c.b16 %v94, %v92
  %v121 = vpack.c.b16 %v97, %v95
  %v122 = vpack.c.b16 %v98, %v96
  %v123 = vpack.c.b16 %v101, %v99
  %v124 = vpack.c.b16 %v102, %v100
  %v125 = vpack.c.b16 %v105, %v103
  %v126 = vpack.c.b16 %v106, %v104
  %v127 = vpack.c.b16 %v109, %v107
  %v128 = vpack.c.b16 %v110, %v108
  %v129 = vpack.c.b16 %v113, %v111
  %v130 = vpack.c.b16 %v114, %v112
  %147 = vmatprep.subr.bf16.mxu0 %v116
  %148 = vmatpush1.bf16.msra.mxu0 %v115
  %149 = vmatprep.subr.bf16.mxu0 %v118
  %150 = vmatpush1.bf16.msra.mxu0 %v117
  %151 = vmatprep.subr.bf16.mxu0 %v120
  %152 = vmatpush1.bf16.msra.mxu0 %v119
  %153 = vmatprep.subr.bf16.mxu0 %v122
  %154 = vmatpush1.bf16.msra.mxu0 %v121
  %155 = vmatprep.subr.bf16.mxu0 %v124
  %156 = vmatpush1.bf16.msra.mxu0 %v123
  %157 = vmatprep.subr.bf16.mxu0 %v126
  %158 = vmatpush1.bf16.msra.mxu0 %v125
  %159 = vmatprep.subr.bf16.mxu0 %v128
  %160 = vmatpush1.bf16.msra.mxu0 %v127
  %161 = vmatprep.subr.bf16.mxu0 %v130
  %162 = vmatpush1.bf16.msra.mxu0 %v129
  %163 = vmatprep.subr.bf16.mxu0 0
  %164 = vmatpush1.bf16.msra.mxu0 0
  %165 = vmatprep.subr.bf16.mxu0 0
  %166 = vmatpush1.bf16.msra.mxu0 0
  %167 = vmatprep.subr.bf16.mxu0 0
  %168 = vmatpush1.bf16.msra.mxu0 0
  %169 = vmatprep.subr.bf16.mxu0 0
  %170 = vmatpush1.bf16.msra.mxu0 0
  %171 = vmatprep.subr.bf16.mxu0 0
  %172 = vmatpush1.bf16.msra.mxu0 0
  %173 = vmatprep.subr.bf16.mxu0 0
  %174 = vmatpush1.bf16.msra.mxu0 0
  %175 = vmatprep.subr.bf16.mxu0 0
  %176 = vmatpush1.bf16.msra.mxu0 0
  %177 = vmatprep.subr.bf16.mxu0 0
  %178 = vmatpush1.bf16.msra.mxu0 0
  %179 = vmatprep.mubr.bf16.mxu0 0
  %180 = vmatmul.mubr.bf16.gmra.mrb[0].mxu0 %v63
  %v181 = vpop.f32.mrb[0].mxu0
  %v182 = vadd.f32 0.0, %v181
  %v183 = vpop.f32.mrb[0].mxu0
  %v184 = vadd.f32 0.0, %v183
  %v185 = vpop.f32.mrb[0].mxu0
  %v186 = vadd.f32 0.0, %v185
  %v187 = vpop.f32.mrb[0].mxu0
  %v188 = vadd.f32 0.0, %v187
  %189 = vmatprep.mubr.bf16.mxu0 0
  %190 = vmatmul.mubr.bf16.gmra.mrb[0].mxu0 %v64
  %v191 = vpop.f32.mrb[0].mxu0
  %v192 = vadd.f32 0.0, %v191
  %v193 = vpop.f32.mrb[0].mxu0
  %v194 = vadd.f32 0.0, %v193
  %v195 = vpop.f32.mrb[0].mxu0
  %v196 = vadd.f32 0.0, %v195
  %v197 = vpop.f32.mrb[0].mxu0
  %v198 = vadd.f32 0.0, %v197
  %199 = vdwg.mxu0
  %v200 = vadd.f32 %v27, %v182
  %v201 = vadd.f32 %v28, %v184
  %v202 = vadd.f32 %v29, %v186
  %v203 = vadd.f32 %v30, %v188
  %v204 = vadd.f32 %v31, %v192
  %v205 = vadd.f32 %v32, %v194
  %v206 = vadd.f32 %v33, %v196
  %v207 = vadd.f32 %v34, %v198
  %208 = vst [vmem:[#allocation2] sm:$0xff] %v200
  %209 = vst [vmem:[#allocation2 + $0x8] sm:$0xff] %v201
  %210 = vst [vmem:[#allocation2 + $0x10] sm:$0xff] %v202
  %211 = vst [vmem:[#allocation2 + $0x18] sm:$0xff] %v203
  %212 = vst [vmem:[#allocation2 + $0x20] sm:$0xff] %v204
  %213 = vst [vmem:[#allocation2 + $0x28] sm:$0xff] %v205
  %214 = vst [vmem:[#allocation2 + $0x30] sm:$0xff] %v206
  %215 = vst [vmem:[#allocation2 + $0x38] sm:$0xff] %v207
  // Predicated region
  $region18: #{bert_base_forward.17} parent=0 // pred_check
    %p216 = pneg %p15
  $region19: #{bert_base_forward.17} parent=0 // pred_check_branch
    %218 = sbr.rel (%p216) target = $region21
  $region20: #{bert_base_forward.17} parent=0 // pred_region
    %v219 = vld [vmem:[#allocation2] sm:$0xff]
    %v220 = vld [vmem:[#allocation2 + $0x8] sm:$0xff]
    %v221 = vld [vmem:[#allocation2 + $0x10] sm:$0xff]
    %v222 = vld [vmem:[#allocation2 + $0x18] sm:$0xff]
    %v223 = vld [vmem:[#allocation2 + $0x20] sm:$0xff]
    %v224 = vld [vmem:[#allocation2 + $0x28] sm:$0xff]
    %v225 = vld [vmem:[#allocation2 + $0x30] sm:$0xff]
    %v226 = vld [vmem:[#allocation2 + $0x38] sm:$0xff]
    %v227 = vld [vmem:[%s2] sm:$0x3]
    %v229 = vlaneseq
    %v230 = vshrl.u32 %v229, 7
    %v231 = vsub.s32 0, %v230
    %v232 = vrot.slane %v227, %v231
    %v233 = vlaneseq
    %v234 = vshrl.u32 %v233, 7
    %v235 = vsub.s32 1, %v234
    %v236 = vrot.slane %v227, %v235
    %v239 = vadd.f32 %v219, %v232
    %v240 = vadd.f32 %v220, %v236
    %v241 = vadd.f32 %v221, %v232
    %v242 = vadd.f32 %v222, %v236
    %v243 = vadd.f32 %v223, %v232
    %v244 = vadd.f32 %v224, %v236
    %v245 = vadd.f32 %v225, %v232
    %v246 = vadd.f32 %v226, %v236
    %v247 = vmul.f32 %v239, 0.5
    %v248 = vmul.f32 %v240, 0.5
    %v249 = vmul.f32 %v241, 0.5
    %v250 = vmul.f32 %v242, 0.5
    %v251 = vmul.f32 %v243, 0.5
    %v252 = vmul.f32 %v244, 0.5
    %v253 = vmul.f32 %v245, 0.5
    %v254 = vmul.f32 %v246, 0.5
    %v255 = vmul.f32 %v239, 0.70710677
    %v256 = vmul.f32 %v240, 0.70710677
    %v257 = vmul.f32 %v241, 0.70710677
    %v258 = vmul.f32 %v242, 0.70710677
    %v259 = vmul.f32 %v243, 0.70710677
    %v260 = vmul.f32 %v244, 0.70710677
    %v261 = vmul.f32 %v245, 0.70710677
    %v262 = vmul.f32 %v246, 0.70710677
    %v263 = verf.f32.pop %v255
    %v264 = verf.f32.pop %v256
    %v265 = verf.f32.pop %v257
    %v266 = verf.f32.pop %v258
    %v267 = verf.f32.pop %v259
    %v268 = verf.f32.pop %v260
    %v269 = verf.f32.pop %v261
    %v270 = verf.f32.pop %v262
    %v271 = vadd.f32 %v263, 1.0
    %v272 = vadd.f32 %v264, 1.0
    %v273 = vadd.f32 %v265, 1.0
    %v274 = vadd.f32 %v266, 1.0
    %v275 = vadd.f32 %v267, 1.0
    %v276 = vadd.f32 %v268, 1.0
    %v277 = vadd.f32 %v269, 1.0
    %v278 = vadd.f32 %v270, 1.0
    %v279 = vmul.f32 %v247, %v271
    %v280 = vmul.f32 %v248, %v272
    %v281 = vmul.f32 %v249, %v273
    %v282 = vmul.f32 %v250, %v274
    %v283 = vmul.f32 %v251, %v275
    %v284 = vmul.f32 %v252, %v276
    %v285 = vmul.f32 %v253, %v277
    %v286 = vmul.f32 %v254, %v278
    %v287 = vpack.c.bf16 %v281, %v279
    %v288 = vpack.c.bf16 %v282, %v280
    %v289 = vpack.c.bf16 %v285, %v283
    %v290 = vpack.c.bf16 %v286, %v284
    %v295 = vunpack.c.l.b16 %v287
    %v296 = vunpack.c.l.b16 %v288
    %v297 = vunpack.c.h.b16 %v287
    %v298 = vunpack.c.h.b16 %v288
    %v299 = vunpack.c.l.b16 %v289
    %v300 = vunpack.c.l.b16 %v290
    %v301 = vunpack.c.h.b16 %v289
    %v302 = vunpack.c.h.b16 %v290
    %v303 = vpack.c.b16 %v296, %v295
    %v304 = vpack.c.b16 %v298, %v297
    %v305 = vpack.c.b16 %v300, %v299
    %v306 = vpack.c.b16 %v302, %v301
    %311 = vst [vmem:[%s3] sm:$0xff] %v303
    %312 = vst [vmem:[%s3 + $0x8] sm:$0xff] %v304
    %313 = vst [vmem:[%s3 + $0x10] sm:$0xff] %v305
    %314 = vst [vmem:[%s3 + $0x18] sm:$0xff] %v306
  $region21: #{bert_base_forward.17} parent=0 // pred_fallthru
    _
  // Predicated region
  $region22: #{bert_base_forward.17} parent=0 // pred_check
    _
  $region23: #{bert_base_forward.17} parent=0 // pred_check_branch
    %316 = sbr.rel (0) target = $region25
  $region24: #{bert_base_forward.17} parent=0 // pred_region
    _
  $region25: #{bert_base_forward.17} parent=0 // pred_fallthru
    _
  // Predicated region
  $region26: #{bert_base_forward.17} parent=0 // pred_check
    _
  $region27: #{bert_base_forward.17} parent=0 // pred_check_branch
    %318 = sbr.rel (0) target = $region29
  $region28: #{bert_base_forward.17} parent=0 // pred_region
    _
  $region29: #{bert_base_forward.17} parent=0 // pred_fallthru
    _

// kernel: bert_base_forward.24
$region0: #{bert_base_forward.24}
  #allocation0 [shape = 'u32[]', space=smem, size = 0x4, offset = 0x4, fixed_abs, tag = 'smem constant byte address 0x4 - core index']
  #allocation1 [shape = 'u32[144,128]{1,0:T(1,128)}', space=vmem, size = 0x12000, scoped, tag = 'internal scratch']
  #allocation2 [shape = 'f32[32,128]{1,0:T(8,128)}', space=vmem, size = 0x4000, scoped, tag = 'scratch operand']
  %s0 = inlined_call_operand.vmem [shape: bf16[32,128], index: 0, kind: input, shape index: {}]
  %s1 = inlined_call_operand.vmem [shape: bf16[128,128], index: 1, kind: input, shape index: {}]
  %s2 = inlined_call_operand.vmem [shape: f32[1,128], index: 2, kind: input, shape index: {}]
  %s3 = inlined_call_operand.vmem [shape: f32[1,128], index: 3, kind: input, shape index: {}]
  %s4 = inlined_call_operand.vmem [shape: f32[1,128], index: 4, kind: input, shape index: {}]
  %s5 = inlined_call_operand.vmem [shape: bf16[32,128], index: 5, kind: output, shape index: {}]
  %s6 = sld [smem:[#allocation0]]
  $region38: #{bert_base_forward.24} parent=0
    _
  %s8 = ssub.s32 1, %s6
  %s9 = scalar_select 0, %s8, %s6
  // Predicated region
  $region2: #{bert_base_forward.24} parent=0 // pred_check
    _
  $region3: #{bert_base_forward.24} parent=0 // pred_check_branch
    %11 = sbr.rel (0) target = $region5
  $region4: #{bert_base_forward.24} parent=0 // pred_region
    _
  $region5: #{bert_base_forward.24} parent=0 // pred_fallthru
    _
  // Predicated region
  $region6: #{bert_base_forward.24} parent=0 // pred_check
    _
  $region7: #{bert_base_forward.24} parent=0 // pred_check_branch
    %13 = sbr.rel (0) target = $region9
  $region8: #{bert_base_forward.24} parent=0 // pred_region
    _
  $region9: #{bert_base_forward.24} parent=0 // pred_fallthru
    _
  // Predicated region
  $region10: #{bert_base_forward.24} parent=0 // pred_check
    _
  $region11: #{bert_base_forward.24} parent=0 // pred_check_branch
    %15 = sbr.rel (0) target = $region13
  $region12: #{bert_base_forward.24} parent=0 // pred_region
    _
  $region13: #{bert_base_forward.24} parent=0 // pred_fallthru
    _
  // Predicated region
  $region14: #{bert_base_forward.24} parent=0 // pred_check
    _
  $region15: #{bert_base_forward.24} parent=0 // pred_check_branch
    %17 = sbr.rel (0) target = $region17
  $region16: #{bert_base_forward.24} parent=0 // pred_region
    _
  $region17: #{bert_base_forward.24} parent=0 // pred_fallthru
    _
  // Predicated region
  $region18: #{bert_base_forward.24} parent=0 // pred_check
    _
  $region19: #{bert_base_forward.24} parent=0 // pred_check_branch
    %19 = sbr.rel (0) target = $region21
  $region20: #{bert_base_forward.24} parent=0 // pred_region
    _
  $region21: #{bert_base_forward.24} parent=0 // pred_fallthru
    _
  %p21 = scmp.eq.s32.totalorder 0, 0
  // Predicated region
  $region22: #{bert_base_forward.24} parent=0 // pred_check
    %p22 = pneg %p21
  $region23: #{bert_base_forward.24} parent=0 // pred_check_branch
    %24 = sbr.rel (%p22) target = $region25
  $region24: #{bert_base_forward.24} parent=0 // pred_region
    %25 = vst [vmem:[#allocation2] sm:$0xff] 0.0
    %26 = vst [vmem:[#allocation2 + $0x8] sm:$0xff] 0.0
    %27 = vst [vmem:[#allocation2 + $0x10] sm:$0xff] 0.0
    %28 = vst [vmem:[#allocation2 + $0x18] sm:$0xff] 0.0
  $region25: #{bert_base_forward.24} parent=0 // pred_fallthru
    _
  %v29 = vld [vmem:[#allocation2] sm:$0xff]
  %v30 = vld [vmem:[#allocation2 + $0x8] sm:$0xff]
  %v31 = vld [vmem:[#allocation2 + $0x10] sm:$0xff]
  %v32 = vld [vmem:[#allocation2 + $0x18] sm:$0xff]
  %v33 = vld [vmem:[%s0] sm:$0xf]
  %v34 = vld [vmem:[%s0 + $0x4] sm:$0xf]
  %v35 = vld [vmem:[%s0 + $0x8] sm:$0xf]
  %v36 = vld [vmem:[%s0 + $0xc] sm:$0xf]
  %v37 = vld [vmem:[%s1] sm:$0xf]
  %v38 = vld [vmem:[%s1 + $0x4] sm:$0xf]
  %v39 = vld [vmem:[%s1 + $0x8] sm:$0xf]
  %v40 = vld [vmem:[%s1 + $0xc] sm:$0xf]
  %v41 = vld [vmem:[%s1 + $0x10] sm:$0xf]
  %v42 = vld [vmem:[%s1 + $0x14] sm:$0xf]
  %v43 = vld [vmem:[%s1 + $0x18] sm:$0xf]
  %v44 = vld [vmem:[%s1 + $0x1c] sm:$0xf]
  %v45 = vld [vmem:[%s1 + $0x20] sm:$0xf]
  %v46 = vld [vmem:[%s1 + $0x24] sm:$0xf]
  %v47 = vld [vmem:[%s1 + $0x28] sm:$0xf]
  %v48 = vld [vmem:[%s1 + $0x2c] sm:$0xf]
  %v49 = vld [vmem:[%s1 + $0x30] sm:$0xf]
  %v50 = vld [vmem:[%s1 + $0x34] sm:$0xf]
  %v51 = vld [vmem:[%s1 + $0x38] sm:$0xf]
  %v52 = vld [vmem:[%s1 + $0x3c] sm:$0xf]
  %v57 = vunpack.c.l.b16 %v33
  %v58 = vunpack.c.l.b16 %v34
  %v59 = vunpack.c.l.b16 %v35
  %v60 = vunpack.c.l.b16 %v36
  %v61 = vpack.c.b16 %v58, %v57
  %v62 = vpack.c.b16 %v60, %v59
  %v81 = vunpack.c.l.b16 %v37
  %v82 = vunpack.c.l.b16 %v38
  %v83 = vunpack.c.l.b16 %v39
  %v84 = vunpack.c.l.b16 %v40
  %v85 = vunpack.c.l.b16 %v41
  %v86 = vunpack.c.l.b16 %v42
  %v87 = vunpack.c.l.b16 %v43
  %v88 = vunpack.c.l.b16 %v44
  %v89 = vunpack.c.l.b16 %v45
  %v90 = vunpack.c.l.b16 %v46
  %v91 = vunpack.c.l.b16 %v47
  %v92 = vunpack.c.l.b16 %v48
  %v93 = vunpack.c.l.b16 %v49
  %v94 = vunpack.c.l.b16 %v50
  %v95 = vunpack.c.l.b16 %v51
  %v96 = vunpack.c.l.b16 %v52
  %v97 = vpack.c.b16 %v82, %v81
  %v98 = vpack.c.b16 %v84, %v83
  %v99 = vpack.c.b16 %v86, %v85
  %v100 = vpack.c.b16 %v88, %v87
  %v101 = vpack.c.b16 %v90, %v89
  %v102 = vpack.c.b16 %v92, %v91
  %v103 = vpack.c.b16 %v94, %v93
  %v104 = vpack.c.b16 %v96, %v95
  %113 = vmatprep.subr.bf16.mxu0 0
  %114 = vmatpush1.bf16.msra.mxu0 %v97
  %115 = vmatprep.subr.bf16.mxu0 0
  %116 = vmatpush1.bf16.msra.mxu0 %v98
  %117 = vmatprep.subr.bf16.mxu0 0
  %118 = vmatpush1.bf16.msra.mxu0 %v99
  %119 = vmatprep.subr.bf16.mxu0 0
  %120 = vmatpush1.bf16.msra.mxu0 %v100
  %121 = vmatprep.subr.bf16.mxu0 0
  %122 = vmatpush1.bf16.msra.mxu0 %v101
  %123 = vmatprep.subr.bf16.mxu0 0
  %124 = vmatpush1.bf16.msra.mxu0 %v102
  %125 = vmatprep.subr.bf16.mxu0 0
  %126 = vmatpush1.bf16.msra.mxu0 %v103
  %127 = vmatprep.subr.bf16.mxu0 0
  %128 = vmatpush1.bf16.msra.mxu0 %v104
  %129 = vmatprep.subr.bf16.mxu0 0
  %130 = vmatpush1.bf16.msra.mxu0 0
  %131 = vmatprep.subr.bf16.mxu0 0
  %132 = vmatpush1.bf16.msra.mxu0 0
  %133 = vmatprep.subr.bf16.mxu0 0
  %134 = vmatpush1.bf16.msra.mxu0 0
  %135 = vmatprep.subr.bf16.mxu0 0
  %136 = vmatpush1.bf16.msra.mxu0 0
  %137 = vmatprep.subr.bf16.mxu0 0
  %138 = vmatpush1.bf16.msra.mxu0 0
  %139 = vmatprep.subr.bf16.mxu0 0
  %140 = vmatpush1.bf16.msra.mxu0 0
  %141 = vmatprep.subr.bf16.mxu0 0
  %142 = vmatpush1.bf16.msra.mxu0 0
  %143 = vmatprep.subr.bf16.mxu0 0
  %144 = vmatpush1.bf16.msra.mxu0 0
  %145 = vmatprep.mubr.bf16.mxu0 0
  %146 = vmatmul.mubr.bf16.gmra.mrb[0].mxu0 %v61
  %v147 = vpop.f32.mrb[0].mxu0
  %v148 = vadd.f32 0.0, %v147
  %v149 = vpop.f32.mrb[0].mxu0
  %v150 = vpop.f32.mrb[0].mxu0
  %v151 = vadd.f32 0.0, %v150
  %v152 = vpop.f32.mrb[0].mxu0
  %153 = vmatprep.mubr.bf16.mxu0 0
  %154 = vmatmul.mubr.bf16.gmra.mrb[0].mxu0 %v62
  %v155 = vpop.f32.mrb[0].mxu0
  %v156 = vadd.f32 0.0, %v155
  %v157 = vpop.f32.mrb[0].mxu0
  %v158 = vpop.f32.mrb[0].mxu0
  %v159 = vadd.f32 0.0, %v158
  %v160 = vpop.f32.mrb[0].mxu0
  %161 = vdwg.mxu0
  %v162 = vadd.f32 %v29, %v148
  %v163 = vadd.f32 %v30, %v151
  %v164 = vadd.f32 %v31, %v156
  %v165 = vadd.f32 %v32, %v159
  %166 = vst [vmem:[#allocation2] sm:$0xff] %v162
  %167 = vst [vmem:[#allocation2 + $0x8] sm:$0xff] %v163
  %168 = vst [vmem:[#allocation2 + $0x10] sm:$0xff] %v164
  %169 = vst [vmem:[#allocation2 + $0x18] sm:$0xff] %v165
  // Predicated region
  $region26: #{bert_base_forward.24} parent=0 // pred_check
    %p170 = pneg %p21
  $region27: #{bert_base_forward.24} parent=0 // pred_check_branch
    %172 = sbr.rel (%p170) target = $region29
  $region28: #{bert_base_forward.24} parent=0 // pred_region
    %v173 = vld [vmem:[#allocation2] sm:$0xff]
    %v174 = vld [vmem:[#allocation2 + $0x8] sm:$0xff]
    %v175 = vld [vmem:[#allocation2 + $0x10] sm:$0xff]
    %v176 = vld [vmem:[#allocation2 + $0x18] sm:$0xff]
    %v177 = vld [vmem:[%s2] sm:$0x1]
    %v179 = vlaneseq
    %v180 = vshrl.u32 %v179, 7
    %v181 = vsub.s32 0, %v180
    %v182 = vrot.slane %v177, %v181
    %v184 = vadd.f32 %v173, %v182
    %v185 = vadd.f32 %v174, %v182
    %v186 = vadd.f32 %v175, %v182
    %v187 = vadd.f32 %v176, %v182
    %v188 = vmul.f32 %v184, 0.5
    %v189 = vmul.f32 %v185, 0.5
    %v190 = vmul.f32 %v186, 0.5
    %v191 = vmul.f32 %v187, 0.5
    %v192 = vmul.f32 %v184, 0.70710677
    %v193 = vmul.f32 %v185, 0.70710677
    %v194 = vmul.f32 %v186, 0.70710677
    %v195 = vmul.f32 %v187, 0.70710677
    %v196 = verf.f32.pop %v192
    %v197 = verf.f32.pop %v193
    %v198 = verf.f32.pop %v194
    %v199 = verf.f32.pop %v195
    %v200 = vadd.f32 %v196, 1.0
    %v201 = vadd.f32 %v197, 1.0
    %v202 = vadd.f32 %v198, 1.0
    %v203 = vadd.f32 %v199, 1.0
    %v204 = vmul.f32 %v188, %v200
    %v205 = vmul.f32 %v189, %v201
    %v206 = vmul.f32 %v190, %v202
    %v207 = vmul.f32 %v191, %v203
    %208 = vadd.xlane.f32.xlu0 %v204
    %v209 = vpop.xlane.xlu0 %208
    %210 = vadd.xlane.f32.xlu0 %v205
    %v211 = vpop.xlane.xlu0 %210
    %212 = vadd.xlane.f32.xlu0 %v206
    %v213 = vpop.xlane.xlu0 %212
    %214 = vadd.xlane.f32.xlu0 %v207
    %v215 = vpop.xlane.xlu0 %214
    %v216 = vrcp.pop 128.0
    %v217 = vmul.f32 %v209, %v216
    %v218 = vmul.f32 %v211, %v216
    %v219 = vmul.f32 %v213, %v216
    %v220 = vmul.f32 %v215, %v216
    %v221 = vsub.f32 %v204, %v217
    %v222 = vsub.f32 %v205, %v218
    %v223 = vsub.f32 %v206, %v219
    %v224 = vsub.f32 %v207, %v220
    %v225 = vmul.f32 %v221, %v221
    %v226 = vmul.f32 %v222, %v222
    %v227 = vmul.f32 %v223, %v223
    %v228 = vmul.f32 %v224, %v224
    %229 = vadd.xlane.f32.xlu0 %v225
    %v230 = vpop.xlane.xlu0 %229
    %231 = vadd.xlane.f32.xlu0 %v226
    %v232 = vpop.xlane.xlu0 %231
    %233 = vadd.xlane.f32.xlu0 %v227
    %v234 = vpop.xlane.xlu0 %233
    %235 = vadd.xlane.f32.xlu0 %v228
    %v236 = vpop.xlane.xlu0 %235
    %v237 = vmul.f32 %v230, %v216
    %v238 = vmul.f32 %v232, %v216
    %v239 = vmul.f32 %v234, %v216
    %v240 = vmul.f32 %v236, %v216
    %v241 = vadd.f32 %v237, 1e-12
    %v242 = vadd.f32 %v238, 1e-12
    %v243 = vadd.f32 %v239, 1e-12
    %v244 = vadd.f32 %v240, 1e-12
    %v245 = vrsqrt.pop %v241
    %v246 = vrsqrt.pop %v242
    %v247 = vrsqrt.pop %v243
    %v248 = vrsqrt.pop %v244
    %v249 = vmul.f32 %v221, %v245
    %v250 = vmul.f32 %v222, %v246
    %v251 = vmul.f32 %v223, %v247
    %v252 = vmul.f32 %v224, %v248
    %v253 = vld [vmem:[%s3] sm:$0x1]
    %v255 = vlaneseq
    %v256 = vshrl.u32 %v255, 7
    %v257 = vsub.s32 0, %v256
    %v258 = vrot.slane %v253, %v257
    %v260 = vmul.f32 %v249, %v258
    %v261 = vmul.f32 %v250, %v258
    %v262 = vmul.f32 %v251, %v258
    %v263 = vmul.f32 %v252, %v258
    %v264 = vld [vmem:[%s4] sm:$0x1]
    %v266 = vlaneseq
    %v267 = vshrl.u32 %v266, 7
    %v268 = vsub.s32 0, %v267
    %v269 = vrot.slane %v264, %v268
    %v271 = vadd.f32 %v260, %v269
    %v272 = vadd.f32 %v261, %v269
    %v273 = vadd.f32 %v262, %v269
    %v274 = vadd.f32 %v263, %v269
    %v275 = vpack.c.bf16 %v272, %v271
    %v276 = vpack.c.bf16 %v274, %v273
    %v279 = vunpack.c.l.b16 %v275
    %v280 = vunpack.c.h.b16 %v275
    %v281 = vunpack.c.l.b16 %v276
    %v282 = vunpack.c.h.b16 %v276
    %v283 = vpack.c.b16 %v279, %v279
    %v284 = vpack.c.b16 %v280, %v280
    %v285 = vpack.c.b16 %v281, %v281
    %v286 = vpack.c.b16 %v282, %v282
    %291 = vst [vmem:[%s5] sm:$0xf] %v283
    %292 = vst [vmem:[%s5 + $0x4] sm:$0xf] %v284
    %293 = vst [vmem:[%s5 + $0x8] sm:$0xf] %v285
    %294 = vst [vmem:[%s5 + $0xc] sm:$0xf] %v286
  $region29: #{bert_base_forward.24} parent=0 // pred_fallthru
    _
  // Predicated region
  $region30: #{bert_base_forward.24} parent=0 // pred_check
    _
  $region31: #{bert_base_forward.24} parent=0 // pred_check_branch
    %296 = sbr.rel (0) target = $region33
  $region32: #{bert_base_forward.24} parent=0 // pred_region
    _
  $region33: #{bert_base_forward.24} parent=0 // pred_fallthru
    _
  // Predicated region
  $region34: #{bert_base_forward.24} parent=0 // pred_check
    _
  $region35: #{bert_base_forward.24} parent=0 // pred_check_branch
    %298 = sbr.rel (0) target = $region37
  $region36: #{bert_base_forward.24} parent=0 // pred_region
    _
  $region37: #{bert_base_forward.24} parent=0 // pred_fallthru
    _

// kernel: bert_base_forward.18
$region0: #{bert_base_forward.18}
  #allocation0 [shape = 'u32[]', space=smem, size = 0x4, offset = 0x4, fixed_abs, tag = 'smem constant byte address 0x4 - core index']
  #allocation1 [shape = 'u32[144,128]{1,0:T(1,128)}', space=vmem, size = 0x12000, scoped, tag = 'internal scratch']
  #allocation2 [shape = 'f32[32,128]{1,0:T(8,128)}', space=vmem, size = 0x4000, scoped, tag = 'scratch operand']
  %s0 = inlined_call_operand.vmem [shape: bf16[32,256], index: 0, kind: input, shape index: {}]
  %s1 = inlined_call_operand.vmem [shape: bf16[256,128], index: 1, kind: input, shape index: {}]
  %s2 = inlined_call_operand.vmem [shape: f32[1,128], index: 2, kind: input, shape index: {}]
  %s3 = inlined_call_operand.vmem [shape: bf16[32,128], index: 3, kind: input, shape index: {}]
  %s4 = inlined_call_operand.vmem [shape: f32[1,128], index: 4, kind: input, shape index: {}]
  %s5 = inlined_call_operand.vmem [shape: f32[1,128], index: 5, kind: input, shape index: {}]
  %s6 = inlined_call_operand.vmem [shape: bf16[32,128], index: 6, kind: output, shape index: {}]
  %s7 = sld [smem:[#allocation0]]
  $region42: #{bert_base_forward.18} parent=0
    _
  %s9 = ssub.s32 1, %s7
  %s10 = scalar_select 0, %s9, %s7
  // Predicated region
  $region2: #{bert_base_forward.18} parent=0 // pred_check
    _
  $region3: #{bert_base_forward.18} parent=0 // pred_check_branch
    %12 = sbr.rel (0) target = $region5
  $region4: #{bert_base_forward.18} parent=0 // pred_region
    _
  $region5: #{bert_base_forward.18} parent=0 // pred_fallthru
    _
  // Predicated region
  $region6: #{bert_base_forward.18} parent=0 // pred_check
    _
  $region7: #{bert_base_forward.18} parent=0 // pred_check_branch
    %14 = sbr.rel (0) target = $region9
  $region8: #{bert_base_forward.18} parent=0 // pred_region
    _
  $region9: #{bert_base_forward.18} parent=0 // pred_fallthru
    _
  // Predicated region
  $region10: #{bert_base_forward.18} parent=0 // pred_check
    _
  $region11: #{bert_base_forward.18} parent=0 // pred_check_branch
    %16 = sbr.rel (0) target = $region13
  $region12: #{bert_base_forward.18} parent=0 // pred_region
    _
  $region13: #{bert_base_forward.18} parent=0 // pred_fallthru
    _
  // Predicated region
  $region14: #{bert_base_forward.18} parent=0 // pred_check
    _
  $region15: #{bert_base_forward.18} parent=0 // pred_check_branch
    %18 = sbr.rel (0) target = $region17
  $region16: #{bert_base_forward.18} parent=0 // pred_region
    _
  $region17: #{bert_base_forward.18} parent=0 // pred_fallthru
    _
  // Predicated region
  $region18: #{bert_base_forward.18} parent=0 // pred_check
    _
  $region19: #{bert_base_forward.18} parent=0 // pred_check_branch
    %20 = sbr.rel (0) target = $region21
  $region20: #{bert_base_forward.18} parent=0 // pred_region
    _
  $region21: #{bert_base_forward.18} parent=0 // pred_fallthru
    _
  // Predicated region
  $region22: #{bert_base_forward.18} parent=0 // pred_check
    _
  $region23: #{bert_base_forward.18} parent=0 // pred_check_branch
    %22 = sbr.rel (0) target = $region25
  $region24: #{bert_base_forward.18} parent=0 // pred_region
    _
  $region25: #{bert_base_forward.18} parent=0 // pred_fallthru
    _
  %p24 = scmp.eq.s32.totalorder 0, 0
  // Predicated region
  $region26: #{bert_base_forward.18} parent=0 // pred_check
    %p25 = pneg %p24
  $region27: #{bert_base_forward.18} parent=0 // pred_check_branch
    %27 = sbr.rel (%p25) target = $region29
  $region28: #{bert_base_forward.18} parent=0 // pred_region
    %28 = vst [vmem:[#allocation2] sm:$0xff] 0.0
    %29 = vst [vmem:[#allocation2 + $0x8] sm:$0xff] 0.0
    %30 = vst [vmem:[#allocation2 + $0x10] sm:$0xff] 0.0
    %31 = vst [vmem:[#allocation2 + $0x18] sm:$0xff] 0.0
  $region29: #{bert_base_forward.18} parent=0 // pred_fallthru
    _
  %v32 = vld [vmem:[#allocation2] sm:$0xff]
  %v33 = vld [vmem:[#allocation2 + $0x8] sm:$0xff]
  %v34 = vld [vmem:[#allocation2 + $0x10] sm:$0xff]
  %v35 = vld [vmem:[#allocation2 + $0x18] sm:$0xff]
  %v36 = vld [vmem:[%s0] sm:$0xff]
  %v37 = vld [vmem:[%s0 + $0x8] sm:$0xff]
  %v38 = vld [vmem:[%s0 + $0x10] sm:$0xff]
  %v39 = vld [vmem:[%s0 + $0x18] sm:$0xff]
  %v40 = vld [vmem:[%s1] sm:$0xf]
  %v41 = vld [vmem:[%s1 + $0x4] sm:$0xf]
  %v42 = vld [vmem:[%s1 + $0x8] sm:$0xf]
  %v43 = vld [vmem:[%s1 + $0xc] sm:$0xf]
  %v44 = vld [vmem:[%s1 + $0x10] sm:$0xf]
  %v45 = vld [vmem:[%s1 + $0x14] sm:$0xf]
  %v46 = vld [vmem:[%s1 + $0x18] sm:$0xf]
  %v47 = vld [vmem:[%s1 + $0x1c] sm:$0xf]
  %v48 = vld [vmem:[%s1 + $0x20] sm:$0xf]
  %v49 = vld [vmem:[%s1 + $0x24] sm:$0xf]
  %v50 = vld [vmem:[%s1 + $0x28] sm:$0xf]
  %v51 = vld [vmem:[%s1 + $0x2c] sm:$0xf]
  %v52 = vld [vmem:[%s1 + $0x30] sm:$0xf]
  %v53 = vld [vmem:[%s1 + $0x34] sm:$0xf]
  %v54 = vld [vmem:[%s1 + $0x38] sm:$0xf]
  %v55 = vld [vmem:[%s1 + $0x3c] sm:$0xf]
  %v56 = vld [vmem:[%s1 + $0x40] sm:$0xf]
  %v57 = vld [vmem:[%s1 + $0x44] sm:$0xf]
  %v58 = vld [vmem:[%s1 + $0x48] sm:$0xf]
  %v59 = vld [vmem:[%s1 + $0x4c] sm:$0xf]
  %v60 = vld [vmem:[%s1 + $0x50] sm:$0xf]
  %v61 = vld [vmem:[%s1 + $0x54] sm:$0xf]
  %v62 = vld [vmem:[%s1 + $0x58] sm:$0xf]
  %v63 = vld [vmem:[%s1 + $0x5c] sm:$0xf]
  %v64 = vld [vmem:[%s1 + $0x60] sm:$0xf]
  %v65 = vld [vmem:[%s1 + $0x64] sm:$0xf]
  %v66 = vld [vmem:[%s1 + $0x68] sm:$0xf]
  %v67 = vld [vmem:[%s1 + $0x6c] sm:$0xf]
  %v68 = vld [vmem:[%s1 + $0x70] sm:$0xf]
  %v69 = vld [vmem:[%s1 + $0x74] sm:$0xf]
  %v70 = vld [vmem:[%s1 + $0x78] sm:$0xf]
  %v71 = vld [vmem:[%s1 + $0x7c] sm:$0xf]
  %v76 = vunpack.c.l.b16 %v36
  %v77 = vunpack.c.h.b16 %v36
  %v78 = vunpack.c.l.b16 %v37
  %v79 = vunpack.c.h.b16 %v37
  %v80 = vunpack.c.l.b16 %v38
  %v81 = vunpack.c.h.b16 %v38
  %v82 = vunpack.c.l.b16 %v39
  %v83 = vunpack.c.h.b16 %v39
  %v84 = vpack.c.b16 %v78, %v76
  %v85 = vpack.c.b16 %v79, %v77
  %v86 = vpack.c.b16 %v82, %v80
  %v87 = vpack.c.b16 %v83, %v81
  %v124 = vunpack.c.l.b16 %v40
  %v125 = vunpack.c.l.b16 %v41
  %v126 = vunpack.c.l.b16 %v42
  %v127 = vunpack.c.l.b16 %v43
  %v128 = vunpack.c.l.b16 %v44
  %v129 = vunpack.c.l.b16 %v45
  %v130 = vunpack.c.l.b16 %v46
  %v131 = vunpack.c.l.b16 %v47
  %v132 = vunpack.c.l.b16 %v48
  %v133 = vunpack.c.l.b16 %v49
  %v134 = vunpack.c.l.b16 %v50
  %v135 = vunpack.c.l.b16 %v51
  %v136 = vunpack.c.l.b16 %v52
  %v137 = vunpack.c.l.b16 %v53
  %v138 = vunpack.c.l.b16 %v54
  %v139 = vunpack.c.l.b16 %v55
  %v140 = vunpack.c.l.b16 %v56
  %v141 = vunpack.c.l.b16 %v57
  %v142 = vunpack.c.l.b16 %v58
  %v143 = vunpack.c.l.b16 %v59
  %v144 = vunpack.c.l.b16 %v60
  %v145 = vunpack.c.l.b16 %v61
  %v146 = vunpack.c.l.b16 %v62
  %v147 = vunpack.c.l.b16 %v63
  %v148 = vunpack.c.l.b16 %v64
  %v149 = vunpack.c.l.b16 %v65
  %v150 = vunpack.c.l.b16 %v66
  %v151 = vunpack.c.l.b16 %v67
  %v152 = vunpack.c.l.b16 %v68
  %v153 = vunpack.c.l.b16 %v69
  %v154 = vunpack.c.l.b16 %v70
  %v155 = vunpack.c.l.b16 %v71
  %v156 = vpack.c.b16 %v125, %v124
  %v157 = vpack.c.b16 %v127, %v126
  %v158 = vpack.c.b16 %v129, %v128
  %v159 = vpack.c.b16 %v131, %v130
  %v160 = vpack.c.b16 %v133, %v132
  %v161 = vpack.c.b16 %v135, %v134
  %v162 = vpack.c.b16 %v137, %v136
  %v163 = vpack.c.b16 %v139, %v138
  %v164 = vpack.c.b16 %v141, %v140
  %v165 = vpack.c.b16 %v143, %v142
  %v166 = vpack.c.b16 %v145, %v144
  %v167 = vpack.c.b16 %v147, %v146
  %v168 = vpack.c.b16 %v149, %v148
  %v169 = vpack.c.b16 %v151, %v150
  %v170 = vpack.c.b16 %v153, %v152
  %v171 = vpack.c.b16 %v155, %v154
  %188 = vmatprep.subr.bf16.mxu0 0
  %189 = vmatpush1.bf16.msra.mxu0 %v156
  %190 = vmatprep.subr.bf16.mxu0 0
  %191 = vmatpush1.bf16.msra.mxu0 %v157
  %192 = vmatprep.subr.bf16.mxu0 0
  %193 = vmatpush1.bf16.msra.mxu0 %v158
  %194 = vmatprep.subr.bf16.mxu0 0
  %195 = vmatpush1.bf16.msra.mxu0 %v159
  %196 = vmatprep.subr.bf16.mxu0 0
  %197 = vmatpush1.bf16.msra.mxu0 %v160
  %198 = vmatprep.subr.bf16.mxu0 0
  %199 = vmatpush1.bf16.msra.mxu0 %v161
  %200 = vmatprep.subr.bf16.mxu0 0
  %201 = vmatpush1.bf16.msra.mxu0 %v162
  %202 = vmatprep.subr.bf16.mxu0 0
  %203 = vmatpush1.bf16.msra.mxu0 %v163
  %204 = vmatprep.subr.bf16.mxu0 0
  %205 = vmatpush1.bf16.msra.mxu0 %v164
  %206 = vmatprep.subr.bf16.mxu0 0
  %207 = vmatpush1.bf16.msra.mxu0 %v165
  %208 = vmatprep.subr.bf16.mxu0 0
  %209 = vmatpush1.bf16.msra.mxu0 %v166
  %210 = vmatprep.subr.bf16.mxu0 0
  %211 = vmatpush1.bf16.msra.mxu0 %v167
  %212 = vmatprep.subr.bf16.mxu0 0
  %213 = vmatpush1.bf16.msra.mxu0 %v168
  %214 = vmatprep.subr.bf16.mxu0 0
  %215 = vmatpush1.bf16.msra.mxu0 %v169
  %216 = vmatprep.subr.bf16.mxu0 0
  %217 = vmatpush1.bf16.msra.mxu0 %v170
  %218 = vmatprep.subr.bf16.mxu0 0
  %219 = vmatpush1.bf16.msra.mxu0 %v171
  %220 = vmatprep.mubr.bf16.mxu0 %v85
  %221 = vmatmul.mubr.bf16.gmra.mrb[0].mxu0 %v84
  %v222 = vpop.f32.mrb[0].mxu0
  %v223 = vadd.f32 0.0, %v222
  %v224 = vpop.f32.mrb[0].mxu0
  %v225 = vpop.f32.mrb[0].mxu0
  %v226 = vadd.f32 0.0, %v225
  %v227 = vpop.f32.mrb[0].mxu0
  %228 = vmatprep.mubr.bf16.mxu0 %v87
  %229 = vmatmul.mubr.bf16.gmra.mrb[0].mxu0 %v86
  %v230 = vpop.f32.mrb[0].mxu0
  %v231 = vadd.f32 0.0, %v230
  %v232 = vpop.f32.mrb[0].mxu0
  %v233 = vpop.f32.mrb[0].mxu0
  %v234 = vadd.f32 0.0, %v233
  %v235 = vpop.f32.mrb[0].mxu0
  %236 = vdwg.mxu0
  %v237 = vadd.f32 %v32, %v223
  %v238 = vadd.f32 %v33, %v226
  %v239 = vadd.f32 %v34, %v231
  %v240 = vadd.f32 %v35, %v234
  %241 = vst [vmem:[#allocation2] sm:$0xff] %v237
  %242 = vst [vmem:[#allocation2 + $0x8] sm:$0xff] %v238
  %243 = vst [vmem:[#allocation2 + $0x10] sm:$0xff] %v239
  %244 = vst [vmem:[#allocation2 + $0x18] sm:$0xff] %v240
  // Predicated region
  $region30: #{bert_base_forward.18} parent=0 // pred_check
    %p245 = pneg %p24
  $region31: #{bert_base_forward.18} parent=0 // pred_check_branch
    %247 = sbr.rel (%p245) target = $region33
  $region32: #{bert_base_forward.18} parent=0 // pred_region
    %v248 = vld [vmem:[#allocation2] sm:$0xff]
    %v249 = vld [vmem:[#allocation2 + $0x8] sm:$0xff]
    %v250 = vld [vmem:[#allocation2 + $0x10] sm:$0xff]
    %v251 = vld [vmem:[#allocation2 + $0x18] sm:$0xff]
    %v252 = vld [vmem:[%s2] sm:$0x1]
    %v254 = vlaneseq
    %v255 = vshrl.u32 %v254, 7
    %v256 = vsub.s32 0, %v255
    %v257 = vrot.slane %v252, %v256
    %v259 = vadd.f32 %v248, %v257
    %v260 = vadd.f32 %v249, %v257
    %v261 = vadd.f32 %v250, %v257
    %v262 = vadd.f32 %v251, %v257
    %v263 = vld [vmem:[%s3] sm:$0xf]
    %v264 = vld [vmem:[%s3 + $0x4] sm:$0xf]
    %v265 = vld [vmem:[%s3 + $0x8] sm:$0xf]
    %v266 = vld [vmem:[%s3 + $0xc] sm:$0xf]
    %v267 = vunpack.c.l.bf16 %v263
    %v268 = vunpack.c.l.bf16 %v264
    %v269 = vunpack.c.l.bf16 %v265
    %v270 = vunpack.c.l.bf16 %v266
    %v271 = vadd.f32 %v259, %v267
    %v272 = vadd.f32 %v260, %v268
    %v273 = vadd.f32 %v261, %v269
    %v274 = vadd.f32 %v262, %v270
    %275 = vadd.xlane.f32.xlu0 %v271
    %v276 = vpop.xlane.xlu0 %275
    %277 = vadd.xlane.f32.xlu0 %v272
    %v278 = vpop.xlane.xlu0 %277
    %279 = vadd.xlane.f32.xlu0 %v273
    %v280 = vpop.xlane.xlu0 %279
    %281 = vadd.xlane.f32.xlu0 %v274
    %v282 = vpop.xlane.xlu0 %281
    %v283 = vrcp.pop 128.0
    %v284 = vmul.f32 %v276, %v283
    %v285 = vmul.f32 %v278, %v283
    %v286 = vmul.f32 %v280, %v283
    %v287 = vmul.f32 %v282, %v283
    %v288 = vsub.f32 %v271, %v284
    %v289 = vsub.f32 %v272, %v285
    %v290 = vsub.f32 %v273, %v286
    %v291 = vsub.f32 %v274, %v287
    %v292 = vmul.f32 %v288, %v288
    %v293 = vmul.f32 %v289, %v289
    %v294 = vmul.f32 %v290, %v290
    %v295 = vmul.f32 %v291, %v291
    %296 = vadd.xlane.f32.xlu0 %v292
    %v297 = vpop.xlane.xlu0 %296
    %298 = vadd.xlane.f32.xlu0 %v293
    %v299 = vpop.xlane.xlu0 %298
    %300 = vadd.xlane.f32.xlu0 %v294
    %v301 = vpop.xlane.xlu0 %300
    %302 = vadd.xlane.f32.xlu0 %v295
    %v303 = vpop.xlane.xlu0 %302
    %v304 = vmul.f32 %v297, %v283
    %v305 = vmul.f32 %v299, %v283
    %v306 = vmul.f32 %v301, %v283
    %v307 = vmul.f32 %v303, %v283
    %v308 = vadd.f32 %v304, 1e-12
    %v309 = vadd.f32 %v305, 1e-12
    %v310 = vadd.f32 %v306, 1e-12
    %v311 = vadd.f32 %v307, 1e-12
    %v312 = vrsqrt.pop %v308
    %v313 = vrsqrt.pop %v309
    %v314 = vrsqrt.pop %v310
    %v315 = vrsqrt.pop %v311
    %v316 = vmul.f32 %v288, %v312
    %v317 = vmul.f32 %v289, %v313
    %v318 = vmul.f32 %v290, %v314
    %v319 = vmul.f32 %v291, %v315
    %v320 = vld [vmem:[%s4] sm:$0x1]
    %v322 = vlaneseq
    %v323 = vshrl.u32 %v322, 7
    %v324 = vsub.s32 0, %v323
    %v325 = vrot.slane %v320, %v324
    %v327 = vmul.f32 %v316, %v325
    %v328 = vmul.f32 %v317, %v325
    %v329 = vmul.f32 %v318, %v325
    %v330 = vmul.f32 %v319, %v325
    %v331 = vld [vmem:[%s5] sm:$0x1]
    %v333 = vlaneseq
    %v334 = vshrl.u32 %v333, 7
    %v335 = vsub.s32 0, %v334
    %v336 = vrot.slane %v331, %v335
    %v338 = vadd.f32 %v327, %v336
    %v339 = vadd.f32 %v328, %v336
    %v340 = vadd.f32 %v329, %v336
    %v341 = vadd.f32 %v330, %v336
    %v342 = vpack.c.bf16 %v339, %v338
    %v343 = vpack.c.bf16 %v341, %v340
    %v346 = vunpack.c.l.b16 %v342
    %v347 = vunpack.c.h.b16 %v342
    %v348 = vunpack.c.l.b16 %v343
    %v349 = vunpack.c.h.b16 %v343
    %v350 = vpack.c.b16 %v346, %v346
    %v351 = vpack.c.b16 %v347, %v347
    %v352 = vpack.c.b16 %v348, %v348
    %v353 = vpack.c.b16 %v349, %v349
    %358 = vst [vmem:[%s6] sm:$0xf] %v350
    %359 = vst [vmem:[%s6 + $0x4] sm:$0xf] %v351
    %360 = vst [vmem:[%s6 + $0x8] sm:$0xf] %v352
    %361 = vst [vmem:[%s6 + $0xc] sm:$0xf] %v353
  $region33: #{bert_base_forward.18} parent=0 // pred_fallthru
    _
  // Predicated region
  $region34: #{bert_base_forward.18} parent=0 // pred_check
    _
  $region35: #{bert_base_forward.18} parent=0 // pred_check_branch
    %363 = sbr.rel (0) target = $region37
  $region36: #{bert_base_forward.18} parent=0 // pred_region
    _
  $region37: #{bert_base_forward.18} parent=0 // pred_fallthru
    _
  // Predicated region
  $region38: #{bert_base_forward.18} parent=0 // pred_check
    _
  $region39: #{bert_base_forward.18} parent=0 // pred_check_branch
    %365 = sbr.rel (0) target = $region41
  $region40: #{bert_base_forward.18} parent=0 // pred_region
    _
  $region41: #{bert_base_forward.18} parent=0 // pred_fallthru
    _

// kernel: bert_base_forward.25
$region0: #{bert_base_forward.25}
  #allocation0 [shape = 'u32[]', space=smem, size = 0x4, offset = 0x4, fixed_abs, tag = 'smem constant byte address 0x4 - core index']
  #allocation1 [shape = 'u32[144,128]{1,0:T(1,128)}', space=vmem, size = 0x12000, scoped, tag = 'internal scratch']
  #allocation2 [shape = 'f32[32,512]{1,0:T(8,128)}', space=vmem, size = 0x10000, scoped, tag = 'scratch operand']
  %s0 = inlined_call_operand.vmem [shape: bf16[32,128], index: 0, kind: input, shape index: {}]
  %s1 = inlined_call_operand.vmem [shape: bf16[128,512], index: 1, kind: input, shape index: {}]
  %s2 = inlined_call_operand.vmem [shape: f32[1,512], index: 2, kind: input, shape index: {}]
  %s3 = inlined_call_operand.hbm [shape: f32[32,512], index: 3, kind: output, shape index: {}]
  %s4 = sld [smem:[#allocation0]]
  $region30: #{bert_base_forward.25} parent=0
    _
  %s6 = ssub.s32 1, %s4
  %s7 = scalar_select 0, %s6, %s4
  $region1: #{bert_base_forward.25} parent=0
    #allocation3 [shape = 'u8[65536]{0}', space=vmem, size = 0x10000, scoped, tag = 'output window, operand 0, single buffered']
    #allocation4 [shape = 's32[1]{0}', space=sflag, size = 0x4, scoped, tag = 'scoped memory for bert_base_forward.25']
    %8 = vsyncpa [#allocation4], 0
    // Predicated region
    $region2: #{bert_base_forward.25} parent=1 // pred_check
      _
    $region3: #{bert_base_forward.25} parent=1 // pred_check_branch
      %10 = sbr.rel (0) target = $region5
    $region4: #{bert_base_forward.25} parent=1 // pred_region
      _
    $region5: #{bert_base_forward.25} parent=1 // pred_fallthru
      _
    // Predicated region
    $region6: #{bert_base_forward.25} parent=1 // pred_check
      _
    $region7: #{bert_base_forward.25} parent=1 // pred_check_branch
      %12 = sbr.rel (0) target = $region9
    $region8: #{bert_base_forward.25} parent=1 // pred_region
      _
    $region9: #{bert_base_forward.25} parent=1 // pred_fallthru
      _
    // Predicated region
    $region10: #{bert_base_forward.25} parent=1 // pred_check
      _
    $region11: #{bert_base_forward.25} parent=1 // pred_check_branch
      %14 = sbr.rel (0) target = $region13
    $region12: #{bert_base_forward.25} parent=1 // pred_region
      _
    $region13: #{bert_base_forward.25} parent=1 // pred_fallthru
      _
    %p16 = scmp.eq.s32.totalorder 0, 0
    // Predicated region
    $region14: #{bert_base_forward.25} parent=1 // pred_check
      %p17 = pneg %p16
    $region15: #{bert_base_forward.25} parent=1 // pred_check_branch
      %19 = sbr.rel (%p17) target = $region17
    $region16: #{bert_base_forward.25} parent=1 // pred_region
      %20 = vst [vmem:[#allocation2] sm:$0xff] 0.0
      %21 = vst [vmem:[#allocation2 + $0x8] sm:$0xff] 0.0
      %22 = vst [vmem:[#allocation2 + $0x10] sm:$0xff] 0.0
      %23 = vst [vmem:[#allocation2 + $0x18] sm:$0xff] 0.0
      %24 = vst [vmem:[#allocation2 + $0x20] sm:$0xff] 0.0
      %25 = vst [vmem:[#allocation2 + $0x28] sm:$0xff] 0.0
      %26 = vst [vmem:[#allocation2 + $0x30] sm:$0xff] 0.0
      %27 = vst [vmem:[#allocation2 + $0x38] sm:$0xff] 0.0
      %28 = vst [vmem:[#allocation2 + $0x40] sm:$0xff] 0.0
      %29 = vst [vmem:[#allocation2 + $0x48] sm:$0xff] 0.0
      %30 = vst [vmem:[#allocation2 + $0x50] sm:$0xff] 0.0
      %31 = vst [vmem:[#allocation2 + $0x58] sm:$0xff] 0.0
      %32 = vst [vmem:[#allocation2 + $0x60] sm:$0xff] 0.0
      %33 = vst [vmem:[#allocation2 + $0x68] sm:$0xff] 0.0
      %34 = vst [vmem:[#allocation2 + $0x70] sm:$0xff] 0.0
      %35 = vst [vmem:[#allocation2 + $0x78] sm:$0xff] 0.0
    $region17: #{bert_base_forward.25} parent=1 // pred_fallthru
      _
    %v36 = vld [vmem:[#allocation2] sm:$0xff]
    %v37 = vld [vmem:[#allocation2 + $0x8] sm:$0xff]
    %v38 = vld [vmem:[#allocation2 + $0x10] sm:$0xff]
    %v39 = vld [vmem:[#allocation2 + $0x18] sm:$0xff]
    %v40 = vld [vmem:[#allocation2 + $0x20] sm:$0xff]
    %v41 = vld [vmem:[#allocation2 + $0x28] sm:$0xff]
    %v42 = vld [vmem:[#allocation2 + $0x30] sm:$0xff]
    %v43 = vld [vmem:[#allocation2 + $0x38] sm:$0xff]
    %v44 = vld [vmem:[#allocation2 + $0x40] sm:$0xff]
    %v45 = vld [vmem:[#allocation2 + $0x48] sm:$0xff]
    %v46 = vld [vmem:[#allocation2 + $0x50] sm:$0xff]
    %v47 = vld [vmem:[#allocation2 + $0x58] sm:$0xff]
    %v48 = vld [vmem:[#allocation2 + $0x60] sm:$0xff]
    %v49 = vld [vmem:[#allocation2 + $0x68] sm:$0xff]
    %v50 = vld [vmem:[#allocation2 + $0x70] sm:$0xff]
    %v51 = vld [vmem:[#allocation2 + $0x78] sm:$0xff]
    %v52 = vld [vmem:[%s0] sm:$0xf]
    %v53 = vld [vmem:[%s0 + $0x4] sm:$0xf]
    %v54 = vld [vmem:[%s0 + $0x8] sm:$0xf]
    %v55 = vld [vmem:[%s0 + $0xc] sm:$0xf]
    %v56 = vld [vmem:[%s1] sm:$0xff]
    %v57 = vld [vmem:[%s1 + $0x8] sm:$0xff]
    %v58 = vld [vmem:[%s1 + $0x10] sm:$0xff]
    %v59 = vld [vmem:[%s1 + $0x18] sm:$0xff]
    %v60 = vld [vmem:[%s1 + $0x20] sm:$0xff]
    %v61 = vld [vmem:[%s1 + $0x28] sm:$0xff]
    %v62 = vld [vmem:[%s1 + $0x30] sm:$0xff]
    %v63 = vld [vmem:[%s1 + $0x38] sm:$0xff]
    %v64 = vld [vmem:[%s1 + $0x40] sm:$0xff]
    %v65 = vld [vmem:[%s1 + $0x48] sm:$0xff]
    %v66 = vld [vmem:[%s1 + $0x50] sm:$0xff]
    %v67 = vld [vmem:[%s1 + $0x58] sm:$0xff]
    %v68 = vld [vmem:[%s1 + $0x60] sm:$0xff]
    %v69 = vld [vmem:[%s1 + $0x68] sm:$0xff]
    %v70 = vld [vmem:[%s1 + $0x70] sm:$0xff]
    %v71 = vld [vmem:[%s1 + $0x78] sm:$0xff]
    %v72 = vld [vmem:[%s1 + $0x80] sm:$0xff]
    %v73 = vld [vmem:[%s1 + $0x88] sm:$0xff]
    %v74 = vld [vmem:[%s1 + $0x90] sm:$0xff]
    %v75 = vld [vmem:[%s1 + $0x98] sm:$0xff]
    %v76 = vld [vmem:[%s1 + $0xa0] sm:$0xff]
    %v77 = vld [vmem:[%s1 + $0xa8] sm:$0xff]
    %v78 = vld [vmem:[%s1 + $0xb0] sm:$0xff]
    %v79 = vld [vmem:[%s1 + $0xb8] sm:$0xff]
    %v80 = vld [vmem:[%s1 + $0xc0] sm:$0xff]
    %v81 = vld [vmem:[%s1 + $0xc8] sm:$0xff]
    %v82 = vld [vmem:[%s1 + $0xd0] sm:$0xff]
    %v83 = vld [vmem:[%s1 + $0xd8] sm:$0xff]
    %v84 = vld [vmem:[%s1 + $0xe0] sm:$0xff]
    %v85 = vld [vmem:[%s1 + $0xe8] sm:$0xff]
    %v86 = vld [vmem:[%s1 + $0xf0] sm:$0xff]
    %v87 = vld [vmem:[%s1 + $0xf8] sm:$0xff]
    %v92 = vunpack.c.l.b16 %v52
    %v93 = vunpack.c.l.b16 %v53
    %v94 = vunpack.c.l.b16 %v54
    %v95 = vunpack.c.l.b16 %v55
    %v96 = vpack.c.b16 %v93, %v92
    %v97 = vpack.c.b16 %v95, %v94
    %v132 = vunpack.c.l.b16 %v56
    %v133 = vunpack.c.h.b16 %v56
    %v134 = vunpack.c.l.b16 %v57
    %v135 = vunpack.c.h.b16 %v57
    %v136 = vunpack.c.l.b16 %v58
    %v137 = vunpack.c.h.b16 %v58
    %v138 = vunpack.c.l.b16 %v59
    %v139 = vunpack.c.h.b16 %v59
    %v140 = vunpack.c.l.b16 %v60
    %v141 = vunpack.c.h.b16 %v60
    %v142 = vunpack.c.l.b16 %v61
    %v143 = vunpack.c.h.b16 %v61
    %v144 = vunpack.c.l.b16 %v62
    %v145 = vunpack.c.h.b16 %v62
    %v146 = vunpack.c.l.b16 %v63
    %v147 = vunpack.c.h.b16 %v63
    %v148 = vunpack.c.l.b16 %v64
    %v149 = vunpack.c.h.b16 %v64
    %v150 = vunpack.c.l.b16 %v65
    %v151 = vunpack.c.h.b16 %v65
    %v152 = vunpack.c.l.b16 %v66
    %v153 = vunpack.c.h.b16 %v66
    %v154 = vunpack.c.l.b16 %v67
    %v155 = vunpack.c.h.b16 %v67
    %v156 = vunpack.c.l.b16 %v68
    %v157 = vunpack.c.h.b16 %v68
    %v158 = vunpack.c.l.b16 %v69
    %v159 = vunpack.c.h.b16 %v69
    %v160 = vunpack.c.l.b16 %v70
    %v161 = vunpack.c.h.b16 %v70
    %v162 = vunpack.c.l.b16 %v71
    %v163 = vunpack.c.h.b16 %v71
    %v164 = vunpack.c.l.b16 %v72
    %v165 = vunpack.c.h.b16 %v72
    %v166 = vunpack.c.l.b16 %v73
    %v167 = vunpack.c.h.b16 %v73
    %v168 = vunpack.c.l.b16 %v74
    %v169 = vunpack.c.h.b16 %v74
    %v170 = vunpack.c.l.b16 %v75
    %v171 = vunpack.c.h.b16 %v75
    %v172 = vunpack.c.l.b16 %v76
    %v173 = vunpack.c.h.b16 %v76
    %v174 = vunpack.c.l.b16 %v77
    %v175 = vunpack.c.h.b16 %v77
    %v176 = vunpack.c.l.b16 %v78
    %v177 = vunpack.c.h.b16 %v78
    %v178 = vunpack.c.l.b16 %v79
    %v179 = vunpack.c.h.b16 %v79
    %v180 = vunpack.c.l.b16 %v80
    %v181 = vunpack.c.h.b16 %v80
    %v182 = vunpack.c.l.b16 %v81
    %v183 = vunpack.c.h.b16 %v81
    %v184 = vunpack.c.l.b16 %v82
    %v185 = vunpack.c.h.b16 %v82
    %v186 = vunpack.c.l.b16 %v83
    %v187 = vunpack.c.h.b16 %v83
    %v188 = vunpack.c.l.b16 %v84
    %v189 = vunpack.c.h.b16 %v84
    %v190 = vunpack.c.l.b16 %v85
    %v191 = vunpack.c.h.b16 %v85
    %v192 = vunpack.c.l.b16 %v86
    %v193 = vunpack.c.h.b16 %v86
    %v194 = vunpack.c.l.b16 %v87
    %v195 = vunpack.c.h.b16 %v87
    %v196 = vpack.c.b16 %v136, %v132
    %v197 = vpack.c.b16 %v137, %v133
    %v198 = vpack.c.b16 %v138, %v134
    %v199 = vpack.c.b16 %v139, %v135
    %v200 = vpack.c.b16 %v144, %v140
    %v201 = vpack.c.b16 %v145, %v141
    %v202 = vpack.c.b16 %v146, %v142
    %v203 = vpack.c.b16 %v147, %v143
    %v204 = vpack.c.b16 %v152, %v148
    %v205 = vpack.c.b16 %v153, %v149
    %v206 = vpack.c.b16 %v154, %v150
    %v207 = vpack.c.b16 %v155, %v151
    %v208 = vpack.c.b16 %v160, %v156
    %v209 = vpack.c.b16 %v161, %v157
    %v210 = vpack.c.b16 %v162, %v158
    %v211 = vpack.c.b16 %v163, %v159
    %v212 = vpack.c.b16 %v168, %v164
    %v213 = vpack.c.b16 %v169, %v165
    %v214 = vpack.c.b16 %v170, %v166
    %v215 = vpack.c.b16 %v171, %v167
    %v216 = vpack.c.b16 %v176, %v172
    %v217 = vpack.c.b16 %v177, %v173
    %v218 = vpack.c.b16 %v178, %v174
    %v219 = vpack.c.b16 %v179, %v175
    %v220 = vpack.c.b16 %v184, %v180
    %v221 = vpack.c.b16 %v185, %v181
    %v222 = vpack.c.b16 %v186, %v182
    %v223 = vpack.c.b16 %v187, %v183
    %v224 = vpack.c.b16 %v192, %v188
    %v225 = vpack.c.b16 %v193, %v189
    %v226 = vpack.c.b16 %v194, %v190
    %v227 = vpack.c.b16 %v195, %v191
    %260 = vmatprep.subr.bf16.mxu0 %v197
    %261 = vmatpush1.bf16.msra.mxu0 %v196
    %262 = vmatprep.subr.bf16.mxu0 %v201
    %263 = vmatpush1.bf16.msra.mxu0 %v200
    %264 = vmatprep.subr.bf16.mxu0 %v205
    %265 = vmatpush1.bf16.msra.mxu0 %v204
    %266 = vmatprep.subr.bf16.mxu0 %v209
    %267 = vmatpush1.bf16.msra.mxu0 %v208
    %268 = vmatprep.subr.bf16.mxu0 %v213
    %269 = vmatpush1.bf16.msra.mxu0 %v212
    %270 = vmatprep.subr.bf16.mxu0 %v217
    %271 = vmatpush1.bf16.msra.mxu0 %v216
    %272 = vmatprep.subr.bf16.mxu0 %v221
    %273 = vmatpush1.bf16.msra.mxu0 %v220
    %274 = vmatprep.subr.bf16.mxu0 %v225
    %275 = vmatpush1.bf16.msra.mxu0 %v224
    %276 = vmatprep.subr.bf16.mxu0 0
    %277 = vmatpush1.bf16.msra.mxu0 0
    %278 = vmatprep.subr.bf16.mxu0 0
    %279 = vmatpush1.bf16.msra.mxu0 0
    %280 = vmatprep.subr.bf16.mxu0 0
    %281 = vmatpush1.bf16.msra.mxu0 0
    %282 = vmatprep.subr.bf16.mxu0 0
    %283 = vmatpush1.bf16.msra.mxu0 0
    %284 = vmatprep.subr.bf16.mxu0 0
    %285 = vmatpush1.bf16.msra.mxu0 0
    %286 = vmatprep.subr.bf16.mxu0 0
    %287 = vmatpush1.bf16.msra.mxu0 0
    %288 = vmatprep.subr.bf16.mxu0 0
    %289 = vmatpush1.bf16.msra.mxu0 0
    %290 = vmatprep.subr.bf16.mxu0 0
    %291 = vmatpush1.bf16.msra.mxu0 0
    %292 = vmatprep.mubr.bf16.mxu0 0
    %293 = vmatmul.mubr.bf16.gmra.mrb[0].mxu0 %v96
    %v294 = vpop.f32.mrb[0].mxu0
    %v295 = vadd.f32 0.0, %v294
    %v296 = vpop.f32.mrb[0].mxu0
    %v297 = vadd.f32 0.0, %v296
    %v298 = vpop.f32.mrb[0].mxu0
    %v299 = vadd.f32 0.0, %v298
    %v300 = vpop.f32.mrb[0].mxu0
    %v301 = vadd.f32 0.0, %v300
    %302 = vmatprep.mubr.bf16.mxu0 0
    %303 = vmatmul.mubr.bf16.gmra.mrb[0].mxu0 %v97
    %v304 = vpop.f32.mrb[0].mxu0
    %v305 = vadd.f32 0.0, %v304
    %v306 = vpop.f32.mrb[0].mxu0
    %v307 = vadd.f32 0.0, %v306
    %v308 = vpop.f32.mrb[0].mxu0
    %v309 = vadd.f32 0.0, %v308
    %v310 = vpop.f32.mrb[0].mxu0
    %v311 = vadd.f32 0.0, %v310
    %312 = vdwg.mxu0
    %313 = vmatprep.subr.bf16.mxu0 %v199
    %314 = vmatpush1.bf16.msra.mxu0 %v198
    %315 = vmatprep.subr.bf16.mxu0 %v203
    %316 = vmatpush1.bf16.msra.mxu0 %v202
    %317 = vmatprep.subr.bf16.mxu0 %v207
    %318 = vmatpush1.bf16.msra.mxu0 %v206
    %319 = vmatprep.subr.bf16.mxu0 %v211
    %320 = vmatpush1.bf16.msra.mxu0 %v210
    %321 = vmatprep.subr.bf16.mxu0 %v215
    %322 = vmatpush1.bf16.msra.mxu0 %v214
    %323 = vmatprep.subr.bf16.mxu0 %v219
    %324 = vmatpush1.bf16.msra.mxu0 %v218
    %325 = vmatprep.subr.bf16.mxu0 %v223
    %326 = vmatpush1.bf16.msra.mxu0 %v222
    %327 = vmatprep.subr.bf16.mxu0 %v227
    %328 = vmatpush1.bf16.msra.mxu0 %v226
    %329 = vmatprep.subr.bf16.mxu0 0
    %330 = vmatpush1.bf16.msra.mxu0 0
    %331 = vmatprep.subr.bf16.mxu0 0
    %332 = vmatpush1.bf16.msra.mxu0 0
    %333 = vmatprep.subr.bf16.mxu0 0
    %334 = vmatpush1.bf16.msra.mxu0 0
    %335 = vmatprep.subr.bf16.mxu0 0
    %336 = vmatpush1.bf16.msra.mxu0 0
    %337 = vmatprep.subr.bf16.mxu0 0
    %338 = vmatpush1.bf16.msra.mxu0 0
    %339 = vmatprep.subr.bf16.mxu0 0
    %340 = vmatpush1.bf16.msra.mxu0 0
    %341 = vmatprep.subr.bf16.mxu0 0
    %342 = vmatpush1.bf16.msra.mxu0 0
    %343 = vmatprep.subr.bf16.mxu0 0
    %344 = vmatpush1.bf16.msra.mxu0 0
    %345 = vmatprep.mubr.bf16.mxu0 0
    %346 = vmatmul.mubr.bf16.gmra.mrb[0].mxu0 %v96
    %v347 = vpop.f32.mrb[0].mxu0
    %v348 = vadd.f32 0.0, %v347
    %v349 = vpop.f32.mrb[0].mxu0
    %v350 = vadd.f32 0.0, %v349
    %v351 = vpop.f32.mrb[0].mxu0
    %v352 = vadd.f32 0.0, %v351
    %v353 = vpop.f32.mrb[0].mxu0
    %v354 = vadd.f32 0.0, %v353
    %355 = vmatprep.mubr.bf16.mxu0 0
    %356 = vmatmul.mubr.bf16.gmra.mrb[0].mxu0 %v97
    %v357 = vpop.f32.mrb[0].mxu0
    %v358 = vadd.f32 0.0, %v357
    %v359 = vpop.f32.mrb[0].mxu0
    %v360 = vadd.f32 0.0, %v359
    %v361 = vpop.f32.mrb[0].mxu0
    %v362 = vadd.f32 0.0, %v361
    %v363 = vpop.f32.mrb[0].mxu0
    %v364 = vadd.f32 0.0, %v363
    %365 = vdwg.mxu0
    %v366 = vadd.f32 %v36, %v295
    %v367 = vadd.f32 %v37, %v297
    %v368 = vadd.f32 %v38, %v348
    %v369 = vadd.f32 %v39, %v350
    %v370 = vadd.f32 %v40, %v299
    %v371 = vadd.f32 %v41, %v301
    %v372 = vadd.f32 %v42, %v352
    %v373 = vadd.f32 %v43, %v354
    %v374 = vadd.f32 %v44, %v305
    %v375 = vadd.f32 %v45, %v307
    %v376 = vadd.f32 %v46, %v358
    %v377 = vadd.f32 %v47, %v360
    %v378 = vadd.f32 %v48, %v309
    %v379 = vadd.f32 %v49, %v311
    %v380 = vadd.f32 %v50, %v362
    %v381 = vadd.f32 %v51, %v364
    %382 = vst [vmem:[#allocation2] sm:$0xff] %v366
    %383 = vst [vmem:[#allocation2 + $0x8] sm:$0xff] %v367
    %384 = vst [vmem:[#allocation2 + $0x10] sm:$0xff] %v368
    %385 = vst [vmem:[#allocation2 + $0x18] sm:$0xff] %v369
    %386 = vst [vmem:[#allocation2 + $0x20] sm:$0xff] %v370
    %387 = vst [vmem:[#allocation2 + $0x28] sm:$0xff] %v371
    %388 = vst [vmem:[#allocation2 + $0x30] sm:$0xff] %v372
    %389 = vst [vmem:[#allocation2 + $0x38] sm:$0xff] %v373
    %390 = vst [vmem:[#allocation2 + $0x40] sm:$0xff] %v374
    %391 = vst [vmem:[#allocation2 + $0x48] sm:$0xff] %v375
    %392 = vst [vmem:[#allocation2 + $0x50] sm:$0xff] %v376
    %393 = vst [vmem:[#allocation2 + $0x58] sm:$0xff] %v377
    %394 = vst [vmem:[#allocation2 + $0x60] sm:$0xff] %v378
    %395 = vst [vmem:[#allocation2 + $0x68] sm:$0xff] %v379
    %396 = vst [vmem:[#allocation2 + $0x70] sm:$0xff] %v380
    %397 = vst [vmem:[#allocation2 + $0x78] sm:$0xff] %v381
    // Predicated region
    $region18: #{bert_base_forward.25} parent=1 // pred_check
      %p398 = pneg %p16
    $region19: #{bert_base_forward.25} parent=1 // pred_check_branch
      %400 = sbr.rel (%p398) target = $region21
    $region20: #{bert_base_forward.25} parent=1 // pred_region
      %v401 = vld [vmem:[#allocation2] sm:$0xff]
      %v402 = vld [vmem:[#allocation2 + $0x8] sm:$0xff]
      %v403 = vld [vmem:[#allocation2 + $0x10] sm:$0xff]
      %v404 = vld [vmem:[#allocation2 + $0x18] sm:$0xff]
      %v405 = vld [vmem:[#allocation2 + $0x20] sm:$0xff]
      %v406 = vld [vmem:[#allocation2 + $0x28] sm:$0xff]
      %v407 = vld [vmem:[#allocation2 + $0x30] sm:$0xff]
      %v408 = vld [vmem:[#allocation2 + $0x38] sm:$0xff]
      %v409 = vld [vmem:[#allocation2 + $0x40] sm:$0xff]
      %v410 = vld [vmem:[#allocation2 + $0x48] sm:$0xff]
      %v411 = vld [vmem:[#allocation2 + $0x50] sm:$0xff]
      %v412 = vld [vmem:[#allocation2 + $0x58] sm:$0xff]
      %v413 = vld [vmem:[#allocation2 + $0x60] sm:$0xff]
      %v414 = vld [vmem:[#allocation2 + $0x68] sm:$0xff]
      %v415 = vld [vmem:[#allocation2 + $0x70] sm:$0xff]
      %v416 = vld [vmem:[#allocation2 + $0x78] sm:$0xff]
      %v417 = vld [vmem:[%s2] sm:$0xf]
      %v419 = vlaneseq
      %v420 = vshrl.u32 %v419, 7
      %v421 = vsub.s32 0, %v420
      %v422 = vrot.slane %v417, %v421
      %v423 = vlaneseq
      %v424 = vshrl.u32 %v423, 7
      %v425 = vsub.s32 1, %v424
      %v426 = vrot.slane %v417, %v425
      %v427 = vlaneseq
      %v428 = vshrl.u32 %v427, 7
      %v429 = vsub.s32 2, %v428
      %v430 = vrot.slane %v417, %v429
      %v431 = vlaneseq
      %v432 = vshrl.u32 %v431, 7
      %v433 = vsub.s32 3, %v432
      %v434 = vrot.slane %v417, %v433
      %v439 = vadd.f32 %v401, %v422
      %v440 = vadd.f32 %v402, %v426
      %v441 = vadd.f32 %v403, %v430
      %v442 = vadd.f32 %v404, %v434
      %v443 = vadd.f32 %v405, %v422
      %v444 = vadd.f32 %v406, %v426
      %v445 = vadd.f32 %v407, %v430
      %v446 = vadd.f32 %v408, %v434
      %v447 = vadd.f32 %v409, %v422
      %v448 = vadd.f32 %v410, %v426
      %v449 = vadd.f32 %v411, %v430
      %v450 = vadd.f32 %v412, %v434
      %v451 = vadd.f32 %v413, %v422
      %v452 = vadd.f32 %v414, %v426
      %v453 = vadd.f32 %v415, %v430
      %v454 = vadd.f32 %v416, %v434
      %455 = vst [vmem:[#allocation3] sm:$0xff] %v439
      %456 = vst [vmem:[#allocation3 + $0x8] sm:$0xff] %v440
      %457 = vst [vmem:[#allocation3 + $0x10] sm:$0xff] %v441
      %458 = vst [vmem:[#allocation3 + $0x18] sm:$0xff] %v442
      %459 = vst [vmem:[#allocation3 + $0x20] sm:$0xff] %v443
      %460 = vst [vmem:[#allocation3 + $0x28] sm:$0xff] %v444
      %461 = vst [vmem:[#allocation3 + $0x30] sm:$0xff] %v445
      %462 = vst [vmem:[#allocation3 + $0x38] sm:$0xff] %v446
      %463 = vst [vmem:[#allocation3 + $0x40] sm:$0xff] %v447
      %464 = vst [vmem:[#allocation3 + $0x48] sm:$0xff] %v448
      %465 = vst [vmem:[#allocation3 + $0x50] sm:$0xff] %v449
      %466 = vst [vmem:[#allocation3 + $0x58] sm:$0xff] %v450
      %467 = vst [vmem:[#allocation3 + $0x60] sm:$0xff] %v451
      %468 = vst [vmem:[#allocation3 + $0x68] sm:$0xff] %v452
      %469 = vst [vmem:[#allocation3 + $0x70] sm:$0xff] %v453
      %470 = vst [vmem:[#allocation3 + $0x78] sm:$0xff] %v454
    $region21: #{bert_base_forward.25} parent=1 // pred_fallthru
      _
    // Predicated region
    $region22: #{bert_base_forward.25} parent=1 // pred_check
      _
    $region23: #{bert_base_forward.25} parent=1 // pred_check_branch
      %472 = sbr.rel (0) target = $region25
    $region24: #{bert_base_forward.25} parent=1 // pred_region
      %s474 = ssub.s32 2048, 2048
      %475 = vsyncadd [#allocation4], %s474
      %s476 = sshll.u32 [#allocation3], 4
      %s477 = int_to_ptr.vmem [resolvable:$true] %s476
      %482 = dma.vmem_to_hbm [thread:$0]  %s477, 2048, %s3, [#allocation4], 512, 512, 32
    $region25: #{bert_base_forward.25} parent=1 // pred_fallthru
      _
    // Predicated region
    $region26: #{bert_base_forward.25} parent=1 // pred_check
      _
    $region27: #{bert_base_forward.25} parent=1 // pred_check_branch
      %484 = sbr.rel (0) target = $region29
    $region28: #{bert_base_forward.25} parent=1 // pred_region
      %485 = dma.done [#allocation4], 2048
    $region29: #{bert_base_forward.25} parent=1 // pred_fallthru
      _
    %486 = vsyncpa [#allocation4], 1

</llo_original>
